<compile_context>
chip_gen: v5e
topology: v5e:2x2
jax: 0.10.0
libtpu: 0.0.40
codegen_flags: <defaults>
</compile_context>

<pallas_src>
import functools
import math

import jax
import jax.numpy as jnp
from jax import lax
from jax.experimental import pallas as pl
from jax.experimental.pallas import tpu as pltpu

_ROW_QUANTUM = 16   # multiple of 8 (f32 sublanes) and 16 (bf16 sublane packing)
_TM_TARGET = 512    # ~85% of HBM roofline in measured tile sweeps; fits VMEM on all gens
_MIN_GRID = 8       # >= 4 grid steps per TensorCore on v7x (2 TCs) so DMA overlaps compute


def _gelu(x, approximate=False):
    # torch.nn.GELU() default is the exact erf form; set approximate=True only if
    # bit-exact torch parity is not required (pushes the transcendental onto the EUP,
    # which mainly helps v5e where erf's f32 polynomial lands on the VALU).
    if approximate:
        return jax.nn.gelu(x, approximate=True)
    return 0.5 * x * (1.0 + lax.erf(x * (1.0 / math.sqrt(2.0))))


def _round_up(a, b):
    return (a + b - 1) // b * b


@functools.lru_cache(maxsize=None)
def _vmem_limit_bytes():
    # Generation-aware scoped-VMEM limit (v7x: 64 MiB physical, v5e/v6e: 128 MiB).
    try:
        cap = int(pltpu.get_tpu_info().vmem_capacity_bytes)
    except Exception:
        cap = 64 * 1024 * 1024
    return min(cap // 2, 64 * 1024 * 1024)


def _compiler_params():
    return pltpu.CompilerParams(dimension_semantics=("parallel",),
                                vmem_limit_bytes=_vmem_limit_bytes())


def _row_tiling(M):
    """Row tiling for (M, C) slabs.

    Pick tm <= _TM_TARGET with at least _MIN_GRID grid steps (so each v7x TensorCore
    gets several pipelined steps), preferring a tm that divides M exactly so no
    pad / [:M] slice passes (each a full HBM read+write) are emitted around the call.
    """
    tm_cap = max(_ROW_QUANTUM,
                 min(_TM_TARGET, _round_up(pl.cdiv(M, _MIN_GRID), _ROW_QUANTUM)))
    tm = None
    t = tm_cap
    while t >= _ROW_QUANTUM:
        if M % t == 0:
            tm = t
            break
        t -= _ROW_QUANTUM
    if tm is None or tm < max(_ROW_QUANTUM, tm_cap // 4):
        tm = tm_cap  # fallback: pad rows up to a multiple of tm
    grid = pl.cdiv(M, tm)
    return tm, grid, grid * tm


def _pad_rows(t, pad):
    return jnp.pad(t, ((0, pad), (0, 0))) if pad else t


# ----------------------------- Pallas kernels ------------------------------ #

def _pointwise_mm_kernel(x_ref, w_ref, b_ref, o_ref, *, apply_gelu):
    x = x_ref[...].astype(jnp.float32)
    y = jnp.dot(x, w_ref[...], preferred_element_type=jnp.float32) + b_ref[...]
    if apply_gelu:
        y = _gelu(y)
    o_ref[...] = y.astype(o_ref.dtype)


def _dafno_combine_kernel(k_ref, x_ref, a_ref, bsp_ref, s_ref, w_ref, b_ref,
                          y_ref, *, apply_gelu):
    # k_ref : scalar-prefetch layer index (used only in the index_map)
    # x     : current features, bf16         (TM, C)
    # a     : spconv(s*x), f32                (TM, C)
    # bsp   : spconv(s) for this layer, f32   (1, TM, C)
    # s     : mask, 1 channel, f32            (TM, 1)  -> broadcast over lanes (free on VPU)
    del k_ref
    x = x_ref[...].astype(jnp.float32)
    s = s_ref[...]
    bsp = bsp_ref[0]
    cx = jnp.dot(x, w_ref[...], preferred_element_type=jnp.float32) + b_ref[...]
    y = s * (a_ref[...] - x * bsp + cx)
    if apply_gelu:
        y = _gelu(y)
    y_ref[...] = y.astype(y_ref.dtype)


def _mlp_decoder_kernel(x_ref, w1_ref, b1_ref, w2_ref, b2_ref, o_ref, *,
                        reduce_out, cout):
    x = x_ref[...].astype(jnp.float32)
    h = jnp.dot(x, w1_ref[...], preferred_element_type=jnp.float32) + b1_ref[...]
    h = _gelu(h)
    if reduce_out:
        # tiny Cout: avoid a 1-lane MXU result; VPU multiply + lane reduction instead.
        w2t = w2_ref[...]                      # (Cout, Cmid)
        cols = [jnp.sum(h * w2t[c][None, :], axis=-1, keepdims=True)
                for c in range(cout)]
        y = cols[0] if cout == 1 else jnp.concatenate(cols, axis=-1)
        y = y + b2_ref[...]
    else:
        y = jnp.dot(h, w2_ref[...], preferred_element_type=jnp.float32) + b2_ref[...]
    # TODO(synk): for production grid sizes make the Cout=1 store lane-dense
    # (emit a (tm//128, 128) slab instead of a 1-lane column); negligible at this size.
    o_ref[...] = y.astype(o_ref.dtype)


# ----------------------------- kernel wrappers ------------------------------ #

def pointwise_linear(x, w, b, *, apply_gelu=False, out_dtype=None):
    """x: (M, Cin) @ w: (Cin, Cout) + b: (Cout,), optional exact GELU."""
    M, Cin = x.shape
    Cout = w.shape[1]
    out_dtype = x.dtype if out_dtype is None else out_dtype
    tm, grid, Mp = _row_tiling(M)
    xp = _pad_rows(x, Mp - M)
    out = pl.pallas_call(
        functools.partial(_pointwise_mm_kernel, apply_gelu=apply_gelu),
        out_shape=jax.ShapeDtypeStruct((Mp, Cout), out_dtype),
        grid=(grid,),
        in_specs=[
            pl.BlockSpec((tm, Cin), lambda i: (i, 0)),
            pl.BlockSpec((Cin, Cout), lambda i: (0, 0)),
            pl.BlockSpec((1, Cout), lambda i: (0, 0)),
        ],
        out_specs=pl.BlockSpec((tm, Cout), lambda i: (i, 0)),
        compiler_params=_compiler_params(),
    )(xp, w, b.reshape(1, Cout))
    return out if Mp == M else out[:M]


def dafno_combine(layer_idx, x, a, bsp_all, s, w, b, *, apply_gelu, tiling):
    """Fused DAFNO layer update on (Mp, C) slabs: y = s*(a - x*bsp + x@w + b) [+GELU].

    bsp_all is the (L, Mp, C) stack of spconv(s) for all layers; the per-layer slab is
    selected by block indexing with the scalar-prefetched layer index (no slice copy).
    """
    tm, grid, Mp = tiling
    C = x.shape[1]
    return pl.pallas_call(
        functools.partial(_dafno_combine_kernel, apply_gelu=apply_gelu),
        out_shape=jax.ShapeDtypeStruct((Mp, C), x.dtype),
        grid_spec=pltpu.PrefetchScalarGridSpec(
            num_scalar_prefetch=1,
            grid=(grid,),
            in_specs=[
                pl.BlockSpec((tm, C), lambda i, k: (i, 0)),          # x
                pl.BlockSpec((tm, C), lambda i, k: (i, 0)),          # a = spconv(s*x)
                pl.BlockSpec((1, tm, C), lambda i, k: (k[0], i, 0)),  # bsp_all[layer]
                pl.BlockSpec((tm, 1), lambda i, k: (i, 0)),          # s
                pl.BlockSpec((C, C), lambda i, k: (0, 0)),           # w
                pl.BlockSpec((1, C), lambda i, k: (0, 0)),           # b
            ],
            out_specs=pl.BlockSpec((tm, C), lambda i, k: (i, 0)),
        ),
        compiler_params=_compiler_params(),
    )(layer_idx, x, a, bsp_all, s, w, b.reshape(1, C))


def mlp_decoder(x, w1, b1, w2, b2):
    """Fused MLPConv2d (two 1x1 convs with exact GELU in between) on an (M, C) slab."""
    M, Cin = x.shape
    Cmid, Cout = w1.shape[1], w2.shape[1]
    reduce_out = Cout < 8
    tm, grid, Mp = _row_tiling(M)
    xp = _pad_rows(x, Mp - M)
    if reduce_out:
        w2_arg = jnp.transpose(w2)                               # (Cout, Cmid)
        w2_spec = pl.BlockSpec((Cout, Cmid), lambda i: (0, 0))
    else:
        w2_arg = w2
        w2_spec = pl.BlockSpec((Cmid, Cout), lambda i: (0, 0))
    out = pl.pallas_call(
        functools.partial(_mlp_decoder_kernel, reduce_out=reduce_out, cout=Cout),
        out_shape=jax.ShapeDtypeStruct((Mp, Cout), jnp.float32),
        grid=(grid,),
        in_specs=[
            pl.BlockSpec((tm, Cin), lambda i: (i, 0)),
            pl.BlockSpec((Cin, Cmid), lambda i: (0, 0)),
            pl.BlockSpec((1, Cmid), lambda i: (0, 0)),
            w2_spec,
            pl.BlockSpec((1, Cout), lambda i: (0, 0)),
        ],
        out_specs=pl.BlockSpec((tm, Cout), lambda i: (i, 0)),
        compiler_params=_compiler_params(),
    )(xp, w1, b1.reshape(1, Cmid), w2_arg, b2.reshape(1, Cout))
    return out if Mp == M else out[:M]


# --------------------------- plain-JAX components --------------------------- #
# TODO(synk): rfft2/irfft2 + complex mode-mixing have no Pallas TPU equivalent
#             (no complex dtype); kept in plain JAX (XLA FFT), semantics match
#             torch rfft2/irfft2 mode mixing.

def spectral_conv2d_nhwc(x, w1, w2, m1, m2):
    # x: (N, H, W, Cin) float32; w: (Cin, Cout, m1, m2) complex. Returns float32.
    N, H, W, _ = x.shape
    Cout = w1.shape[1]
    x_ft = jnp.fft.rfft2(x, axes=(1, 2))                       # (N, H, W//2+1, Cin)
    out_ft = jnp.zeros((N, H, W // 2 + 1, Cout), dtype=jnp.complex64)
    out_ft = out_ft.at[:, :m1, :m2, :].set(
        jnp.einsum('bxyi,ioxy->bxyo', x_ft[:, :m1, :m2, :], w1))
    out_ft = out_ft.at[:, -m1:, :m2, :].set(
        jnp.einsum('bxyi,ioxy->bxyo', x_ft[:, -m1:, :m2, :], w2))
    return jnp.fft.irfft2(out_ft, s=(H, W), axes=(1, 2))       # f32


def precompute_mask_spconv(s_ft, sp_w1, sp_w2, m1, m2, Hp, Wp):
    """spconv(s) for ALL layers with a single batched irfft2.

    spconv of the width-broadcast mask equals the single-channel mask FFT times the
    input-channel-summed spectral weights; the mask FFT is layer-invariant, so every
    layer's result is obtained from one irfft2 over a stacked (layer, channel) axis.
    Returns (L, N*Hp*Wp, C) float32.
    """
    w1s = jnp.stack([jnp.transpose(jnp.sum(w, axis=0), (1, 2, 0)) for w in sp_w1])
    w2s = jnp.stack([jnp.transpose(jnp.sum(w, axis=0), (1, 2, 0)) for w in sp_w2])
    L, _, _, C = w1s.shape
    N, Hf, Wf, _ = s_ft.shape                                   # Hf=Hp, Wf=Wp//2+1
    out_ft = jnp.zeros((L, N, Hf, Wf, C), dtype=jnp.complex64)
    out_ft = out_ft.at[:, :, :m1, :m2, :].set(
        s_ft[None, :, :m1, :m2, :] * w1s[:, None, :, :, :])
    out_ft = out_ft.at[:, :, -m1:, :m2, :].set(
        s_ft[None, :, -m1:, :m2, :] * w2s[:, None, :, :, :])
    bsp = jnp.fft.irfft2(out_ft, s=(Hp, Wp), axes=(2, 3))      # (L, N, Hp, Wp, C) f32
    return bsp.reshape(L, N * Hp * Wp, C)


def dafno2d_forward(params, x, coord, schar, *, width, m1, m2, padding, layer_num,
                    act_dtype=jnp.bfloat16):
    N, _, H, W = x.shape

    # NCHW -> NHWC once at the boundary; everything stays channel-last afterwards.
    xc = jnp.concatenate([x, coord], axis=1)                    # (N, Cin, H, W)
    xc = jnp.transpose(xc, (0, 2, 3, 1))                        # (N, H, W, Cin)
    Cin = xc.shape[-1]
    M0 = N * H * W

    # encoder: pointwise linear; activations stored in bf16 (f32 accumulation in kernel)
    xl = pointwise_linear(xc.reshape(M0, Cin), params['enc_w'], params['enc_b'],
                          out_dtype=act_dtype)
    x_nhwc = xl.reshape(N, H, W, width)

    # pad right/bottom as F.pad(x, [0, p, 0, p])
    Hp, Wp = H + padding, W + padding
    x_nhwc = jnp.pad(x_nhwc, ((0, 0), (0, padding), (0, padding), (0, 0)))
    s1 = jnp.transpose(schar, (0, 2, 3, 1)).astype(jnp.float32)     # (N, H, W, 1)
    s1 = jnp.pad(s1, ((0, 0), (0, padding), (0, padding), (0, 0)))  # (N, Hp, Wp, 1)

    M = N * Hp * Wp
    tiling = _row_tiling(M)
    _, _, Mp = tiling
    pad = Mp - M

    s_flat = _pad_rows(s1.reshape(M, 1), pad)

    # FFT of the single-channel mask once per forward pass.
    s_ft = jnp.fft.rfft2(s1, axes=(1, 2))                       # (N, Hp, Wp//2+1, 1)

    # spconv(s) for all layers via ONE batched irfft2 (kept f32: converting the
    # FFT-produced slabs to bf16 would cost more HBM traffic than it saves).
    bsp_all = precompute_mask_spconv(s_ft, params['sp_w1'], params['sp_w2'],
                                     m1, m2, Hp, Wp)            # (L, M, width) f32
    if pad:
        bsp_all = jnp.pad(bsp_all, ((0, 0), (0, pad), (0, 0)))

    x_flat = _pad_rows(x_nhwc.reshape(M, width), pad)           # bf16, (Mp, width)

    for k in range(layer_num):
        if k == 0:
            # layer-0 mask gating fused into the (bf16 -> f32) FFT-input cast.
            gx = s1 * x_nhwc.astype(jnp.float32)
        else:
            # For a strictly binary mask, s*y == y exactly (gelu(0)=0, s^2=s), so the
            # previous layer's output feeds the spectral conv directly.
            xk = x_flat if pad == 0 else x_flat[:M]
            gx = xk.reshape(N, Hp, Wp, width).astype(jnp.float32)
        a = spectral_conv2d_nhwc(gx, params['sp_w1'][k], params['sp_w2'][k], m1, m2)
        a = _pad_rows(a.reshape(M, width), pad)                 # f32
        x_flat = dafno_combine(
            jnp.array([k], jnp.int32), x_flat, a, bsp_all, s_flat,
            params['conv_w'][k], params['conv_b'][k],
            apply_gelu=(k < layer_num - 1), tiling=tiling)

    # crop padding: x[..., :-p, :-p]
    xk = x_flat if pad == 0 else x_flat[:M]
    x_out = xk.reshape(N, Hp, Wp, width)[:, :H, :W, :]

    # decoder MLPConv2d: Conv1x1(width->4*width) -> GELU -> Conv1x1(4*width->out)
    yf = mlp_decoder(x_out.reshape(M0, width), params['dec_w1'], params['dec_b1'],
                     params['dec_w2'], params['dec_b2'])
    out_ch = params['dec_w2'].shape[1]
    return jnp.transpose(yf.reshape(N, H, W, out_ch), (0, 3, 1, 2))


# ------------------------------ parameter init ------------------------------ #

def init_params(key, in_ch, out_ch, width, m1, m2, layer_num):
    ks = jax.random.split(key, 8 + 4 * layer_num)
    it = iter(ks)

    def u(k, shape, bound):
        return jax.random.uniform(k, shape, jnp.float32, -bound, bound)

    params = {}
    be = 1.0 / math.sqrt(in_ch)
    params['enc_w'] = u(next(it), (in_ch, width), be)
    params['enc_b'] = u(next(it), (width,), be)

    conv_w, conv_b, sp_w1, sp_w2 = [], [], [], []
    bc = 1.0 / math.sqrt(width)
    sp_scale = 1.0 / (width * width)
    for _ in range(layer_num):
        conv_w.append(u(next(it), (width, width), bc))   # 1x1 conv as (in, out)
        conv_b.append(u(next(it), (width,), bc))
        r1 = jax.random.uniform(next(it), (width, width, m1, m2, 2), jnp.float32)
        r2 = jax.random.uniform(next(it), (width, width, m1, m2, 2), jnp.float32)
        sp_w1.append((sp_scale * (r1[..., 0] + 1j * r1[..., 1])).astype(jnp.complex64))
        sp_w2.append((sp_scale * (r2[..., 0] + 1j * r2[..., 1])).astype(jnp.complex64))
    params['conv_w'], params['conv_b'] = conv_w, conv_b
    params['sp_w1'], params['sp_w2'] = sp_w1, sp_w2

    mid = width * 4
    bd1 = 1.0 / math.sqrt(width)
    bd2 = 1.0 / math.sqrt(mid)
    params['dec_w1'] = u(next(it), (width, mid), bd1)
    params['dec_b1'] = u(next(it), (mid,), bd1)
    params['dec_w2'] = u(next(it), (mid, out_ch), bd2)
    params['dec_b2'] = u(next(it), (out_ch,), bd2)
    return params


# ----------------------------------- main ----------------------------------- #

if __name__ == "__main__":
    key = jax.random.PRNGKey(0)
    N, H, W = 2, 16, 16
    x_ch, coord_ch = 1, 2
    in_ch = x_ch + coord_ch          # encoder input = cat(x, coord) channels
    out_ch = 1
    width = 32
    m1 = m2 = 6
    padding = 8
    layer_num = 4

    k_in, k_coord, k_s, k_params = jax.random.split(key, 4)
    x = jax.random.normal(k_in, (N, x_ch, H, W), jnp.float32)
    coord = jax.random.normal(k_coord, (N, coord_ch, H, W), jnp.float32)
    # characteristic function of the (perforated) domain: strictly 0/1 mask
    schar = (jax.random.uniform(k_s, (N, 1, H, W)) > 0.2).astype(jnp.float32)

    params = init_params(k_params, in_ch, out_ch, width, m1, m2, layer_num)

    fwd = jax.jit(functools.partial(
        dafno2d_forward, width=width, m1=m1, m2=m2,
        padding=padding, layer_num=layer_num))

    y = fwd(params, x, coord, schar)
    jax.block_until_ready(y)
    assert y.shape == (N, out_ch, H, W)
    assert bool(jnp.all(jnp.isfinite(y)))
    print("KERNEL_OK")
</pallas_src>

<mosaic_0001>
module attributes {stable_mosaic.version = 11 : i64} {
  func.func @_pointwise_mm_kernel(%arg0: i32, %arg1: memref<64x3xf32, #tpu.memory_space<vmem>>, %arg2: memref<3x32xf32, #tpu.memory_space<vmem>>, %arg3: memref<1x32xf32, #tpu.memory_space<vmem>>, %arg4: memref<64x32xbf16, #tpu.memory_space<vmem>>) attributes {dimension_semantics = [#tpu.dimension_semantics<parallel>], iteration_bounds = array<i64: 8>, scalar_prefetch = 0 : i64, scratch_operands = 0 : i64, tpu.core_type = #tpu.core_type<tc>, window_params = [{transform_indices = @transform_0, window_bounds = array<i64: 64, 3>}, {pipeline_mode = #tpu.pipeline_mode<synchronous>, transform_indices = @transform_1, window_bounds = array<i64: 3, 32>}, {pipeline_mode = #tpu.pipeline_mode<synchronous>, transform_indices = @transform_2, window_bounds = array<i64: 1, 32>}, {transform_indices = @transform_3, window_bounds = array<i64: 64, 32>}]} {
    %c0 = arith.constant 0 : index
    %c0_0 = arith.constant 0 : index
    %0 = vector.load %arg1[%c0, %c0_0] : memref<64x3xf32, #tpu.memory_space<vmem>>, vector<64x3xf32>
    %c0_1 = arith.constant 0 : index
    %c0_2 = arith.constant 0 : index
    %1 = vector.load %arg2[%c0_1, %c0_2] : memref<3x32xf32, #tpu.memory_space<vmem>>, vector<3x32xf32>
    %cst = arith.constant dense<0.000000e+00> : vector<64x32xf32>
    %2 = tpu.matmul %0, %1, %cst {dimension_numbers = #tpu.dot_dimension_numbers<[1], [0], [0], [1], [0, 0, 1, 1], [], []>} : vector<64x3xf32>, vector<3x32xf32>, vector<64x32xf32> -> vector<64x32xf32>
    %c0_3 = arith.constant 0 : index
    %c0_4 = arith.constant 0 : index
    %3 = vector.load %arg3[%c0_3, %c0_4] : memref<1x32xf32, #tpu.memory_space<vmem>>, vector<1x32xf32>
    %4 = vector.broadcast %3 : vector<1x32xf32> to vector<64x32xf32>
    %5 = arith.addf %2, %4 : vector<64x32xf32>
    %6 = arith.truncf %5 : vector<64x32xf32> to vector<64x32xbf16>
    %c0_5 = arith.constant 0 : index
    %c0_6 = arith.constant 0 : index
    %7 = vector.load %arg4[%c0_5, %c0_6] : memref<64x32xbf16, #tpu.memory_space<vmem>>, vector<64x32xbf16>
    tpu.vector_store %arg4[%c0_5, %c0_6], %6 {strides = array<i32>} : memref<64x32xbf16, #tpu.memory_space<vmem>>, vector<64x32xbf16>,
    return
  }
  func.func @transform_0(%arg0: i32) -> (i32, i32) {
    %c0_i32 = arith.constant 0 : i32
    %c0_i32_0 = arith.constant 0 : i32
    return %arg0, %c0_i32 : i32, i32
  }
  func.func @transform_1(%arg0: i32) -> (i32, i32) {
    %c0_i32 = arith.constant 0 : i32
    %c0_i32_0 = arith.constant 0 : i32
    %c0_i32_1 = arith.constant 0 : i32
    return %c0_i32, %c0_i32_0 : i32, i32
  }
  func.func @transform_2(%arg0: i32) -> (i32, i32) {
    %c0_i32 = arith.constant 0 : i32
    %c0_i32_0 = arith.constant 0 : i32
    %c0_i32_1 = arith.constant 0 : i32
    return %c0_i32, %c0_i32_0 : i32, i32
  }
  func.func @transform_3(%arg0: i32) -> (i32, i32) {
    %c0_i32 = arith.constant 0 : i32
    %c0_i32_0 = arith.constant 0 : i32
    return %arg0, %c0_i32 : i32, i32
  }
}

module attributes {stable_mosaic.version = 11 : i64} {
  func.func @_dafno_combine_kernel(%arg0: i32, %arg1: memref<1xi32, #tpu.memory_space<smem>>, %arg2: memref<144x32xbf16, #tpu.memory_space<vmem>>, %arg3: memref<144x32xf32, #tpu.memory_space<vmem>>, %arg4: memref<1x144x32xf32, #tpu.memory_space<vmem>>, %arg5: memref<144x1xf32, #tpu.memory_space<vmem>>, %arg6: memref<32x32xf32, #tpu.memory_space<vmem>>, %arg7: memref<1x32xf32, #tpu.memory_space<vmem>>, %arg8: memref<144x32xbf16, #tpu.memory_space<vmem>>) attributes {dimension_semantics = [#tpu.dimension_semantics<parallel>], iteration_bounds = array<i64: 8>, scalar_prefetch = 1 : i64, scratch_operands = 0 : i64, tpu.core_type = #tpu.core_type<tc>, window_params = [{transform_indices = @transform_0, window_bounds = array<i64: 144, 32>}, {transform_indices = @transform_1, window_bounds = array<i64: 144, 32>}, {transform_indices = @transform_2, window_bounds = array<i64: 1, 144, 32>}, {transform_indices = @transform_3, window_bounds = array<i64: 144, 1>}, {pipeline_mode = #tpu.pipeline_mode<synchronous>, transform_indices = @transform_4, window_bounds = array<i64: 32, 32>}, {pipeline_mode = #tpu.pipeline_mode<synchronous>, transform_indices = @transform_5, window_bounds = array<i64: 1, 32>}, {transform_indices = @transform_6, window_bounds = array<i64: 144, 32>}]} {
    %c0 = arith.constant 0 : index
    %c0_0 = arith.constant 0 : index
    %0 = vector.load %arg2[%c0, %c0_0] : memref<144x32xbf16, #tpu.memory_space<vmem>>, vector<144x32xbf16>
    %1 = arith.extf %0 : vector<144x32xbf16> to vector<144x32xf32>
    %c0_1 = arith.constant 0 : index
    %c0_2 = arith.constant 0 : index
    %2 = vector.load %arg5[%c0_1, %c0_2] : memref<144x1xf32, #tpu.memory_space<vmem>>, vector<144x1xf32>
    %c0_3 = arith.constant 0 : index
    %c0_4 = arith.constant 0 : index
    %c0_5 = arith.constant 0 : index
    %3 = vector.load %arg4[%c0_3, %c0_4, %c0_5] : memref<1x144x32xf32, #tpu.memory_space<vmem>>, vector<1x144x32xf32>
    %4 = vector.shape_cast %3 : vector<1x144x32xf32> to vector<144x32xf32>
    %c0_6 = arith.constant 0 : index
    %c0_7 = arith.constant 0 : index
    %5 = vector.load %arg6[%c0_6, %c0_7] : memref<32x32xf32, #tpu.memory_space<vmem>>, vector<32x32xf32>
    %cst = arith.constant dense<0.000000e+00> : vector<144x32xf32>
    %6 = tpu.matmul %1, %5, %cst {dimension_numbers = #tpu.dot_dimension_numbers<[1], [0], [0], [1], [0, 0, 1, 1], [], []>} : vector<144x32xf32>, vector<32x32xf32>, vector<144x32xf32> -> vector<144x32xf32>
    %c0_8 = arith.constant 0 : index
    %c0_9 = arith.constant 0 : index
    %7 = vector.load %arg7[%c0_8, %c0_9] : memref<1x32xf32, #tpu.memory_space<vmem>>, vector<1x32xf32>
    %8 = vector.broadcast %7 : vector<1x32xf32> to vector<144x32xf32>
    %9 = arith.addf %6, %8 : vector<144x32xf32>
    %c0_10 = arith.constant 0 : index
    %c0_11 = arith.constant 0 : index
    %10 = vector.load %arg3[%c0_10, %c0_11] : memref<144x32xf32, #tpu.memory_space<vmem>>, vector<144x32xf32>
    %11 = arith.mulf %1, %4 : vector<144x32xf32>
    %12 = arith.subf %10, %11 : vector<144x32xf32>
    %13 = arith.addf %12, %9 : vector<144x32xf32>
    %14 = vector.broadcast %2 : vector<144x1xf32> to vector<144x32xf32>
    %15 = arith.mulf %14, %13 : vector<144x32xf32>
    %cst_12 = arith.constant 5.000000e-01 : f32
    %16 = vector.broadcast %cst_12 : f32 to vector<144x32xf32>
    %17 = arith.mulf %16, %15 : vector<144x32xf32>
    %cst_13 = arith.constant 0.707106769 : f32
    %18 = vector.broadcast %cst_13 : f32 to vector<144x32xf32>
    %19 = arith.mulf %15, %18 : vector<144x32xf32>
    %20 = math.erf %19 : vector<144x32xf32>
    %cst_14 = arith.constant 1.000000e+00 : f32
    %21 = vector.broadcast %cst_14 : f32 to vector<144x32xf32>
    %22 = arith.addf %21, %20 : vector<144x32xf32>
    %23 = arith.mulf %17, %22 : vector<144x32xf32>
    %24 = arith.truncf %23 : vector<144x32xf32> to vector<144x32xbf16>
    %c0_15 = arith.constant 0 : index
    %c0_16 = arith.constant 0 : index
    %25 = vector.load %arg8[%c0_15, %c0_16] : memref<144x32xbf16, #tpu.memory_space<vmem>>, vector<144x32xbf16>
    tpu.vector_store %arg8[%c0_15, %c0_16], %24 {strides = array<i32>} : memref<144x32xbf16, #tpu.memory_space<vmem>>, vector<144x32xbf16>,
    return
  }
  func.func @transform_0(%arg0: i32, %arg1: memref<1xi32, #tpu.memory_space<smem>>) -> (i32, i32) {
    %c0_i32 = arith.constant 0 : i32
    %c0_i32_0 = arith.constant 0 : i32
    return %arg0, %c0_i32 : i32, i32
  }
  func.func @transform_1(%arg0: i32, %arg1: memref<1xi32, #tpu.memory_space<smem>>) -> (i32, i32) {
    %c0_i32 = arith.constant 0 : i32
    %c0_i32_0 = arith.constant 0 : i32
    return %arg0, %c0_i32 : i32, i32
  }
  func.func @transform_2(%arg0: i32, %arg1: memref<1xi32, #tpu.memory_space<smem>>) -> (i32, i32, i32) {
    %c0 = arith.constant 0 : index
    %0 = memref.load %arg1[%c0] : memref<1xi32, #tpu.memory_space<smem>>
    %c0_i32 = arith.constant 0 : i32
    %c0_i32_0 = arith.constant 0 : i32
    return %0, %arg0, %c0_i32 : i32, i32, i32
  }
  func.func @transform_3(%arg0: i32, %arg1: memref<1xi32, #tpu.memory_space<smem>>) -> (i32, i32) {
    %c0_i32 = arith.constant 0 : i32
    %c0_i32_0 = arith.constant 0 : i32
    return %arg0, %c0_i32 : i32, i32
  }
  func.func @transform_4(%arg0: i32, %arg1: memref<1xi32, #tpu.memory_space<smem>>) -> (i32, i32) {
    %c0_i32 = arith.constant 0 : i32
    %c0_i32_0 = arith.constant 0 : i32
    %c0_i32_1 = arith.constant 0 : i32
    return %c0_i32, %c0_i32_0 : i32, i32
  }
  func.func @transform_5(%arg0: i32, %arg1: memref<1xi32, #tpu.memory_space<smem>>) -> (i32, i32) {
    %c0_i32 = arith.constant 0 : i32
    %c0_i32_0 = arith.constant 0 : i32
    %c0_i32_1 = arith.constant 0 : i32
    return %c0_i32, %c0_i32_0 : i32, i32
  }
  func.func @transform_6(%arg0: i32, %arg1: memref<1xi32, #tpu.memory_space<smem>>) -> (i32, i32) {
    %c0_i32 = arith.constant 0 : i32
    %c0_i32_0 = arith.constant 0 : i32
    return %arg0, %c0_i32 : i32, i32
  }
}

module attributes {stable_mosaic.version = 11 : i64} {
  func.func @_dafno_combine_kernel(%arg0: i32, %arg1: memref<1xi32, #tpu.memory_space<smem>>, %arg2: memref<144x32xbf16, #tpu.memory_space<vmem>>, %arg3: memref<144x32xf32, #tpu.memory_space<vmem>>, %arg4: memref<1x144x32xf32, #tpu.memory_space<vmem>>, %arg5: memref<144x1xf32, #tpu.memory_space<vmem>>, %arg6: memref<32x32xf32, #tpu.memory_space<vmem>>, %arg7: memref<1x32xf32, #tpu.memory_space<vmem>>, %arg8: memref<144x32xbf16, #tpu.memory_space<vmem>>) attributes {dimension_semantics = [#tpu.dimension_semantics<parallel>], iteration_bounds = array<i64: 8>, scalar_prefetch = 1 : i64, scratch_operands = 0 : i64, tpu.core_type = #tpu.core_type<tc>, window_params = [{transform_indices = @transform_0, window_bounds = array<i64: 144, 32>}, {transform_indices = @transform_1, window_bounds = array<i64: 144, 32>}, {transform_indices = @transform_2, window_bounds = array<i64: 1, 144, 32>}, {transform_indices = @transform_3, window_bounds = array<i64: 144, 1>}, {pipeline_mode = #tpu.pipeline_mode<synchronous>, transform_indices = @transform_4, window_bounds = array<i64: 32, 32>}, {pipeline_mode = #tpu.pipeline_mode<synchronous>, transform_indices = @transform_5, window_bounds = array<i64: 1, 32>}, {transform_indices = @transform_6, window_bounds = array<i64: 144, 32>}]} {
    %c0 = arith.constant 0 : index
    %c0_0 = arith.constant 0 : index
    %0 = vector.load %arg2[%c0, %c0_0] : memref<144x32xbf16, #tpu.memory_space<vmem>>, vector<144x32xbf16>
    %1 = arith.extf %0 : vector<144x32xbf16> to vector<144x32xf32>
    %c0_1 = arith.constant 0 : index
    %c0_2 = arith.constant 0 : index
    %2 = vector.load %arg5[%c0_1, %c0_2] : memref<144x1xf32, #tpu.memory_space<vmem>>, vector<144x1xf32>
    %c0_3 = arith.constant 0 : index
    %c0_4 = arith.constant 0 : index
    %c0_5 = arith.constant 0 : index
    %3 = vector.load %arg4[%c0_3, %c0_4, %c0_5] : memref<1x144x32xf32, #tpu.memory_space<vmem>>, vector<1x144x32xf32>
    %4 = vector.shape_cast %3 : vector<1x144x32xf32> to vector<144x32xf32>
    %c0_6 = arith.constant 0 : index
    %c0_7 = arith.constant 0 : index
    %5 = vector.load %arg6[%c0_6, %c0_7] : memref<32x32xf32, #tpu.memory_space<vmem>>, vector<32x32xf32>
    %cst = arith.constant dense<0.000000e+00> : vector<144x32xf32>
    %6 = tpu.matmul %1, %5, %cst {dimension_numbers = #tpu.dot_dimension_numbers<[1], [0], [0], [1], [0, 0, 1, 1], [], []>} : vector<144x32xf32>, vector<32x32xf32>, vector<144x32xf32> -> vector<144x32xf32>
    %c0_8 = arith.constant 0 : index
    %c0_9 = arith.constant 0 : index
    %7 = vector.load %arg7[%c0_8, %c0_9] : memref<1x32xf32, #tpu.memory_space<vmem>>, vector<1x32xf32>
    %8 = vector.broadcast %7 : vector<1x32xf32> to vector<144x32xf32>
    %9 = arith.addf %6, %8 : vector<144x32xf32>
    %c0_10 = arith.constant 0 : index
    %c0_11 = arith.constant 0 : index
    %10 = vector.load %arg3[%c0_10, %c0_11] : memref<144x32xf32, #tpu.memory_space<vmem>>, vector<144x32xf32>
    %11 = arith.mulf %1, %4 : vector<144x32xf32>
    %12 = arith.subf %10, %11 : vector<144x32xf32>
    %13 = arith.addf %12, %9 : vector<144x32xf32>
    %14 = vector.broadcast %2 : vector<144x1xf32> to vector<144x32xf32>
    %15 = arith.mulf %14, %13 : vector<144x32xf32>
    %16 = arith.truncf %15 : vector<144x32xf32> to vector<144x32xbf16>
    %c0_12 = arith.constant 0 : index
    %c0_13 = arith.constant 0 : index
    %17 = vector.load %arg8[%c0_12, %c0_13] : memref<144x32xbf16, #tpu.memory_space<vmem>>, vector<144x32xbf16>
    tpu.vector_store %arg8[%c0_12, %c0_13], %16 {strides = array<i32>} : memref<144x32xbf16, #tpu.memory_space<vmem>>, vector<144x32xbf16>,
    return
  }
  func.func @transform_0(%arg0: i32, %arg1: memref<1xi32, #tpu.memory_space<smem>>) -> (i32, i32) {
    %c0_i32 = arith.constant 0 : i32
    %c0_i32_0 = arith.constant 0 : i32
    return %arg0, %c0_i32 : i32, i32
  }
  func.func @transform_1(%arg0: i32, %arg1: memref<1xi32, #tpu.memory_space<smem>>) -> (i32, i32) {
    %c0_i32 = arith.constant 0 : i32
    %c0_i32_0 = arith.constant 0 : i32
    return %arg0, %c0_i32 : i32, i32
  }
  func.func @transform_2(%arg0: i32, %arg1: memref<1xi32, #tpu.memory_space<smem>>) -> (i32, i32, i32) {
    %c0 = arith.constant 0 : index
    %0 = memref.load %arg1[%c0] : memref<1xi32, #tpu.memory_space<smem>>
    %c0_i32 = arith.constant 0 : i32
    %c0_i32_0 = arith.constant 0 : i32
    return %0, %arg0, %c0_i32 : i32, i32, i32
  }
  func.func @transform_3(%arg0: i32, %arg1: memref<1xi32, #tpu.memory_space<smem>>) -> (i32, i32) {
    %c0_i32 = arith.constant 0 : i32
    %c0_i32_0 = arith.constant 0 : i32
    return %arg0, %c0_i32 : i32, i32
  }
  func.func @transform_4(%arg0: i32, %arg1: memref<1xi32, #tpu.memory_space<smem>>) -> (i32, i32) {
    %c0_i32 = arith.constant 0 : i32
    %c0_i32_0 = arith.constant 0 : i32
    %c0_i32_1 = arith.constant 0 : i32
    return %c0_i32, %c0_i32_0 : i32, i32
  }
  func.func @transform_5(%arg0: i32, %arg1: memref<1xi32, #tpu.memory_space<smem>>) -> (i32, i32) {
    %c0_i32 = arith.constant 0 : i32
    %c0_i32_0 = arith.constant 0 : i32
    %c0_i32_1 = arith.constant 0 : i32
    return %c0_i32, %c0_i32_0 : i32, i32
  }
  func.func @transform_6(%arg0: i32, %arg1: memref<1xi32, #tpu.memory_space<smem>>) -> (i32, i32) {
    %c0_i32 = arith.constant 0 : i32
    %c0_i32_0 = arith.constant 0 : i32
    return %arg0, %c0_i32 : i32, i32
  }
}

module attributes {stable_mosaic.version = 11 : i64} {
  func.func @_mlp_decoder_kernel(%arg0: i32, %arg1: memref<64x32xbf16, #tpu.memory_space<vmem>>, %arg2: memref<32x128xf32, #tpu.memory_space<vmem>>, %arg3: memref<1x128xf32, #tpu.memory_space<vmem>>, %arg4: memref<1x128xf32, #tpu.memory_space<vmem>>, %arg5: memref<1x1xf32, #tpu.memory_space<vmem>>, %arg6: memref<64x1xf32, #tpu.memory_space<vmem>>) attributes {dimension_semantics = [#tpu.dimension_semantics<parallel>], iteration_bounds = array<i64: 8>, scalar_prefetch = 0 : i64, scratch_operands = 0 : i64, tpu.core_type = #tpu.core_type<tc>, window_params = [{transform_indices = @transform_0, window_bounds = array<i64: 64, 32>}, {pipeline_mode = #tpu.pipeline_mode<synchronous>, transform_indices = @transform_1, window_bounds = array<i64: 32, 128>}, {pipeline_mode = #tpu.pipeline_mode<synchronous>, transform_indices = @transform_2, window_bounds = array<i64: 1, 128>}, {pipeline_mode = #tpu.pipeline_mode<synchronous>, transform_indices = @transform_3, window_bounds = array<i64: 1, 128>}, {pipeline_mode = #tpu.pipeline_mode<synchronous>, transform_indices = @transform_4, window_bounds = array<i64: 1, 1>}, {transform_indices = @transform_5, window_bounds = array<i64: 64, 1>}]} {
    %c0 = arith.constant 0 : index
    %c0_0 = arith.constant 0 : index
    %0 = vector.load %arg1[%c0, %c0_0] : memref<64x32xbf16, #tpu.memory_space<vmem>>, vector<64x32xbf16>
    %1 = arith.extf %0 : vector<64x32xbf16> to vector<64x32xf32>
    %c0_1 = arith.constant 0 : index
    %c0_2 = arith.constant 0 : index
    %2 = vector.load %arg2[%c0_1, %c0_2] : memref<32x128xf32, #tpu.memory_space<vmem>>, vector<32x128xf32>
    %cst = arith.constant dense<0.000000e+00> : vector<64x128xf32>
    %3 = tpu.matmul %1, %2, %cst {dimension_numbers = #tpu.dot_dimension_numbers<[1], [0], [0], [1], [0, 0, 1, 1], [], []>} : vector<64x32xf32>, vector<32x128xf32>, vector<64x128xf32> -> vector<64x128xf32>
    %c0_3 = arith.constant 0 : index
    %c0_4 = arith.constant 0 : index
    %4 = vector.load %arg3[%c0_3, %c0_4] : memref<1x128xf32, #tpu.memory_space<vmem>>, vector<1x128xf32>
    %5 = vector.broadcast %4 : vector<1x128xf32> to vector<64x128xf32>
    %6 = arith.addf %3, %5 : vector<64x128xf32>
    %cst_5 = arith.constant 5.000000e-01 : f32
    %7 = vector.broadcast %cst_5 : f32 to vector<64x128xf32>
    %8 = arith.mulf %7, %6 : vector<64x128xf32>
    %cst_6 = arith.constant 0.707106769 : f32
    %9 = vector.broadcast %cst_6 : f32 to vector<64x128xf32>
    %10 = arith.mulf %6, %9 : vector<64x128xf32>
    %11 = math.erf %10 : vector<64x128xf32>
    %cst_7 = arith.constant 1.000000e+00 : f32
    %12 = vector.broadcast %cst_7 : f32 to vector<64x128xf32>
    %13 = arith.addf %12, %11 : vector<64x128xf32>
    %14 = arith.mulf %8, %13 : vector<64x128xf32>
    %c0_8 = arith.constant 0 : index
    %c0_9 = arith.constant 0 : index
    %15 = vector.load %arg4[%c0_8, %c0_9] : memref<1x128xf32, #tpu.memory_space<vmem>>, vector<1x128xf32>
    %16 = vector.shape_cast %15 : vector<1x128xf32> to vector<128xf32>
    %17 = vector.shape_cast %16 : vector<128xf32> to vector<1x128xf32>
    %18 = vector.broadcast %17 : vector<1x128xf32> to vector<64x128xf32>
    %19 = arith.mulf %14, %18 : vector<64x128xf32>
    %cst_10 = arith.constant dense<0.000000e+00> : vector<64xf32>
    %20 = vector.multi_reduction <add>, %19, %cst_10 [1] : vector<64x128xf32> to vector<64xf32>
    %21 = vector.shape_cast %20 : vector<64xf32> to vector<64x1xf32>
    %c0_11 = arith.constant 0 : index
    %c0_12 = arith.constant 0 : index
    %22 = vector.load %arg5[%c0_11, %c0_12] : memref<1x1xf32, #tpu.memory_space<vmem>>, vector<1x1xf32>
    %23 = vector.broadcast %22 : vector<1x1xf32> to vector<64x1xf32>
    %24 = arith.addf %21, %23 : vector<64x1xf32>
    %c0_13 = arith.constant 0 : index
    %c0_14 = arith.constant 0 : index
    %25 = vector.load %arg6[%c0_13, %c0_14] : memref<64x1xf32, #tpu.memory_space<vmem>>, vector<64x1xf32>
    tpu.vector_store %arg6[%c0_13, %c0_14], %24 {strides = array<i32>} : memref<64x1xf32, #tpu.memory_space<vmem>>, vector<64x1xf32>,
    return
  }
  func.func @transform_0(%arg0: i32) -> (i32, i32) {
    %c0_i32 = arith.constant 0 : i32
    %c0_i32_0 = arith.constant 0 : i32
    return %arg0, %c0_i32 : i32, i32
  }
  func.func @transform_1(%arg0: i32) -> (i32, i32) {
    %c0_i32 = arith.constant 0 : i32
    %c0_i32_0 = arith.constant 0 : i32
    %c0_i32_1 = arith.constant 0 : i32
    return %c0_i32, %c0_i32_0 : i32, i32
  }
  func.func @transform_2(%arg0: i32) -> (i32, i32) {
    %c0_i32 = arith.constant 0 : i32
    %c0_i32_0 = arith.constant 0 : i32
    %c0_i32_1 = arith.constant 0 : i32
    return %c0_i32, %c0_i32_0 : i32, i32
  }
  func.func @transform_3(%arg0: i32) -> (i32, i32) {
    %c0_i32 = arith.constant 0 : i32
    %c0_i32_0 = arith.constant 0 : i32
    %c0_i32_1 = arith.constant 0 : i32
    return %c0_i32, %c0_i32_0 : i32, i32
  }
  func.func @transform_4(%arg0: i32) -> (i32, i32) {
    %c0_i32 = arith.constant 0 : i32
    %c0_i32_0 = arith.constant 0 : i32
    %c0_i32_1 = arith.constant 0 : i32
    return %c0_i32, %c0_i32_0 : i32, i32
  }
  func.func @transform_5(%arg0: i32) -> (i32, i32) {
    %c0_i32 = arith.constant 0 : i32
    %c0_i32_0 = arith.constant 0 : i32
    return %arg0, %c0_i32 : i32, i32
  }
}

</mosaic_0001>

<llo_original>
// kernel: custom-call
$region0: #{custom-call}
  %s0 = inlined_call_operand.hbm [shape: c64[32,32,6,6], index: 0, kind: input, shape index: {}]
  %s1 = inlined_call_operand.vmem [shape: f32[32,32,6,6], index: 1, kind: output, shape index: {}]
  $region1: #{custom-call} parent=0
    #allocation0 [shape = 's32[1]{0}', space=sflag, size = 0x4, scoped, tag = 'scoped memory for custom-call']
    %2 = vsyncpa [#allocation0], 0
    %s4 = sshll.u32 %s0, 4
    %s5 = int_to_ptr.hbm [resolvable:$true] %s4
    %s6 = sshll.u32 %s1, 4
    %s7 = int_to_ptr.vmem [resolvable:$true] %s6
    %9 = dma.hbm_to_vmem [thread:$0]  %s5, 18432, %s7, [#allocation0]
    %11 = dma.done [#allocation0], 18432
    %12 = vsyncpa [#allocation0], 1

// kernel: custom-call.1
$region0: #{custom-call.1}
  %s0 = inlined_call_operand.hbm [shape: c64[32,32,6,6], index: 0, kind: input, shape index: {}]
  %s1 = inlined_call_operand.vmem [shape: f32[32,32,6,6], index: 1, kind: output, shape index: {}]
  %s2 = scalar_lea.hbm %s0, 1152
  $region1: #{custom-call.1} parent=0
    #allocation0 [shape = 's32[1]{0}', space=sflag, size = 0x4, scoped, tag = 'scoped memory for custom-call.1']
    %3 = vsyncpa [#allocation0], 0
    %s5 = sshll.u32 %s2, 4
    %s6 = int_to_ptr.hbm [resolvable:$true] %s5
    %s7 = sshll.u32 %s1, 4
    %s8 = int_to_ptr.vmem [resolvable:$true] %s7
    %10 = dma.hbm_to_vmem [thread:$0]  %s6, 18432, %s8, [#allocation0]
    %12 = dma.done [#allocation0], 18432
    %13 = vsyncpa [#allocation0], 1

// kernel: dafno2d_forward.6
$region0: #{dafno2d_forward.6}
  #allocation0 [shape = 'u32[]', space=smem, size = 0x4, offset = 0x4, fixed_abs, tag = 'smem constant byte address 0x4 - core index']
  #allocation1 [shape = 'u32[72,128]{1,0:T(1,128)}', space=vmem, size = 0x9000, scoped, tag = 'internal scratch']
  %s0 = inlined_call_operand.vmem [shape: f32[512,3], index: 0, kind: input, shape index: {}]
  %s1 = inlined_call_operand.hbm [shape: f32[3,32], index: 1, kind: input, shape index: {}]
  %s2 = inlined_call_operand.hbm [shape: f32[1,32], index: 2, kind: input, shape index: {}]
  %s3 = inlined_call_operand.vmem [shape: bf16[512,32], index: 3, kind: output, shape index: {}]
  %s4 = sld [smem:[#allocation0]]
  $region53: #{dafno2d_forward.6} parent=0
    _
  %s6 = ssub.s32 1, %s4
  %s7 = scalar_select 0, %s6, %s4
  $region1: #{dafno2d_forward.6} parent=0
    #allocation2 [shape = 'u8[2048]{0}', space=vmem, size = 0x800, scoped, tag = 'input window, operand 1, single buffered']
    #allocation3 [shape = 's32[2]{0}', space=sflag, size = 0x8, scoped, tag = 'scoped memory for dafno2d_forward.6']
    #allocation4 [shape = 'u8[512]{0}', space=vmem, size = 0x400, scoped, tag = 'input window, operand 2, single buffered']
    #allocation5 [shape = 's32[1]{0}', space=sflag, size = 0x4, scoped, tag = 'scoped memory for dafno2d_forward.6']
    %8 = vsyncpa [#allocation3], 0
    %9 = vsyncpa [#allocation5], 0
    loop: start=0, step=1, limit=10
    $region2: #{dafno2d_forward.6} parent=1 // loop_pre_header
      _
    $region3: #{dafno2d_forward.6} parent=1 // loop_header
      %s11 = sphi 0, %s15
      %p12 = scmp.ge.s32.totalorder %s11, 10
      %s21 = sphi 0, %s23
      %s24 = sphi 0, %s21
      %s25 = sphi 0, %s24
      %s41 = sphi 0, %s25
      %s45 = sphi 0, %s45
      %s47 = sphi 0, %s45
      %s48 = sphi 0, %s47
      %s62 = sphi 0, %s48
      %s66 = sphi 0, %s66
      %s68 = sphi 0, %s66
      %s69 = sphi 0, %s68
      %s83 = sphi 0, %s69
      %s89 = sphi 0, %s91
      %s92 = sphi 0, %s89
      %s93 = sphi 0, %s92
      %s109 = sphi 0, %s93
    $region4: #{dafno2d_forward.6} parent=1 // loop_header_branch
      %14 = sbr.rel (%p12) target = $region8
    $region5: #{dafno2d_forward.6} parent=1 // loop_body
      %s16 = ssub.s32 %s11, 1
      %s17 = ssub.s32 %s11, 2
      %s18 = sadd.s32 %s11, 1
      %s19 = ssub.s32 %s11, %s18
      %p20 = scmp.eq.s32.totalorder %s19, 0
      %s22 = sadd.s32 %s21, 1
      %s23 = scalar_select %p20, %s21, %s22
      %p26 = pneg %p20
      %p27 = scmp.eq.s32.totalorder %s11, 7
      %p28 = por %p26, %p27
      %p29 = scmp.ne.s32.totalorder %s21, %s24
      %p30 = scmp.eq.s32.totalorder %s11, 0
      %p31 = por %p29, %p30
      %p32 = scmp.ne.s32.totalorder %s21, %s24
      %p33 = scmp.eq.s32.totalorder %s16, 7
      %p34 = por %p32, %p33
      %p35 = scmp.ne.s32.totalorder %s24, %s25
      %p36 = scmp.eq.s32.totalorder %s16, 0
      %p37 = por %p35, %p36
      %p38 = scmp.ne.s32.totalorder %s24, %s25
      %p39 = scmp.eq.s32.totalorder %s17, 7
      %p40 = por %p38, %p39
      %p42 = scmp.ne.s32.totalorder %s25, %s41
      %p43 = scmp.eq.s32.totalorder %s17, 0
      %p44 = por %p42, %p43
      %s46 = sadd.s32 %s45, 1
      %p49 = scmp.eq.s32.totalorder %s11, 7
      %p50 = scmp.ne.s32.totalorder %s45, %s47
      %p51 = scmp.eq.s32.totalorder %s11, 0
      %p52 = por %p50, %p51
      %p53 = scmp.ne.s32.totalorder %s45, %s47
      %p54 = scmp.eq.s32.totalorder %s16, 7
      %p55 = por %p53, %p54
      %p56 = scmp.ne.s32.totalorder %s47, %s48
      %p57 = scmp.eq.s32.totalorder %s16, 0
      %p58 = por %p56, %p57
      %p59 = scmp.ne.s32.totalorder %s47, %s48
      %p60 = scmp.eq.s32.totalorder %s17, 7
      %p61 = por %p59, %p60
      %p63 = scmp.ne.s32.totalorder %s48, %s62
      %p64 = scmp.eq.s32.totalorder %s17, 0
      %p65 = por %p63, %p64
      %s67 = sadd.s32 %s66, 1
      %p70 = scmp.eq.s32.totalorder %s11, 7
      %p71 = scmp.ne.s32.totalorder %s66, %s68
      %p72 = scmp.eq.s32.totalorder %s11, 0
      %p73 = por %p71, %p72
      %p74 = scmp.ne.s32.totalorder %s66, %s68
      %p75 = scmp.eq.s32.totalorder %s16, 7
      %p76 = por %p74, %p75
      %p77 = scmp.ne.s32.totalorder %s68, %s69
      %p78 = scmp.eq.s32.totalorder %s16, 0
      %p79 = por %p77, %p78
      %p80 = scmp.ne.s32.totalorder %s68, %s69
      %p81 = scmp.eq.s32.totalorder %s17, 7
      %p82 = por %p80, %p81
      %p84 = scmp.ne.s32.totalorder %s69, %s83
      %p85 = scmp.eq.s32.totalorder %s17, 0
      %p86 = por %p84, %p85
      %s87 = ssub.s32 %s11, %s18
      %p88 = scmp.eq.s32.totalorder %s87, 0
      %s90 = sadd.s32 %s89, 1
      %s91 = scalar_select %p88, %s89, %s90
      %p94 = pneg %p88
      %p95 = scmp.eq.s32.totalorder %s11, 7
      %p96 = por %p94, %p95
      %p97 = scmp.ne.s32.totalorder %s89, %s92
      %p98 = scmp.eq.s32.totalorder %s11, 0
      %p99 = por %p97, %p98
      %p100 = scmp.ne.s32.totalorder %s89, %s92
      %p101 = scmp.eq.s32.totalorder %s16, 7
      %p102 = por %p100, %p101
      %p103 = scmp.ne.s32.totalorder %s92, %s93
      %p104 = scmp.eq.s32.totalorder %s16, 0
      %p105 = por %p103, %p104
      %p106 = scmp.ne.s32.totalorder %s92, %s93
      %p107 = scmp.eq.s32.totalorder %s17, 7
      %p108 = por %p106, %p107
      %p110 = scmp.ne.s32.totalorder %s93, %s109
      %p111 = scmp.eq.s32.totalorder %s17, 0
      %p112 = por %p110, %p111
      %p113 = scmp.le.s32.totalorder 1, %s11
      %p114 = scmp.lt.s32.totalorder %s11, 9
      %p115 = pnand %p113, %p114
      %p116 = pneg %p115
      // Predicated region
      $region9: #{dafno2d_forward.6} parent=5 // pred_check
        _
      $region10: #{dafno2d_forward.6} parent=5 // pred_check_branch
        %118 = sbr.rel (%p115) target = $region12
      $region11: #{dafno2d_forward.6} parent=5 // pred_region
        %s119 = ssub.s32 %s11, 1
        // Predicated region
        $region13: #{dafno2d_forward.6} parent=11 // pred_check
          %p120 = pneg %p58
        $region14: #{dafno2d_forward.6} parent=11 // pred_check_branch
          %122 = sbr.rel (%p120) target = $region16
        $region15: #{dafno2d_forward.6} parent=11 // pred_region
          %124 = vsyncadd [#allocation3], 0
          %s126 = sshll.u32 %s1, 4
          %s127 = int_to_ptr.hbm [resolvable:$true] %s126
          %s128 = sshll.u32 [#allocation2], 4
          %s129 = int_to_ptr.vmem [resolvable:$true] %s128
          %131 = dma.hbm_to_vmem [thread:$0]  %s127, 64, %s129, [#allocation3]
        $region16: #{dafno2d_forward.6} parent=11 // pred_fallthru
          _
        // Predicated region
        $region17: #{dafno2d_forward.6} parent=11 // pred_check
          %p132 = pneg %p79
        $region18: #{dafno2d_forward.6} parent=11 // pred_check_branch
          %134 = sbr.rel (%p132) target = $region20
        $region19: #{dafno2d_forward.6} parent=11 // pred_region
          %136 = vsyncadd [#allocation5], 0
          %s138 = sshll.u32 %s2, 4
          %s139 = int_to_ptr.hbm [resolvable:$true] %s138
          %s140 = sshll.u32 [#allocation4], 4
          %s141 = int_to_ptr.vmem [resolvable:$true] %s140
          %143 = dma.hbm_to_vmem [thread:$0]  %s139, 16, %s141, [#allocation5]
        $region20: #{dafno2d_forward.6} parent=11 // pred_fallthru
          _
      $region12: #{dafno2d_forward.6} parent=5 // pred_fallthru
        _
      %p144 = scmp.lt.s32.totalorder %s11, 8
      // Predicated region
      $region21: #{dafno2d_forward.6} parent=5 // pred_check
        %p145 = pneg %p144
      $region22: #{dafno2d_forward.6} parent=5 // pred_check_branch
        %147 = sbr.rel (%p145) target = $region24
      $region23: #{dafno2d_forward.6} parent=5 // pred_region
        // Predicated region
        $region25: #{dafno2d_forward.6} parent=23 // pred_check
          %p148 = pneg %p31
        $region26: #{dafno2d_forward.6} parent=23 // pred_check_branch
          %150 = sbr.rel (%p148) target = $region28
        $region27: #{dafno2d_forward.6} parent=23 // pred_region
          %s151 = smul.u32 8, %s11
          %p152 = scmp.lt.s32.totalorder %s151, 63
          %s153 = scalar_select %p152, %s151, 63
          %s154 = smul.addr %s153, 8
          %s155 = scalar_lea.vmem %s0, %s154
          %s156 = smul.u32 8, %s11
        $region28: #{dafno2d_forward.6} parent=23 // pred_fallthru
          _
      $region24: #{dafno2d_forward.6} parent=5 // pred_fallthru
        _
      %p157 = scmp.le.s32.totalorder 1, %s11
      %p158 = scmp.lt.s32.totalorder %s11, 9
      %p159 = pnand %p157, %p158
      %p160 = pneg %p159
      // Predicated region
      $region29: #{dafno2d_forward.6} parent=5 // pred_check
        _
      $region30: #{dafno2d_forward.6} parent=5 // pred_check_branch
        %162 = sbr.rel (%p159) target = $region32
      $region31: #{dafno2d_forward.6} parent=5 // pred_region
        %s163 = ssub.s32 %s11, 1
        // Predicated region
        $region33: #{dafno2d_forward.6} parent=31 // pred_check
          %p164 = pneg %p58
        $region34: #{dafno2d_forward.6} parent=31 // pred_check_branch
          %166 = sbr.rel (%p164) target = $region36
        $region35: #{dafno2d_forward.6} parent=31 // pred_region
          %168 = dma.done [#allocation3], 64
        $region36: #{dafno2d_forward.6} parent=31 // pred_fallthru
          _
        // Predicated region
        $region37: #{dafno2d_forward.6} parent=31 // pred_check
          %p169 = pneg %p79
        $region38: #{dafno2d_forward.6} parent=31 // pred_check_branch
          %171 = sbr.rel (%p169) target = $region40
        $region39: #{dafno2d_forward.6} parent=31 // pred_region
          %173 = dma.done [#allocation5], 16
        $region40: #{dafno2d_forward.6} parent=31 // pred_fallthru
          _
        %s174 = smul.u32 8, %s16
        %p175 = scmp.lt.s32.totalorder %s174, 63
        %s176 = scalar_select %p175, %s174, 63
        %s177 = smul.addr %s176, 8
        %s178 = scalar_lea.vmem %s0, %s177
        %p179 = pneg %p37
        %p180 = pneg %p34
        %p181 = pneg %p58
        %p182 = pneg %p55
        %p183 = pneg %p79
        %p184 = pneg %p76
        %p185 = pneg %p105
        %p186 = pneg %p102
        %s187 = smul.u32 8, %s16
        %p188 = scmp.lt.s32.totalorder %s187, 63
        %s189 = scalar_select %p188, %s187, 63
        %s190 = smul.addr %s189, 4
        %s191 = scalar_lea.vmem %s3, %s190
        %s192 = smul.u32 8, %s16
        %p193 = scmp.lt.s32.totalorder %s192, 63
        %s194 = scalar_select %p193, %s192, 63
        %s195 = smul.addr %s194, 8
        %s196 = scalar_lea.vmem %s0, %s195
        %s197 = smul.u32 8, %s16
        %s198 = smul.u32 8, %s16
        %p199 = scmp.lt.s32.totalorder %s198, 63
        %s200 = scalar_select %p199, %s198, 63
        %s201 = smul.addr %s200, 4
        %s202 = scalar_lea.vmem %s3, %s201
        %s203 = smul.u32 8, %s16
        %v204 = vld [vmem:[%s196] sm:$0xff]
        %v205 = vld [vmem:[%s196 + $0x8] sm:$0xff]
        %v206 = vld [vmem:[%s196 + $0x10] sm:$0xff]
        %v207 = vld [vmem:[%s196 + $0x18] sm:$0xff]
        %v208 = vld [vmem:[%s196 + $0x20] sm:$0xff]
        %v209 = vld [vmem:[%s196 + $0x28] sm:$0xff]
        %v210 = vld [vmem:[%s196 + $0x30] sm:$0xff]
        %v211 = vld [vmem:[%s196 + $0x38] sm:$0xff]
        %v212 = vld [vmem:[#allocation2] sm:$0x7]
        %v213 = vld [vmem:[#allocation4] sm:$0x1]
        %v215 = vperm.slane %v213, 0
        %vm217 = vcmask 23552
        %v219 = vsel %vm217, %v204, 0
        %v222 = vsel %vm217, %v205, 0
        %v225 = vsel %vm217, %v206, 0
        %v228 = vsel %vm217, %v207, 0
        %v231 = vsel %vm217, %v208, 0
        %v234 = vsel %vm217, %v209, 0
        %v237 = vsel %vm217, %v210, 0
        %v240 = vsel %vm217, %v211, 0
        %vm242 = vcmask 1042432
        %v244 = vsel %vm242, %v212, 0
        %246 = vmatpush.msra.mxu0 0.0
        %247 = vmatpush.msra.mxu0 0.0
        %248 = vmatpush.msra.mxu0 0.0
        %249 = vmatpush.msra.mxu0 0.0
        %250 = vmatpush.msra.mxu0 0.0
        %251 = vmatpush.msra.mxu0 0.0
        %252 = vmatpush.msra.mxu0 0.0
        %253 = vmatpush.msra.mxu0 0.0
        %254 = vmatpush.msra.mxu0 0.0
        %255 = vmatpush.msra.mxu0 0.0
        %256 = vmatpush.msra.mxu0 0.0
        %257 = vmatpush.msra.mxu0 0.0
        %258 = vmatpush.msra.mxu0 0.0
        %259 = vmatpush.msra.mxu0 0.0
        %260 = vmatpush.msra.mxu0 0.0
        %261 = vmatpush.msra.mxu0 %v244
        %262 = vmatmul.f32.gmra.mxu0 %v219
        %v263 = vpop.f32.mrf.mxu0
        %v264 = vadd.f32 %v215, %v263
        %265 = vmatmul.f32.gmra.mxu0 %v222
        %v266 = vpop.f32.mrf.mxu0
        %v267 = vadd.f32 %v215, %v266
        %268 = vmatmul.f32.gmra.mxu0 %v225
        %v269 = vpop.f32.mrf.mxu0
        %v270 = vadd.f32 %v215, %v269
        %271 = vmatmul.f32.gmra.mxu0 %v228
        %v272 = vpop.f32.mrf.mxu0
        %v273 = vadd.f32 %v215, %v272
        %274 = vmatmul.f32.gmra.mxu0 %v231
        %v275 = vpop.f32.mrf.mxu0
        %v276 = vadd.f32 %v215, %v275
        %277 = vmatmul.f32.gmra.mxu0 %v234
        %v278 = vpop.f32.mrf.mxu0
        %v279 = vadd.f32 %v215, %v278
        %280 = vmatmul.f32.gmra.mxu0 %v237
        %v281 = vpop.f32.mrf.mxu0
        %v282 = vadd.f32 %v215, %v281
        %283 = vmatmul.f32.gmra.mxu0 %v240
        %v284 = vpop.f32.mrf.mxu0
        %v285 = vadd.f32 %v215, %v284
        %286 = vdwg.mxu0
        %v287 = vpack.c.bf16 %v264, %v264
        %v288 = vpack.c.bf16 %v267, %v267
        %v289 = vpack.c.bf16 %v270, %v270
        %v290 = vpack.c.bf16 %v273, %v273
        %v291 = vpack.c.bf16 %v276, %v276
        %v292 = vpack.c.bf16 %v279, %v279
        %v293 = vpack.c.bf16 %v282, %v282
        %v294 = vpack.c.bf16 %v285, %v285
        %vm295 = vcmask 257024
        %296 = vst.msk [vmem:[%s202] sm:$0xf] %vm295, %v287
        %297 = vst.msk [vmem:[%s202 + $0x4] sm:$0xf] %vm295, %v288
        %298 = vst.msk [vmem:[%s202 + $0x8] sm:$0xf] %vm295, %v289
        %299 = vst.msk [vmem:[%s202 + $0xc] sm:$0xf] %vm295, %v290
        %300 = vst.msk [vmem:[%s202 + $0x10] sm:$0xf] %vm295, %v291
        %301 = vst.msk [vmem:[%s202 + $0x14] sm:$0xf] %vm295, %v292
        %302 = vst.msk [vmem:[%s202 + $0x18] sm:$0xf] %vm295, %v293
        %303 = vst.msk [vmem:[%s202 + $0x1c] sm:$0xf] %vm295, %v294
        %s304 = smul.u32 8, %s16
        %p305 = scmp.lt.s32.totalorder %s304, 63
        %s306 = scalar_select %p305, %s304, 63
        %s307 = smul.addr %s306, 4
        %s308 = scalar_lea.vmem %s3, %s307
        // Predicated region
        $region41: #{dafno2d_forward.6} parent=31 // pred_check
          %p309 = pneg %p102
        $region42: #{dafno2d_forward.6} parent=31 // pred_check_branch
          %311 = sbr.rel (%p309) target = $region44
        $region43: #{dafno2d_forward.6} parent=31 // pred_region
          %s312 = smul.u32 8, %s16
        $region44: #{dafno2d_forward.6} parent=31 // pred_fallthru
          _
      $region32: #{dafno2d_forward.6} parent=5 // pred_fallthru
        _
      %p313 = scmp.le.s32.totalorder 2, %s11
      // Predicated region
      $region45: #{dafno2d_forward.6} parent=5 // pred_check
        %p314 = pneg %p313
      $region46: #{dafno2d_forward.6} parent=5 // pred_check_branch
        %316 = sbr.rel (%p314) target = $region48
      $region47: #{dafno2d_forward.6} parent=5 // pred_region
        %s317 = ssub.s32 %s11, 2
        // Predicated region
        $region49: #{dafno2d_forward.6} parent=47 // pred_check
          %p318 = pneg %p108
        $region50: #{dafno2d_forward.6} parent=47 // pred_check_branch
          %320 = sbr.rel (%p318) target = $region52
        $region51: #{dafno2d_forward.6} parent=47 // pred_region
          %s321 = smul.u32 8, %s17
          %p322 = scmp.lt.s32.totalorder %s321, 63
          %s323 = scalar_select %p322, %s321, 63
          %s324 = smul.addr %s323, 4
          %s325 = scalar_lea.vmem %s3, %s324
        $region52: #{dafno2d_forward.6} parent=47 // pred_fallthru
          _
      $region48: #{dafno2d_forward.6} parent=5 // pred_fallthru
        _
    $region6: #{dafno2d_forward.6} parent=1 // loop_footer
      %s15 = sadd.s32 1, %s11
    $region7: #{dafno2d_forward.6} parent=1 // loop_footer_branch
      %10 = sbr.rel target = $region3
    $region8: #{dafno2d_forward.6} parent=1 // loop_exit
      _
    %326 = vsyncpa [#allocation3], 1
    %s327 = scalar_lea.sflag [#allocation3], 1
    %328 = vsyncpa %s327, 1
    %329 = vsyncpa [#allocation5], 1

// kernel: reverse.10
$region0: #{reverse.10}
  #allocation0 [shape = 's32[1]{0}', space=sflag, size = 0x4, scoped, tag = 'scoped memory for reverse.10']
  %s0 = inlined_call_operand.vmem [shape: f32[2,32,24,11], index: 0, kind: input, shape index: {}]
  %s1 = inlined_call_operand.vmem [shape: f32[2,32,24,11], index: 1, kind: output, shape index: {}]
  %s2 = scalar_lea.vmem %s0, 240
  %v3 = vld [vmem:[%s2] sm:$0xff]
  %4 = vst [vmem:[%s1] sm:$0xff] %v3
  %s5 = scalar_lea.vmem %s0, 504
  %v6 = vld [vmem:[%s5] sm:$0xff]
  %s7 = scalar_lea.vmem %s1, 264
  %8 = vst [vmem:[%s7] sm:$0xff] %v6
  %s9 = scalar_lea.vmem %s0, 216
  %v10 = vld [vmem:[%s9] sm:$0xff]
  %s11 = scalar_lea.vmem %s1, 24
  %12 = vst [vmem:[%s11] sm:$0xff] %v10
  %s13 = scalar_lea.vmem %s0, 480
  %v14 = vld [vmem:[%s13] sm:$0xff]
  %s15 = scalar_lea.vmem %s1, 288
  %16 = vst [vmem:[%s15] sm:$0xff] %v14
  %s17 = scalar_lea.vmem %s0, 192
  %v18 = vld [vmem:[%s17] sm:$0xff]
  %s19 = scalar_lea.vmem %s1, 48
  %20 = vst [vmem:[%s19] sm:$0xff] %v18
  %s21 = scalar_lea.vmem %s0, 456
  %v22 = vld [vmem:[%s21] sm:$0xff]
  %s23 = scalar_lea.vmem %s1, 312
  %24 = vst [vmem:[%s23] sm:$0xff] %v22
  %s25 = scalar_lea.vmem %s0, 168
  %v26 = vld [vmem:[%s25] sm:$0xff]
  %s27 = scalar_lea.vmem %s1, 72
  %28 = vst [vmem:[%s27] sm:$0xff] %v26
  %s29 = scalar_lea.vmem %s0, 432
  %v30 = vld [vmem:[%s29] sm:$0xff]
  %s31 = scalar_lea.vmem %s1, 336
  %32 = vst [vmem:[%s31] sm:$0xff] %v30
  %s33 = scalar_lea.vmem %s0, 144
  %v34 = vld [vmem:[%s33] sm:$0xff]
  %s35 = scalar_lea.vmem %s1, 96
  %36 = vst [vmem:[%s35] sm:$0xff] %v34
  %s37 = scalar_lea.vmem %s0, 408
  %v38 = vld [vmem:[%s37] sm:$0xff]
  %s39 = scalar_lea.vmem %s1, 360
  %40 = vst [vmem:[%s39] sm:$0xff] %v38
  %s41 = scalar_lea.vmem %s0, 120
  %v42 = vld [vmem:[%s41] sm:$0xff]
  %s43 = scalar_lea.vmem %s1, 120
  %44 = vst [vmem:[%s43] sm:$0xff] %v42
  %s45 = scalar_lea.vmem %s0, 384
  %v46 = vld [vmem:[%s45] sm:$0xff]
  %s47 = scalar_lea.vmem %s1, 384
  %48 = vst [vmem:[%s47] sm:$0xff] %v46
  %s49 = scalar_lea.vmem %s0, 96
  %v50 = vld [vmem:[%s49] sm:$0xff]
  %s51 = scalar_lea.vmem %s1, 144
  %52 = vst [vmem:[%s51] sm:$0xff] %v50
  %s53 = scalar_lea.vmem %s0, 360
  %v54 = vld [vmem:[%s53] sm:$0xff]
  %s55 = scalar_lea.vmem %s1, 408
  %56 = vst [vmem:[%s55] sm:$0xff] %v54
  %s57 = scalar_lea.vmem %s0, 72
  %v58 = vld [vmem:[%s57] sm:$0xff]
  %s59 = scalar_lea.vmem %s1, 168
  %60 = vst [vmem:[%s59] sm:$0xff] %v58
  %s61 = scalar_lea.vmem %s0, 336
  %v62 = vld [vmem:[%s61] sm:$0xff]
  %s63 = scalar_lea.vmem %s1, 432
  %64 = vst [vmem:[%s63] sm:$0xff] %v62
  %s65 = scalar_lea.vmem %s0, 48
  %v66 = vld [vmem:[%s65] sm:$0xff]
  %s67 = scalar_lea.vmem %s1, 192
  %68 = vst [vmem:[%s67] sm:$0xff] %v66
  %s69 = scalar_lea.vmem %s0, 312
  %v70 = vld [vmem:[%s69] sm:$0xff]
  %s71 = scalar_lea.vmem %s1, 456
  %72 = vst [vmem:[%s71] sm:$0xff] %v70
  %s73 = scalar_lea.vmem %s0, 24
  %v74 = vld [vmem:[%s73] sm:$0xff]
  %s75 = scalar_lea.vmem %s1, 216
  %76 = vst [vmem:[%s75] sm:$0xff] %v74
  %s77 = scalar_lea.vmem %s0, 288
  %v78 = vld [vmem:[%s77] sm:$0xff]
  %s79 = scalar_lea.vmem %s1, 480
  %80 = vst [vmem:[%s79] sm:$0xff] %v78
  %v81 = vld [vmem:[%s0] sm:$0xff]
  %s82 = scalar_lea.vmem %s1, 240
  %83 = vst [vmem:[%s82] sm:$0xff] %v81
  %s84 = scalar_lea.vmem %s0, 264
  %v85 = vld [vmem:[%s84] sm:$0xff]
  %s86 = scalar_lea.vmem %s1, 504
  %87 = vst [vmem:[%s86] sm:$0xff] %v85
  %s88 = scalar_lea.vmem %s0, 248
  %v89 = vld [vmem:[%s88] sm:$0xff]
  %s90 = scalar_lea.vmem %s1, 8
  %91 = vst [vmem:[%s90] sm:$0xff] %v89
  %s92 = scalar_lea.vmem %s0, 512
  %v93 = vld [vmem:[%s92] sm:$0xff]
  %s94 = scalar_lea.vmem %s1, 272
  %95 = vst [vmem:[%s94] sm:$0xff] %v93
  %s96 = scalar_lea.vmem %s0, 224
  %v97 = vld [vmem:[%s96] sm:$0xff]
  %s98 = scalar_lea.vmem %s1, 32
  %99 = vst [vmem:[%s98] sm:$0xff] %v97
  %s100 = scalar_lea.vmem %s0, 488
  %v101 = vld [vmem:[%s100] sm:$0xff]
  %s102 = scalar_lea.vmem %s1, 296
  %103 = vst [vmem:[%s102] sm:$0xff] %v101
  %s104 = scalar_lea.vmem %s0, 200
  %v105 = vld [vmem:[%s104] sm:$0xff]
  %s106 = scalar_lea.vmem %s1, 56
  %107 = vst [vmem:[%s106] sm:$0xff] %v105
  %s108 = scalar_lea.vmem %s0, 464
  %v109 = vld [vmem:[%s108] sm:$0xff]
  %s110 = scalar_lea.vmem %s1, 320
  %111 = vst [vmem:[%s110] sm:$0xff] %v109
  %s112 = scalar_lea.vmem %s0, 176
  %v113 = vld [vmem:[%s112] sm:$0xff]
  %s114 = scalar_lea.vmem %s1, 80
  %115 = vst [vmem:[%s114] sm:$0xff] %v113
  %s116 = scalar_lea.vmem %s0, 440
  %v117 = vld [vmem:[%s116] sm:$0xff]
  %s118 = scalar_lea.vmem %s1, 344
  %119 = vst [vmem:[%s118] sm:$0xff] %v117
  %s120 = scalar_lea.vmem %s0, 152
  %v121 = vld [vmem:[%s120] sm:$0xff]
  %s122 = scalar_lea.vmem %s1, 104
  %123 = vst [vmem:[%s122] sm:$0xff] %v121
  %s124 = scalar_lea.vmem %s0, 416
  %v125 = vld [vmem:[%s124] sm:$0xff]
  %s126 = scalar_lea.vmem %s1, 368
  %127 = vst [vmem:[%s126] sm:$0xff] %v125
  %s128 = scalar_lea.vmem %s0, 128
  %v129 = vld [vmem:[%s128] sm:$0xff]
  %s130 = scalar_lea.vmem %s1, 128
  %131 = vst [vmem:[%s130] sm:$0xff] %v129
  %s132 = scalar_lea.vmem %s0, 392
  %v133 = vld [vmem:[%s132] sm:$0xff]
  %s134 = scalar_lea.vmem %s1, 392
  %135 = vst [vmem:[%s134] sm:$0xff] %v133
  %s136 = scalar_lea.vmem %s0, 104
  %v137 = vld [vmem:[%s136] sm:$0xff]
  %s138 = scalar_lea.vmem %s1, 152
  %139 = vst [vmem:[%s138] sm:$0xff] %v137
  %s140 = scalar_lea.vmem %s0, 368
  %v141 = vld [vmem:[%s140] sm:$0xff]
  %s142 = scalar_lea.vmem %s1, 416
  %143 = vst [vmem:[%s142] sm:$0xff] %v141
  %s144 = scalar_lea.vmem %s0, 80
  %v145 = vld [vmem:[%s144] sm:$0xff]
  %s146 = scalar_lea.vmem %s1, 176
  %147 = vst [vmem:[%s146] sm:$0xff] %v145
  %s148 = scalar_lea.vmem %s0, 344
  %v149 = vld [vmem:[%s148] sm:$0xff]
  %s150 = scalar_lea.vmem %s1, 440
  %151 = vst [vmem:[%s150] sm:$0xff] %v149
  %s152 = scalar_lea.vmem %s0, 56
  %v153 = vld [vmem:[%s152] sm:$0xff]
  %s154 = scalar_lea.vmem %s1, 200
  %155 = vst [vmem:[%s154] sm:$0xff] %v153
  %s156 = scalar_lea.vmem %s0, 320
  %v157 = vld [vmem:[%s156] sm:$0xff]
  %s158 = scalar_lea.vmem %s1, 464
  %159 = vst [vmem:[%s158] sm:$0xff] %v157
  %s160 = scalar_lea.vmem %s0, 32
  %v161 = vld [vmem:[%s160] sm:$0xff]
  %s162 = scalar_lea.vmem %s1, 224
  %163 = vst [vmem:[%s162] sm:$0xff] %v161
  %s164 = scalar_lea.vmem %s0, 296
  %v165 = vld [vmem:[%s164] sm:$0xff]
  %s166 = scalar_lea.vmem %s1, 488
  %167 = vst [vmem:[%s166] sm:$0xff] %v165
  %s168 = scalar_lea.vmem %s0, 8
  %v169 = vld [vmem:[%s168] sm:$0xff]
  %s170 = scalar_lea.vmem %s1, 248
  %171 = vst [vmem:[%s170] sm:$0xff] %v169
  %s172 = scalar_lea.vmem %s0, 272
  %v173 = vld [vmem:[%s172] sm:$0xff]
  %s174 = scalar_lea.vmem %s1, 512
  %175 = vst [vmem:[%s174] sm:$0xff] %v173
  %s176 = scalar_lea.vmem %s0, 256
  %v177 = vld [vmem:[%s176] sm:$0xff]
  %s178 = scalar_lea.vmem %s1, 16
  %179 = vst [vmem:[%s178] sm:$0xff] %v177
  %s180 = scalar_lea.vmem %s0, 520
  %v181 = vld [vmem:[%s180] sm:$0xff]
  %s182 = scalar_lea.vmem %s1, 280
  %183 = vst [vmem:[%s182] sm:$0xff] %v181
  %s184 = scalar_lea.vmem %s0, 232
  %v185 = vld [vmem:[%s184] sm:$0xff]
  %s186 = scalar_lea.vmem %s1, 40
  %187 = vst [vmem:[%s186] sm:$0xff] %v185
  %s188 = scalar_lea.vmem %s0, 496
  %v189 = vld [vmem:[%s188] sm:$0xff]
  %s190 = scalar_lea.vmem %s1, 304
  %191 = vst [vmem:[%s190] sm:$0xff] %v189
  %s192 = scalar_lea.vmem %s0, 208
  %v193 = vld [vmem:[%s192] sm:$0xff]
  %s194 = scalar_lea.vmem %s1, 64
  %195 = vst [vmem:[%s194] sm:$0xff] %v193
  %s196 = scalar_lea.vmem %s0, 472
  %v197 = vld [vmem:[%s196] sm:$0xff]
  %s198 = scalar_lea.vmem %s1, 328
  %199 = vst [vmem:[%s198] sm:$0xff] %v197
  %s200 = scalar_lea.vmem %s0, 184
  %v201 = vld [vmem:[%s200] sm:$0xff]
  %s202 = scalar_lea.vmem %s1, 88
  %203 = vst [vmem:[%s202] sm:$0xff] %v201
  %s204 = scalar_lea.vmem %s0, 448
  %v205 = vld [vmem:[%s204] sm:$0xff]
  %s206 = scalar_lea.vmem %s1, 352
  %207 = vst [vmem:[%s206] sm:$0xff] %v205
  %s208 = scalar_lea.vmem %s0, 160
  %v209 = vld [vmem:[%s208] sm:$0xff]
  %s210 = scalar_lea.vmem %s1, 112
  %211 = vst [vmem:[%s210] sm:$0xff] %v209
  %s212 = scalar_lea.vmem %s0, 424
  %v213 = vld [vmem:[%s212] sm:$0xff]
  %s214 = scalar_lea.vmem %s1, 376
  %215 = vst [vmem:[%s214] sm:$0xff] %v213
  %s216 = scalar_lea.vmem %s0, 136
  %v217 = vld [vmem:[%s216] sm:$0xff]
  %s218 = scalar_lea.vmem %s1, 136
  %219 = vst [vmem:[%s218] sm:$0xff] %v217
  %s220 = scalar_lea.vmem %s0, 400
  %v221 = vld [vmem:[%s220] sm:$0xff]
  %s222 = scalar_lea.vmem %s1, 400
  %223 = vst [vmem:[%s222] sm:$0xff] %v221
  %s224 = scalar_lea.vmem %s0, 112
  %v225 = vld [vmem:[%s224] sm:$0xff]
  %s226 = scalar_lea.vmem %s1, 160
  %227 = vst [vmem:[%s226] sm:$0xff] %v225
  %s228 = scalar_lea.vmem %s0, 376
  %v229 = vld [vmem:[%s228] sm:$0xff]
  %s230 = scalar_lea.vmem %s1, 424
  %231 = vst [vmem:[%s230] sm:$0xff] %v229
  %s232 = scalar_lea.vmem %s0, 88
  %v233 = vld [vmem:[%s232] sm:$0xff]
  %s234 = scalar_lea.vmem %s1, 184
  %235 = vst [vmem:[%s234] sm:$0xff] %v233
  %s236 = scalar_lea.vmem %s0, 352
  %v237 = vld [vmem:[%s236] sm:$0xff]
  %s238 = scalar_lea.vmem %s1, 448
  %239 = vst [vmem:[%s238] sm:$0xff] %v237
  %s240 = scalar_lea.vmem %s0, 64
  %v241 = vld [vmem:[%s240] sm:$0xff]
  %s242 = scalar_lea.vmem %s1, 208
  %243 = vst [vmem:[%s242] sm:$0xff] %v241
  %s244 = scalar_lea.vmem %s0, 328
  %v245 = vld [vmem:[%s244] sm:$0xff]
  %s246 = scalar_lea.vmem %s1, 472
  %247 = vst [vmem:[%s246] sm:$0xff] %v245
  %s248 = scalar_lea.vmem %s0, 40
  %v249 = vld [vmem:[%s248] sm:$0xff]
  %s250 = scalar_lea.vmem %s1, 232
  %251 = vst [vmem:[%s250] sm:$0xff] %v249
  %s252 = scalar_lea.vmem %s0, 304
  %v253 = vld [vmem:[%s252] sm:$0xff]
  %s254 = scalar_lea.vmem %s1, 496
  %255 = vst [vmem:[%s254] sm:$0xff] %v253
  %s256 = scalar_lea.vmem %s0, 16
  %v257 = vld [vmem:[%s256] sm:$0xff]
  %s258 = scalar_lea.vmem %s1, 256
  %259 = vst [vmem:[%s258] sm:$0xff] %v257
  %s260 = scalar_lea.vmem %s0, 280
  %v261 = vld [vmem:[%s260] sm:$0xff]
  %s262 = scalar_lea.vmem %s1, 520
  %263 = vst [vmem:[%s262] sm:$0xff] %v261

// kernel: reverse.2
$region0: #{reverse.2}
  #allocation0 [shape = 's32[1]{0}', space=sflag, size = 0x4, scoped, tag = 'scoped memory for reverse.2']
  %s0 = inlined_call_operand.vmem [shape: f32[4,2,32,24,11], index: 0, kind: input, shape index: {}]
  %s1 = inlined_call_operand.vmem [shape: f32[4,2,32,24,11], index: 1, kind: output, shape index: {}]
  %s2 = scalar_lea.vmem %s0, 240
  %v3 = vld [vmem:[%s2] sm:$0xff]
  %4 = vst [vmem:[%s1] sm:$0xff] %v3
  %s5 = scalar_lea.vmem %s0, 768
  %v6 = vld [vmem:[%s5] sm:$0xff]
  %s7 = scalar_lea.vmem %s1, 528
  %8 = vst [vmem:[%s7] sm:$0xff] %v6
  %s9 = scalar_lea.vmem %s0, 1296
  %v10 = vld [vmem:[%s9] sm:$0xff]
  %s11 = scalar_lea.vmem %s1, 1056
  %12 = vst [vmem:[%s11] sm:$0xff] %v10
  %s13 = scalar_lea.vmem %s0, 1824
  %v14 = vld [vmem:[%s13] sm:$0xff]
  %s15 = scalar_lea.vmem %s1, 1584
  %16 = vst [vmem:[%s15] sm:$0xff] %v14
  %s17 = scalar_lea.vmem %s0, 504
  %v18 = vld [vmem:[%s17] sm:$0xff]
  %s19 = scalar_lea.vmem %s1, 264
  %20 = vst [vmem:[%s19] sm:$0xff] %v18
  %s21 = scalar_lea.vmem %s0, 1032
  %v22 = vld [vmem:[%s21] sm:$0xff]
  %s23 = scalar_lea.vmem %s1, 792
  %24 = vst [vmem:[%s23] sm:$0xff] %v22
  %s25 = scalar_lea.vmem %s0, 1560
  %v26 = vld [vmem:[%s25] sm:$0xff]
  %s27 = scalar_lea.vmem %s1, 1320
  %28 = vst [vmem:[%s27] sm:$0xff] %v26
  %s29 = scalar_lea.vmem %s0, 2088
  %v30 = vld [vmem:[%s29] sm:$0xff]
  %s31 = scalar_lea.vmem %s1, 1848
  %32 = vst [vmem:[%s31] sm:$0xff] %v30
  %s33 = scalar_lea.vmem %s0, 216
  %v34 = vld [vmem:[%s33] sm:$0xff]
  %s35 = scalar_lea.vmem %s1, 24
  %36 = vst [vmem:[%s35] sm:$0xff] %v34
  %s37 = scalar_lea.vmem %s0, 744
  %v38 = vld [vmem:[%s37] sm:$0xff]
  %s39 = scalar_lea.vmem %s1, 552
  %40 = vst [vmem:[%s39] sm:$0xff] %v38
  %s41 = scalar_lea.vmem %s0, 1272
  %v42 = vld [vmem:[%s41] sm:$0xff]
  %s43 = scalar_lea.vmem %s1, 1080
  %44 = vst [vmem:[%s43] sm:$0xff] %v42
  %s45 = scalar_lea.vmem %s0, 1800
  %v46 = vld [vmem:[%s45] sm:$0xff]
  %s47 = scalar_lea.vmem %s1, 1608
  %48 = vst [vmem:[%s47] sm:$0xff] %v46
  %s49 = scalar_lea.vmem %s0, 480
  %v50 = vld [vmem:[%s49] sm:$0xff]
  %s51 = scalar_lea.vmem %s1, 288
  %52 = vst [vmem:[%s51] sm:$0xff] %v50
  %s53 = scalar_lea.vmem %s0, 1008
  %v54 = vld [vmem:[%s53] sm:$0xff]
  %s55 = scalar_lea.vmem %s1, 816
  %56 = vst [vmem:[%s55] sm:$0xff] %v54
  %s57 = scalar_lea.vmem %s0, 1536
  %v58 = vld [vmem:[%s57] sm:$0xff]
  %s59 = scalar_lea.vmem %s1, 1344
  %60 = vst [vmem:[%s59] sm:$0xff] %v58
  %s61 = scalar_lea.vmem %s0, 2064
  %v62 = vld [vmem:[%s61] sm:$0xff]
  %s63 = scalar_lea.vmem %s1, 1872
  %64 = vst [vmem:[%s63] sm:$0xff] %v62
  %s65 = scalar_lea.vmem %s0, 192
  %v66 = vld [vmem:[%s65] sm:$0xff]
  %s67 = scalar_lea.vmem %s1, 48
  %68 = vst [vmem:[%s67] sm:$0xff] %v66
  %s69 = scalar_lea.vmem %s0, 720
  %v70 = vld [vmem:[%s69] sm:$0xff]
  %s71 = scalar_lea.vmem %s1, 576
  %72 = vst [vmem:[%s71] sm:$0xff] %v70
  %s73 = scalar_lea.vmem %s0, 1248
  %v74 = vld [vmem:[%s73] sm:$0xff]
  %s75 = scalar_lea.vmem %s1, 1104
  %76 = vst [vmem:[%s75] sm:$0xff] %v74
  %s77 = scalar_lea.vmem %s0, 1776
  %v78 = vld [vmem:[%s77] sm:$0xff]
  %s79 = scalar_lea.vmem %s1, 1632
  %80 = vst [vmem:[%s79] sm:$0xff] %v78
  %s81 = scalar_lea.vmem %s0, 456
  %v82 = vld [vmem:[%s81] sm:$0xff]
  %s83 = scalar_lea.vmem %s1, 312
  %84 = vst [vmem:[%s83] sm:$0xff] %v82
  %s85 = scalar_lea.vmem %s0, 984
  %v86 = vld [vmem:[%s85] sm:$0xff]
  %s87 = scalar_lea.vmem %s1, 840
  %88 = vst [vmem:[%s87] sm:$0xff] %v86
  %s89 = scalar_lea.vmem %s0, 1512
  %v90 = vld [vmem:[%s89] sm:$0xff]
  %s91 = scalar_lea.vmem %s1, 1368
  %92 = vst [vmem:[%s91] sm:$0xff] %v90
  %s93 = scalar_lea.vmem %s0, 2040
  %v94 = vld [vmem:[%s93] sm:$0xff]
  %s95 = scalar_lea.vmem %s1, 1896
  %96 = vst [vmem:[%s95] sm:$0xff] %v94
  %s97 = scalar_lea.vmem %s0, 168
  %v98 = vld [vmem:[%s97] sm:$0xff]
  %s99 = scalar_lea.vmem %s1, 72
  %100 = vst [vmem:[%s99] sm:$0xff] %v98
  %s101 = scalar_lea.vmem %s0, 696
  %v102 = vld [vmem:[%s101] sm:$0xff]
  %s103 = scalar_lea.vmem %s1, 600
  %104 = vst [vmem:[%s103] sm:$0xff] %v102
  %s105 = scalar_lea.vmem %s0, 1224
  %v106 = vld [vmem:[%s105] sm:$0xff]
  %s107 = scalar_lea.vmem %s1, 1128
  %108 = vst [vmem:[%s107] sm:$0xff] %v106
  %s109 = scalar_lea.vmem %s0, 1752
  %v110 = vld [vmem:[%s109] sm:$0xff]
  %s111 = scalar_lea.vmem %s1, 1656
  %112 = vst [vmem:[%s111] sm:$0xff] %v110
  %s113 = scalar_lea.vmem %s0, 432
  %v114 = vld [vmem:[%s113] sm:$0xff]
  %s115 = scalar_lea.vmem %s1, 336
  %116 = vst [vmem:[%s115] sm:$0xff] %v114
  %s117 = scalar_lea.vmem %s0, 960
  %v118 = vld [vmem:[%s117] sm:$0xff]
  %s119 = scalar_lea.vmem %s1, 864
  %120 = vst [vmem:[%s119] sm:$0xff] %v118
  %s121 = scalar_lea.vmem %s0, 1488
  %v122 = vld [vmem:[%s121] sm:$0xff]
  %s123 = scalar_lea.vmem %s1, 1392
  %124 = vst [vmem:[%s123] sm:$0xff] %v122
  %s125 = scalar_lea.vmem %s0, 2016
  %v126 = vld [vmem:[%s125] sm:$0xff]
  %s127 = scalar_lea.vmem %s1, 1920
  %128 = vst [vmem:[%s127] sm:$0xff] %v126
  %s129 = scalar_lea.vmem %s0, 144
  %v130 = vld [vmem:[%s129] sm:$0xff]
  %s131 = scalar_lea.vmem %s1, 96
  %132 = vst [vmem:[%s131] sm:$0xff] %v130
  %s133 = scalar_lea.vmem %s0, 672
  %v134 = vld [vmem:[%s133] sm:$0xff]
  %s135 = scalar_lea.vmem %s1, 624
  %136 = vst [vmem:[%s135] sm:$0xff] %v134
  %s137 = scalar_lea.vmem %s0, 1200
  %v138 = vld [vmem:[%s137] sm:$0xff]
  %s139 = scalar_lea.vmem %s1, 1152
  %140 = vst [vmem:[%s139] sm:$0xff] %v138
  %s141 = scalar_lea.vmem %s0, 1728
  %v142 = vld [vmem:[%s141] sm:$0xff]
  %s143 = scalar_lea.vmem %s1, 1680
  %144 = vst [vmem:[%s143] sm:$0xff] %v142
  %s145 = scalar_lea.vmem %s0, 408
  %v146 = vld [vmem:[%s145] sm:$0xff]
  %s147 = scalar_lea.vmem %s1, 360
  %148 = vst [vmem:[%s147] sm:$0xff] %v146
  %s149 = scalar_lea.vmem %s0, 936
  %v150 = vld [vmem:[%s149] sm:$0xff]
  %s151 = scalar_lea.vmem %s1, 888
  %152 = vst [vmem:[%s151] sm:$0xff] %v150
  %s153 = scalar_lea.vmem %s0, 1464
  %v154 = vld [vmem:[%s153] sm:$0xff]
  %s155 = scalar_lea.vmem %s1, 1416
  %156 = vst [vmem:[%s155] sm:$0xff] %v154
  %s157 = scalar_lea.vmem %s0, 1992
  %v158 = vld [vmem:[%s157] sm:$0xff]
  %s159 = scalar_lea.vmem %s1, 1944
  %160 = vst [vmem:[%s159] sm:$0xff] %v158
  %s161 = scalar_lea.vmem %s0, 120
  %v162 = vld [vmem:[%s161] sm:$0xff]
  %s163 = scalar_lea.vmem %s1, 120
  %164 = vst [vmem:[%s163] sm:$0xff] %v162
  %s165 = scalar_lea.vmem %s0, 648
  %v166 = vld [vmem:[%s165] sm:$0xff]
  %s167 = scalar_lea.vmem %s1, 648
  %168 = vst [vmem:[%s167] sm:$0xff] %v166
  %s169 = scalar_lea.vmem %s0, 1176
  %v170 = vld [vmem:[%s169] sm:$0xff]
  %s171 = scalar_lea.vmem %s1, 1176
  %172 = vst [vmem:[%s171] sm:$0xff] %v170
  %s173 = scalar_lea.vmem %s0, 1704
  %v174 = vld [vmem:[%s173] sm:$0xff]
  %s175 = scalar_lea.vmem %s1, 1704
  %176 = vst [vmem:[%s175] sm:$0xff] %v174
  %s177 = scalar_lea.vmem %s0, 384
  %v178 = vld [vmem:[%s177] sm:$0xff]
  %s179 = scalar_lea.vmem %s1, 384
  %180 = vst [vmem:[%s179] sm:$0xff] %v178
  %s181 = scalar_lea.vmem %s0, 912
  %v182 = vld [vmem:[%s181] sm:$0xff]
  %s183 = scalar_lea.vmem %s1, 912
  %184 = vst [vmem:[%s183] sm:$0xff] %v182
  %s185 = scalar_lea.vmem %s0, 1440
  %v186 = vld [vmem:[%s185] sm:$0xff]
  %s187 = scalar_lea.vmem %s1, 1440
  %188 = vst [vmem:[%s187] sm:$0xff] %v186
  %s189 = scalar_lea.vmem %s0, 1968
  %v190 = vld [vmem:[%s189] sm:$0xff]
  %s191 = scalar_lea.vmem %s1, 1968
  %192 = vst [vmem:[%s191] sm:$0xff] %v190
  %s193 = scalar_lea.vmem %s0, 96
  %v194 = vld [vmem:[%s193] sm:$0xff]
  %s195 = scalar_lea.vmem %s1, 144
  %196 = vst [vmem:[%s195] sm:$0xff] %v194
  %s197 = scalar_lea.vmem %s0, 624
  %v198 = vld [vmem:[%s197] sm:$0xff]
  %s199 = scalar_lea.vmem %s1, 672
  %200 = vst [vmem:[%s199] sm:$0xff] %v198
  %s201 = scalar_lea.vmem %s0, 1152
  %v202 = vld [vmem:[%s201] sm:$0xff]
  %s203 = scalar_lea.vmem %s1, 1200
  %204 = vst [vmem:[%s203] sm:$0xff] %v202
  %s205 = scalar_lea.vmem %s0, 1680
  %v206 = vld [vmem:[%s205] sm:$0xff]
  %s207 = scalar_lea.vmem %s1, 1728
  %208 = vst [vmem:[%s207] sm:$0xff] %v206
  %s209 = scalar_lea.vmem %s0, 360
  %v210 = vld [vmem:[%s209] sm:$0xff]
  %s211 = scalar_lea.vmem %s1, 408
  %212 = vst [vmem:[%s211] sm:$0xff] %v210
  %s213 = scalar_lea.vmem %s0, 888
  %v214 = vld [vmem:[%s213] sm:$0xff]
  %s215 = scalar_lea.vmem %s1, 936
  %216 = vst [vmem:[%s215] sm:$0xff] %v214
  %s217 = scalar_lea.vmem %s0, 1416
  %v218 = vld [vmem:[%s217] sm:$0xff]
  %s219 = scalar_lea.vmem %s1, 1464
  %220 = vst [vmem:[%s219] sm:$0xff] %v218
  %s221 = scalar_lea.vmem %s0, 1944
  %v222 = vld [vmem:[%s221] sm:$0xff]
  %s223 = scalar_lea.vmem %s1, 1992
  %224 = vst [vmem:[%s223] sm:$0xff] %v222
  %s225 = scalar_lea.vmem %s0, 72
  %v226 = vld [vmem:[%s225] sm:$0xff]
  %s227 = scalar_lea.vmem %s1, 168
  %228 = vst [vmem:[%s227] sm:$0xff] %v226
  %s229 = scalar_lea.vmem %s0, 600
  %v230 = vld [vmem:[%s229] sm:$0xff]
  %s231 = scalar_lea.vmem %s1, 696
  %232 = vst [vmem:[%s231] sm:$0xff] %v230
  %s233 = scalar_lea.vmem %s0, 1128
  %v234 = vld [vmem:[%s233] sm:$0xff]
  %s235 = scalar_lea.vmem %s1, 1224
  %236 = vst [vmem:[%s235] sm:$0xff] %v234
  %s237 = scalar_lea.vmem %s0, 1656
  %v238 = vld [vmem:[%s237] sm:$0xff]
  %s239 = scalar_lea.vmem %s1, 1752
  %240 = vst [vmem:[%s239] sm:$0xff] %v238
  %s241 = scalar_lea.vmem %s0, 336
  %v242 = vld [vmem:[%s241] sm:$0xff]
  %s243 = scalar_lea.vmem %s1, 432
  %244 = vst [vmem:[%s243] sm:$0xff] %v242
  %s245 = scalar_lea.vmem %s0, 864
  %v246 = vld [vmem:[%s245] sm:$0xff]
  %s247 = scalar_lea.vmem %s1, 960
  %248 = vst [vmem:[%s247] sm:$0xff] %v246
  %s249 = scalar_lea.vmem %s0, 1392
  %v250 = vld [vmem:[%s249] sm:$0xff]
  %s251 = scalar_lea.vmem %s1, 1488
  %252 = vst [vmem:[%s251] sm:$0xff] %v250
  %s253 = scalar_lea.vmem %s0, 1920
  %v254 = vld [vmem:[%s253] sm:$0xff]
  %s255 = scalar_lea.vmem %s1, 2016
  %256 = vst [vmem:[%s255] sm:$0xff] %v254
  %s257 = scalar_lea.vmem %s0, 48
  %v258 = vld [vmem:[%s257] sm:$0xff]
  %s259 = scalar_lea.vmem %s1, 192
  %260 = vst [vmem:[%s259] sm:$0xff] %v258
  %s261 = scalar_lea.vmem %s0, 576
  %v262 = vld [vmem:[%s261] sm:$0xff]
  %s263 = scalar_lea.vmem %s1, 720
  %264 = vst [vmem:[%s263] sm:$0xff] %v262
  %s265 = scalar_lea.vmem %s0, 1104
  %v266 = vld [vmem:[%s265] sm:$0xff]
  %s267 = scalar_lea.vmem %s1, 1248
  %268 = vst [vmem:[%s267] sm:$0xff] %v266
  %s269 = scalar_lea.vmem %s0, 1632
  %v270 = vld [vmem:[%s269] sm:$0xff]
  %s271 = scalar_lea.vmem %s1, 1776
  %272 = vst [vmem:[%s271] sm:$0xff] %v270
  %s273 = scalar_lea.vmem %s0, 312
  %v274 = vld [vmem:[%s273] sm:$0xff]
  %s275 = scalar_lea.vmem %s1, 456
  %276 = vst [vmem:[%s275] sm:$0xff] %v274
  %s277 = scalar_lea.vmem %s0, 840
  %v278 = vld [vmem:[%s277] sm:$0xff]
  %s279 = scalar_lea.vmem %s1, 984
  %280 = vst [vmem:[%s279] sm:$0xff] %v278
  %s281 = scalar_lea.vmem %s0, 1368
  %v282 = vld [vmem:[%s281] sm:$0xff]
  %s283 = scalar_lea.vmem %s1, 1512
  %284 = vst [vmem:[%s283] sm:$0xff] %v282
  %s285 = scalar_lea.vmem %s0, 1896
  %v286 = vld [vmem:[%s285] sm:$0xff]
  %s287 = scalar_lea.vmem %s1, 2040
  %288 = vst [vmem:[%s287] sm:$0xff] %v286
  %s289 = scalar_lea.vmem %s0, 24
  %v290 = vld [vmem:[%s289] sm:$0xff]
  %s291 = scalar_lea.vmem %s1, 216
  %292 = vst [vmem:[%s291] sm:$0xff] %v290
  %s293 = scalar_lea.vmem %s0, 552
  %v294 = vld [vmem:[%s293] sm:$0xff]
  %s295 = scalar_lea.vmem %s1, 744
  %296 = vst [vmem:[%s295] sm:$0xff] %v294
  %s297 = scalar_lea.vmem %s0, 1080
  %v298 = vld [vmem:[%s297] sm:$0xff]
  %s299 = scalar_lea.vmem %s1, 1272
  %300 = vst [vmem:[%s299] sm:$0xff] %v298
  %s301 = scalar_lea.vmem %s0, 1608
  %v302 = vld [vmem:[%s301] sm:$0xff]
  %s303 = scalar_lea.vmem %s1, 1800
  %304 = vst [vmem:[%s303] sm:$0xff] %v302
  %s305 = scalar_lea.vmem %s0, 288
  %v306 = vld [vmem:[%s305] sm:$0xff]
  %s307 = scalar_lea.vmem %s1, 480
  %308 = vst [vmem:[%s307] sm:$0xff] %v306
  %s309 = scalar_lea.vmem %s0, 816
  %v310 = vld [vmem:[%s309] sm:$0xff]
  %s311 = scalar_lea.vmem %s1, 1008
  %312 = vst [vmem:[%s311] sm:$0xff] %v310
  %s313 = scalar_lea.vmem %s0, 1344
  %v314 = vld [vmem:[%s313] sm:$0xff]
  %s315 = scalar_lea.vmem %s1, 1536
  %316 = vst [vmem:[%s315] sm:$0xff] %v314
  %s317 = scalar_lea.vmem %s0, 1872
  %v318 = vld [vmem:[%s317] sm:$0xff]
  %s319 = scalar_lea.vmem %s1, 2064
  %320 = vst [vmem:[%s319] sm:$0xff] %v318
  %v321 = vld [vmem:[%s0] sm:$0xff]
  %s322 = scalar_lea.vmem %s1, 240
  %323 = vst [vmem:[%s322] sm:$0xff] %v321
  %s324 = scalar_lea.vmem %s0, 528
  %v325 = vld [vmem:[%s324] sm:$0xff]
  %s326 = scalar_lea.vmem %s1, 768
  %327 = vst [vmem:[%s326] sm:$0xff] %v325
  %s328 = scalar_lea.vmem %s0, 1056
  %v329 = vld [vmem:[%s328] sm:$0xff]
  %s330 = scalar_lea.vmem %s1, 1296
  %331 = vst [vmem:[%s330] sm:$0xff] %v329
  %s332 = scalar_lea.vmem %s0, 1584
  %v333 = vld [vmem:[%s332] sm:$0xff]
  %s334 = scalar_lea.vmem %s1, 1824
  %335 = vst [vmem:[%s334] sm:$0xff] %v333
  %s336 = scalar_lea.vmem %s0, 264
  %v337 = vld [vmem:[%s336] sm:$0xff]
  %s338 = scalar_lea.vmem %s1, 504
  %339 = vst [vmem:[%s338] sm:$0xff] %v337
  %s340 = scalar_lea.vmem %s0, 792
  %v341 = vld [vmem:[%s340] sm:$0xff]
  %s342 = scalar_lea.vmem %s1, 1032
  %343 = vst [vmem:[%s342] sm:$0xff] %v341
  %s344 = scalar_lea.vmem %s0, 1320
  %v345 = vld [vmem:[%s344] sm:$0xff]
  %s346 = scalar_lea.vmem %s1, 1560
  %347 = vst [vmem:[%s346] sm:$0xff] %v345
  %s348 = scalar_lea.vmem %s0, 1848
  %v349 = vld [vmem:[%s348] sm:$0xff]
  %s350 = scalar_lea.vmem %s1, 2088
  %351 = vst [vmem:[%s350] sm:$0xff] %v349
  %s352 = scalar_lea.vmem %s0, 248
  %v353 = vld [vmem:[%s352] sm:$0xff]
  %s354 = scalar_lea.vmem %s1, 8
  %355 = vst [vmem:[%s354] sm:$0xff] %v353
  %s356 = scalar_lea.vmem %s0, 776
  %v357 = vld [vmem:[%s356] sm:$0xff]
  %s358 = scalar_lea.vmem %s1, 536
  %359 = vst [vmem:[%s358] sm:$0xff] %v357
  %s360 = scalar_lea.vmem %s0, 1304
  %v361 = vld [vmem:[%s360] sm:$0xff]
  %s362 = scalar_lea.vmem %s1, 1064
  %363 = vst [vmem:[%s362] sm:$0xff] %v361
  %s364 = scalar_lea.vmem %s0, 1832
  %v365 = vld [vmem:[%s364] sm:$0xff]
  %s366 = scalar_lea.vmem %s1, 1592
  %367 = vst [vmem:[%s366] sm:$0xff] %v365
  %s368 = scalar_lea.vmem %s0, 512
  %v369 = vld [vmem:[%s368] sm:$0xff]
  %s370 = scalar_lea.vmem %s1, 272
  %371 = vst [vmem:[%s370] sm:$0xff] %v369
  %s372 = scalar_lea.vmem %s0, 1040
  %v373 = vld [vmem:[%s372] sm:$0xff]
  %s374 = scalar_lea.vmem %s1, 800
  %375 = vst [vmem:[%s374] sm:$0xff] %v373
  %s376 = scalar_lea.vmem %s0, 1568
  %v377 = vld [vmem:[%s376] sm:$0xff]
  %s378 = scalar_lea.vmem %s1, 1328
  %379 = vst [vmem:[%s378] sm:$0xff] %v377
  %s380 = scalar_lea.vmem %s0, 2096
  %v381 = vld [vmem:[%s380] sm:$0xff]
  %s382 = scalar_lea.vmem %s1, 1856
  %383 = vst [vmem:[%s382] sm:$0xff] %v381
  %s384 = scalar_lea.vmem %s0, 224
  %v385 = vld [vmem:[%s384] sm:$0xff]
  %s386 = scalar_lea.vmem %s1, 32
  %387 = vst [vmem:[%s386] sm:$0xff] %v385
  %s388 = scalar_lea.vmem %s0, 752
  %v389 = vld [vmem:[%s388] sm:$0xff]
  %s390 = scalar_lea.vmem %s1, 560
  %391 = vst [vmem:[%s390] sm:$0xff] %v389
  %s392 = scalar_lea.vmem %s0, 1280
  %v393 = vld [vmem:[%s392] sm:$0xff]
  %s394 = scalar_lea.vmem %s1, 1088
  %395 = vst [vmem:[%s394] sm:$0xff] %v393
  %s396 = scalar_lea.vmem %s0, 1808
  %v397 = vld [vmem:[%s396] sm:$0xff]
  %s398 = scalar_lea.vmem %s1, 1616
  %399 = vst [vmem:[%s398] sm:$0xff] %v397
  %s400 = scalar_lea.vmem %s0, 488
  %v401 = vld [vmem:[%s400] sm:$0xff]
  %s402 = scalar_lea.vmem %s1, 296
  %403 = vst [vmem:[%s402] sm:$0xff] %v401
  %s404 = scalar_lea.vmem %s0, 1016
  %v405 = vld [vmem:[%s404] sm:$0xff]
  %s406 = scalar_lea.vmem %s1, 824
  %407 = vst [vmem:[%s406] sm:$0xff] %v405
  %s408 = scalar_lea.vmem %s0, 1544
  %v409 = vld [vmem:[%s408] sm:$0xff]
  %s410 = scalar_lea.vmem %s1, 1352
  %411 = vst [vmem:[%s410] sm:$0xff] %v409
  %s412 = scalar_lea.vmem %s0, 2072
  %v413 = vld [vmem:[%s412] sm:$0xff]
  %s414 = scalar_lea.vmem %s1, 1880
  %415 = vst [vmem:[%s414] sm:$0xff] %v413
  %s416 = scalar_lea.vmem %s0, 200
  %v417 = vld [vmem:[%s416] sm:$0xff]
  %s418 = scalar_lea.vmem %s1, 56
  %419 = vst [vmem:[%s418] sm:$0xff] %v417
  %s420 = scalar_lea.vmem %s0, 728
  %v421 = vld [vmem:[%s420] sm:$0xff]
  %s422 = scalar_lea.vmem %s1, 584
  %423 = vst [vmem:[%s422] sm:$0xff] %v421
  %s424 = scalar_lea.vmem %s0, 1256
  %v425 = vld [vmem:[%s424] sm:$0xff]
  %s426 = scalar_lea.vmem %s1, 1112
  %427 = vst [vmem:[%s426] sm:$0xff] %v425
  %s428 = scalar_lea.vmem %s0, 1784
  %v429 = vld [vmem:[%s428] sm:$0xff]
  %s430 = scalar_lea.vmem %s1, 1640
  %431 = vst [vmem:[%s430] sm:$0xff] %v429
  %s432 = scalar_lea.vmem %s0, 464
  %v433 = vld [vmem:[%s432] sm:$0xff]
  %s434 = scalar_lea.vmem %s1, 320
  %435 = vst [vmem:[%s434] sm:$0xff] %v433
  %s436 = scalar_lea.vmem %s0, 992
  %v437 = vld [vmem:[%s436] sm:$0xff]
  %s438 = scalar_lea.vmem %s1, 848
  %439 = vst [vmem:[%s438] sm:$0xff] %v437
  %s440 = scalar_lea.vmem %s0, 1520
  %v441 = vld [vmem:[%s440] sm:$0xff]
  %s442 = scalar_lea.vmem %s1, 1376
  %443 = vst [vmem:[%s442] sm:$0xff] %v441
  %s444 = scalar_lea.vmem %s0, 2048
  %v445 = vld [vmem:[%s444] sm:$0xff]
  %s446 = scalar_lea.vmem %s1, 1904
  %447 = vst [vmem:[%s446] sm:$0xff] %v445
  %s448 = scalar_lea.vmem %s0, 176
  %v449 = vld [vmem:[%s448] sm:$0xff]
  %s450 = scalar_lea.vmem %s1, 80
  %451 = vst [vmem:[%s450] sm:$0xff] %v449
  %s452 = scalar_lea.vmem %s0, 704
  %v453 = vld [vmem:[%s452] sm:$0xff]
  %s454 = scalar_lea.vmem %s1, 608
  %455 = vst [vmem:[%s454] sm:$0xff] %v453
  %s456 = scalar_lea.vmem %s0, 1232
  %v457 = vld [vmem:[%s456] sm:$0xff]
  %s458 = scalar_lea.vmem %s1, 1136
  %459 = vst [vmem:[%s458] sm:$0xff] %v457
  %s460 = scalar_lea.vmem %s0, 1760
  %v461 = vld [vmem:[%s460] sm:$0xff]
  %s462 = scalar_lea.vmem %s1, 1664
  %463 = vst [vmem:[%s462] sm:$0xff] %v461
  %s464 = scalar_lea.vmem %s0, 440
  %v465 = vld [vmem:[%s464] sm:$0xff]
  %s466 = scalar_lea.vmem %s1, 344
  %467 = vst [vmem:[%s466] sm:$0xff] %v465
  %s468 = scalar_lea.vmem %s0, 968
  %v469 = vld [vmem:[%s468] sm:$0xff]
  %s470 = scalar_lea.vmem %s1, 872
  %471 = vst [vmem:[%s470] sm:$0xff] %v469
  %s472 = scalar_lea.vmem %s0, 1496
  %v473 = vld [vmem:[%s472] sm:$0xff]
  %s474 = scalar_lea.vmem %s1, 1400
  %475 = vst [vmem:[%s474] sm:$0xff] %v473
  %s476 = scalar_lea.vmem %s0, 2024
  %v477 = vld [vmem:[%s476] sm:$0xff]
  %s478 = scalar_lea.vmem %s1, 1928
  %479 = vst [vmem:[%s478] sm:$0xff] %v477
  %s480 = scalar_lea.vmem %s0, 152
  %v481 = vld [vmem:[%s480] sm:$0xff]
  %s482 = scalar_lea.vmem %s1, 104
  %483 = vst [vmem:[%s482] sm:$0xff] %v481
  %s484 = scalar_lea.vmem %s0, 680
  %v485 = vld [vmem:[%s484] sm:$0xff]
  %s486 = scalar_lea.vmem %s1, 632
  %487 = vst [vmem:[%s486] sm:$0xff] %v485
  %s488 = scalar_lea.vmem %s0, 1208
  %v489 = vld [vmem:[%s488] sm:$0xff]
  %s490 = scalar_lea.vmem %s1, 1160
  %491 = vst [vmem:[%s490] sm:$0xff] %v489
  %s492 = scalar_lea.vmem %s0, 1736
  %v493 = vld [vmem:[%s492] sm:$0xff]
  %s494 = scalar_lea.vmem %s1, 1688
  %495 = vst [vmem:[%s494] sm:$0xff] %v493
  %s496 = scalar_lea.vmem %s0, 416
  %v497 = vld [vmem:[%s496] sm:$0xff]
  %s498 = scalar_lea.vmem %s1, 368
  %499 = vst [vmem:[%s498] sm:$0xff] %v497
  %s500 = scalar_lea.vmem %s0, 944
  %v501 = vld [vmem:[%s500] sm:$0xff]
  %s502 = scalar_lea.vmem %s1, 896
  %503 = vst [vmem:[%s502] sm:$0xff] %v501
  %s504 = scalar_lea.vmem %s0, 1472
  %v505 = vld [vmem:[%s504] sm:$0xff]
  %s506 = scalar_lea.vmem %s1, 1424
  %507 = vst [vmem:[%s506] sm:$0xff] %v505
  %s508 = scalar_lea.vmem %s0, 2000
  %v509 = vld [vmem:[%s508] sm:$0xff]
  %s510 = scalar_lea.vmem %s1, 1952
  %511 = vst [vmem:[%s510] sm:$0xff] %v509
  %s512 = scalar_lea.vmem %s0, 128
  %v513 = vld [vmem:[%s512] sm:$0xff]
  %s514 = scalar_lea.vmem %s1, 128
  %515 = vst [vmem:[%s514] sm:$0xff] %v513
  %s516 = scalar_lea.vmem %s0, 656
  %v517 = vld [vmem:[%s516] sm:$0xff]
  %s518 = scalar_lea.vmem %s1, 656
  %519 = vst [vmem:[%s518] sm:$0xff] %v517
  %s520 = scalar_lea.vmem %s0, 1184
  %v521 = vld [vmem:[%s520] sm:$0xff]
  %s522 = scalar_lea.vmem %s1, 1184
  %523 = vst [vmem:[%s522] sm:$0xff] %v521
  %s524 = scalar_lea.vmem %s0, 1712
  %v525 = vld [vmem:[%s524] sm:$0xff]
  %s526 = scalar_lea.vmem %s1, 1712
  %527 = vst [vmem:[%s526] sm:$0xff] %v525
  %s528 = scalar_lea.vmem %s0, 392
  %v529 = vld [vmem:[%s528] sm:$0xff]
  %s530 = scalar_lea.vmem %s1, 392
  %531 = vst [vmem:[%s530] sm:$0xff] %v529
  %s532 = scalar_lea.vmem %s0, 920
  %v533 = vld [vmem:[%s532] sm:$0xff]
  %s534 = scalar_lea.vmem %s1, 920
  %535 = vst [vmem:[%s534] sm:$0xff] %v533
  %s536 = scalar_lea.vmem %s0, 1448
  %v537 = vld [vmem:[%s536] sm:$0xff]
  %s538 = scalar_lea.vmem %s1, 1448
  %539 = vst [vmem:[%s538] sm:$0xff] %v537
  %s540 = scalar_lea.vmem %s0, 1976
  %v541 = vld [vmem:[%s540] sm:$0xff]
  %s542 = scalar_lea.vmem %s1, 1976
  %543 = vst [vmem:[%s542] sm:$0xff] %v541
  %s544 = scalar_lea.vmem %s0, 104
  %v545 = vld [vmem:[%s544] sm:$0xff]
  %s546 = scalar_lea.vmem %s1, 152
  %547 = vst [vmem:[%s546] sm:$0xff] %v545
  %s548 = scalar_lea.vmem %s0, 632
  %v549 = vld [vmem:[%s548] sm:$0xff]
  %s550 = scalar_lea.vmem %s1, 680
  %551 = vst [vmem:[%s550] sm:$0xff] %v549
  %s552 = scalar_lea.vmem %s0, 1160
  %v553 = vld [vmem:[%s552] sm:$0xff]
  %s554 = scalar_lea.vmem %s1, 1208
  %555 = vst [vmem:[%s554] sm:$0xff] %v553
  %s556 = scalar_lea.vmem %s0, 1688
  %v557 = vld [vmem:[%s556] sm:$0xff]
  %s558 = scalar_lea.vmem %s1, 1736
  %559 = vst [vmem:[%s558] sm:$0xff] %v557
  %s560 = scalar_lea.vmem %s0, 368
  %v561 = vld [vmem:[%s560] sm:$0xff]
  %s562 = scalar_lea.vmem %s1, 416
  %563 = vst [vmem:[%s562] sm:$0xff] %v561
  %s564 = scalar_lea.vmem %s0, 896
  %v565 = vld [vmem:[%s564] sm:$0xff]
  %s566 = scalar_lea.vmem %s1, 944
  %567 = vst [vmem:[%s566] sm:$0xff] %v565
  %s568 = scalar_lea.vmem %s0, 1424
  %v569 = vld [vmem:[%s568] sm:$0xff]
  %s570 = scalar_lea.vmem %s1, 1472
  %571 = vst [vmem:[%s570] sm:$0xff] %v569
  %s572 = scalar_lea.vmem %s0, 1952
  %v573 = vld [vmem:[%s572] sm:$0xff]
  %s574 = scalar_lea.vmem %s1, 2000
  %575 = vst [vmem:[%s574] sm:$0xff] %v573
  %s576 = scalar_lea.vmem %s0, 80
  %v577 = vld [vmem:[%s576] sm:$0xff]
  %s578 = scalar_lea.vmem %s1, 176
  %579 = vst [vmem:[%s578] sm:$0xff] %v577
  %s580 = scalar_lea.vmem %s0, 608
  %v581 = vld [vmem:[%s580] sm:$0xff]
  %s582 = scalar_lea.vmem %s1, 704
  %583 = vst [vmem:[%s582] sm:$0xff] %v581
  %s584 = scalar_lea.vmem %s0, 1136
  %v585 = vld [vmem:[%s584] sm:$0xff]
  %s586 = scalar_lea.vmem %s1, 1232
  %587 = vst [vmem:[%s586] sm:$0xff] %v585
  %s588 = scalar_lea.vmem %s0, 1664
  %v589 = vld [vmem:[%s588] sm:$0xff]
  %s590 = scalar_lea.vmem %s1, 1760
  %591 = vst [vmem:[%s590] sm:$0xff] %v589
  %s592 = scalar_lea.vmem %s0, 344
  %v593 = vld [vmem:[%s592] sm:$0xff]
  %s594 = scalar_lea.vmem %s1, 440
  %595 = vst [vmem:[%s594] sm:$0xff] %v593
  %s596 = scalar_lea.vmem %s0, 872
  %v597 = vld [vmem:[%s596] sm:$0xff]
  %s598 = scalar_lea.vmem %s1, 968
  %599 = vst [vmem:[%s598] sm:$0xff] %v597
  %s600 = scalar_lea.vmem %s0, 1400
  %v601 = vld [vmem:[%s600] sm:$0xff]
  %s602 = scalar_lea.vmem %s1, 1496
  %603 = vst [vmem:[%s602] sm:$0xff] %v601
  %s604 = scalar_lea.vmem %s0, 1928
  %v605 = vld [vmem:[%s604] sm:$0xff]
  %s606 = scalar_lea.vmem %s1, 2024
  %607 = vst [vmem:[%s606] sm:$0xff] %v605
  %s608 = scalar_lea.vmem %s0, 56
  %v609 = vld [vmem:[%s608] sm:$0xff]
  %s610 = scalar_lea.vmem %s1, 200
  %611 = vst [vmem:[%s610] sm:$0xff] %v609
  %s612 = scalar_lea.vmem %s0, 584
  %v613 = vld [vmem:[%s612] sm:$0xff]
  %s614 = scalar_lea.vmem %s1, 728
  %615 = vst [vmem:[%s614] sm:$0xff] %v613
  %s616 = scalar_lea.vmem %s0, 1112
  %v617 = vld [vmem:[%s616] sm:$0xff]
  %s618 = scalar_lea.vmem %s1, 1256
  %619 = vst [vmem:[%s618] sm:$0xff] %v617
  %s620 = scalar_lea.vmem %s0, 1640
  %v621 = vld [vmem:[%s620] sm:$0xff]
  %s622 = scalar_lea.vmem %s1, 1784
  %623 = vst [vmem:[%s622] sm:$0xff] %v621
  %s624 = scalar_lea.vmem %s0, 320
  %v625 = vld [vmem:[%s624] sm:$0xff]
  %s626 = scalar_lea.vmem %s1, 464
  %627 = vst [vmem:[%s626] sm:$0xff] %v625
  %s628 = scalar_lea.vmem %s0, 848
  %v629 = vld [vmem:[%s628] sm:$0xff]
  %s630 = scalar_lea.vmem %s1, 992
  %631 = vst [vmem:[%s630] sm:$0xff] %v629
  %s632 = scalar_lea.vmem %s0, 1376
  %v633 = vld [vmem:[%s632] sm:$0xff]
  %s634 = scalar_lea.vmem %s1, 1520
  %635 = vst [vmem:[%s634] sm:$0xff] %v633
  %s636 = scalar_lea.vmem %s0, 1904
  %v637 = vld [vmem:[%s636] sm:$0xff]
  %s638 = scalar_lea.vmem %s1, 2048
  %639 = vst [vmem:[%s638] sm:$0xff] %v637
  %s640 = scalar_lea.vmem %s0, 32
  %v641 = vld [vmem:[%s640] sm:$0xff]
  %s642 = scalar_lea.vmem %s1, 224
  %643 = vst [vmem:[%s642] sm:$0xff] %v641
  %s644 = scalar_lea.vmem %s0, 560
  %v645 = vld [vmem:[%s644] sm:$0xff]
  %s646 = scalar_lea.vmem %s1, 752
  %647 = vst [vmem:[%s646] sm:$0xff] %v645
  %s648 = scalar_lea.vmem %s0, 1088
  %v649 = vld [vmem:[%s648] sm:$0xff]
  %s650 = scalar_lea.vmem %s1, 1280
  %651 = vst [vmem:[%s650] sm:$0xff] %v649
  %s652 = scalar_lea.vmem %s0, 1616
  %v653 = vld [vmem:[%s652] sm:$0xff]
  %s654 = scalar_lea.vmem %s1, 1808
  %655 = vst [vmem:[%s654] sm:$0xff] %v653
  %s656 = scalar_lea.vmem %s0, 296
  %v657 = vld [vmem:[%s656] sm:$0xff]
  %s658 = scalar_lea.vmem %s1, 488
  %659 = vst [vmem:[%s658] sm:$0xff] %v657
  %s660 = scalar_lea.vmem %s0, 824
  %v661 = vld [vmem:[%s660] sm:$0xff]
  %s662 = scalar_lea.vmem %s1, 1016
  %663 = vst [vmem:[%s662] sm:$0xff] %v661
  %s664 = scalar_lea.vmem %s0, 1352
  %v665 = vld [vmem:[%s664] sm:$0xff]
  %s666 = scalar_lea.vmem %s1, 1544
  %667 = vst [vmem:[%s666] sm:$0xff] %v665
  %s668 = scalar_lea.vmem %s0, 1880
  %v669 = vld [vmem:[%s668] sm:$0xff]
  %s670 = scalar_lea.vmem %s1, 2072
  %671 = vst [vmem:[%s670] sm:$0xff] %v669
  %s672 = scalar_lea.vmem %s0, 8
  %v673 = vld [vmem:[%s672] sm:$0xff]
  %s674 = scalar_lea.vmem %s1, 248
  %675 = vst [vmem:[%s674] sm:$0xff] %v673
  %s676 = scalar_lea.vmem %s0, 536
  %v677 = vld [vmem:[%s676] sm:$0xff]
  %s678 = scalar_lea.vmem %s1, 776
  %679 = vst [vmem:[%s678] sm:$0xff] %v677
  %s680 = scalar_lea.vmem %s0, 1064
  %v681 = vld [vmem:[%s680] sm:$0xff]
  %s682 = scalar_lea.vmem %s1, 1304
  %683 = vst [vmem:[%s682] sm:$0xff] %v681
  %s684 = scalar_lea.vmem %s0, 1592
  %v685 = vld [vmem:[%s684] sm:$0xff]
  %s686 = scalar_lea.vmem %s1, 1832
  %687 = vst [vmem:[%s686] sm:$0xff] %v685
  %s688 = scalar_lea.vmem %s0, 272
  %v689 = vld [vmem:[%s688] sm:$0xff]
  %s690 = scalar_lea.vmem %s1, 512
  %691 = vst [vmem:[%s690] sm:$0xff] %v689
  %s692 = scalar_lea.vmem %s0, 800
  %v693 = vld [vmem:[%s692] sm:$0xff]
  %s694 = scalar_lea.vmem %s1, 1040
  %695 = vst [vmem:[%s694] sm:$0xff] %v693
  %s696 = scalar_lea.vmem %s0, 1328
  %v697 = vld [vmem:[%s696] sm:$0xff]
  %s698 = scalar_lea.vmem %s1, 1568
  %699 = vst [vmem:[%s698] sm:$0xff] %v697
  %s700 = scalar_lea.vmem %s0, 1856
  %v701 = vld [vmem:[%s700] sm:$0xff]
  %s702 = scalar_lea.vmem %s1, 2096
  %703 = vst [vmem:[%s702] sm:$0xff] %v701
  %s704 = scalar_lea.vmem %s0, 256
  %v705 = vld [vmem:[%s704] sm:$0xff]
  %s706 = scalar_lea.vmem %s1, 16
  %707 = vst [vmem:[%s706] sm:$0xff] %v705
  %s708 = scalar_lea.vmem %s0, 784
  %v709 = vld [vmem:[%s708] sm:$0xff]
  %s710 = scalar_lea.vmem %s1, 544
  %711 = vst [vmem:[%s710] sm:$0xff] %v709
  %s712 = scalar_lea.vmem %s0, 1312
  %v713 = vld [vmem:[%s712] sm:$0xff]
  %s714 = scalar_lea.vmem %s1, 1072
  %715 = vst [vmem:[%s714] sm:$0xff] %v713
  %s716 = scalar_lea.vmem %s0, 1840
  %v717 = vld [vmem:[%s716] sm:$0xff]
  %s718 = scalar_lea.vmem %s1, 1600
  %719 = vst [vmem:[%s718] sm:$0xff] %v717
  %s720 = scalar_lea.vmem %s0, 520
  %v721 = vld [vmem:[%s720] sm:$0xff]
  %s722 = scalar_lea.vmem %s1, 280
  %723 = vst [vmem:[%s722] sm:$0xff] %v721
  %s724 = scalar_lea.vmem %s0, 1048
  %v725 = vld [vmem:[%s724] sm:$0xff]
  %s726 = scalar_lea.vmem %s1, 808
  %727 = vst [vmem:[%s726] sm:$0xff] %v725
  %s728 = scalar_lea.vmem %s0, 1576
  %v729 = vld [vmem:[%s728] sm:$0xff]
  %s730 = scalar_lea.vmem %s1, 1336
  %731 = vst [vmem:[%s730] sm:$0xff] %v729
  %s732 = scalar_lea.vmem %s0, 2104
  %v733 = vld [vmem:[%s732] sm:$0xff]
  %s734 = scalar_lea.vmem %s1, 1864
  %735 = vst [vmem:[%s734] sm:$0xff] %v733
  %s736 = scalar_lea.vmem %s0, 232
  %v737 = vld [vmem:[%s736] sm:$0xff]
  %s738 = scalar_lea.vmem %s1, 40
  %739 = vst [vmem:[%s738] sm:$0xff] %v737
  %s740 = scalar_lea.vmem %s0, 760
  %v741 = vld [vmem:[%s740] sm:$0xff]
  %s742 = scalar_lea.vmem %s1, 568
  %743 = vst [vmem:[%s742] sm:$0xff] %v741
  %s744 = scalar_lea.vmem %s0, 1288
  %v745 = vld [vmem:[%s744] sm:$0xff]
  %s746 = scalar_lea.vmem %s1, 1096
  %747 = vst [vmem:[%s746] sm:$0xff] %v745
  %s748 = scalar_lea.vmem %s0, 1816
  %v749 = vld [vmem:[%s748] sm:$0xff]
  %s750 = scalar_lea.vmem %s1, 1624
  %751 = vst [vmem:[%s750] sm:$0xff] %v749
  %s752 = scalar_lea.vmem %s0, 496
  %v753 = vld [vmem:[%s752] sm:$0xff]
  %s754 = scalar_lea.vmem %s1, 304
  %755 = vst [vmem:[%s754] sm:$0xff] %v753
  %s756 = scalar_lea.vmem %s0, 1024
  %v757 = vld [vmem:[%s756] sm:$0xff]
  %s758 = scalar_lea.vmem %s1, 832
  %759 = vst [vmem:[%s758] sm:$0xff] %v757
  %s760 = scalar_lea.vmem %s0, 1552
  %v761 = vld [vmem:[%s760] sm:$0xff]
  %s762 = scalar_lea.vmem %s1, 1360
  %763 = vst [vmem:[%s762] sm:$0xff] %v761
  %s764 = scalar_lea.vmem %s0, 2080
  %v765 = vld [vmem:[%s764] sm:$0xff]
  %s766 = scalar_lea.vmem %s1, 1888
  %767 = vst [vmem:[%s766] sm:$0xff] %v765
  %s768 = scalar_lea.vmem %s0, 208
  %v769 = vld [vmem:[%s768] sm:$0xff]
  %s770 = scalar_lea.vmem %s1, 64
  %771 = vst [vmem:[%s770] sm:$0xff] %v769
  %s772 = scalar_lea.vmem %s0, 736
  %v773 = vld [vmem:[%s772] sm:$0xff]
  %s774 = scalar_lea.vmem %s1, 592
  %775 = vst [vmem:[%s774] sm:$0xff] %v773
  %s776 = scalar_lea.vmem %s0, 1264
  %v777 = vld [vmem:[%s776] sm:$0xff]
  %s778 = scalar_lea.vmem %s1, 1120
  %779 = vst [vmem:[%s778] sm:$0xff] %v777
  %s780 = scalar_lea.vmem %s0, 1792
  %v781 = vld [vmem:[%s780] sm:$0xff]
  %s782 = scalar_lea.vmem %s1, 1648
  %783 = vst [vmem:[%s782] sm:$0xff] %v781
  %s784 = scalar_lea.vmem %s0, 472
  %v785 = vld [vmem:[%s784] sm:$0xff]
  %s786 = scalar_lea.vmem %s1, 328
  %787 = vst [vmem:[%s786] sm:$0xff] %v785
  %s788 = scalar_lea.vmem %s0, 1000
  %v789 = vld [vmem:[%s788] sm:$0xff]
  %s790 = scalar_lea.vmem %s1, 856
  %791 = vst [vmem:[%s790] sm:$0xff] %v789
  %s792 = scalar_lea.vmem %s0, 1528
  %v793 = vld [vmem:[%s792] sm:$0xff]
  %s794 = scalar_lea.vmem %s1, 1384
  %795 = vst [vmem:[%s794] sm:$0xff] %v793
  %s796 = scalar_lea.vmem %s0, 2056
  %v797 = vld [vmem:[%s796] sm:$0xff]
  %s798 = scalar_lea.vmem %s1, 1912
  %799 = vst [vmem:[%s798] sm:$0xff] %v797
  %s800 = scalar_lea.vmem %s0, 184
  %v801 = vld [vmem:[%s800] sm:$0xff]
  %s802 = scalar_lea.vmem %s1, 88
  %803 = vst [vmem:[%s802] sm:$0xff] %v801
  %s804 = scalar_lea.vmem %s0, 712
  %v805 = vld [vmem:[%s804] sm:$0xff]
  %s806 = scalar_lea.vmem %s1, 616
  %807 = vst [vmem:[%s806] sm:$0xff] %v805
  %s808 = scalar_lea.vmem %s0, 1240
  %v809 = vld [vmem:[%s808] sm:$0xff]
  %s810 = scalar_lea.vmem %s1, 1144
  %811 = vst [vmem:[%s810] sm:$0xff] %v809
  %s812 = scalar_lea.vmem %s0, 1768
  %v813 = vld [vmem:[%s812] sm:$0xff]
  %s814 = scalar_lea.vmem %s1, 1672
  %815 = vst [vmem:[%s814] sm:$0xff] %v813
  %s816 = scalar_lea.vmem %s0, 448
  %v817 = vld [vmem:[%s816] sm:$0xff]
  %s818 = scalar_lea.vmem %s1, 352
  %819 = vst [vmem:[%s818] sm:$0xff] %v817
  %s820 = scalar_lea.vmem %s0, 976
  %v821 = vld [vmem:[%s820] sm:$0xff]
  %s822 = scalar_lea.vmem %s1, 880
  %823 = vst [vmem:[%s822] sm:$0xff] %v821
  %s824 = scalar_lea.vmem %s0, 1504
  %v825 = vld [vmem:[%s824] sm:$0xff]
  %s826 = scalar_lea.vmem %s1, 1408
  %827 = vst [vmem:[%s826] sm:$0xff] %v825
  %s828 = scalar_lea.vmem %s0, 2032
  %v829 = vld [vmem:[%s828] sm:$0xff]
  %s830 = scalar_lea.vmem %s1, 1936
  %831 = vst [vmem:[%s830] sm:$0xff] %v829
  %s832 = scalar_lea.vmem %s0, 160
  %v833 = vld [vmem:[%s832] sm:$0xff]
  %s834 = scalar_lea.vmem %s1, 112
  %835 = vst [vmem:[%s834] sm:$0xff] %v833
  %s836 = scalar_lea.vmem %s0, 688
  %v837 = vld [vmem:[%s836] sm:$0xff]
  %s838 = scalar_lea.vmem %s1, 640
  %839 = vst [vmem:[%s838] sm:$0xff] %v837
  %s840 = scalar_lea.vmem %s0, 1216
  %v841 = vld [vmem:[%s840] sm:$0xff]
  %s842 = scalar_lea.vmem %s1, 1168
  %843 = vst [vmem:[%s842] sm:$0xff] %v841
  %s844 = scalar_lea.vmem %s0, 1744
  %v845 = vld [vmem:[%s844] sm:$0xff]
  %s846 = scalar_lea.vmem %s1, 1696
  %847 = vst [vmem:[%s846] sm:$0xff] %v845
  %s848 = scalar_lea.vmem %s0, 424
  %v849 = vld [vmem:[%s848] sm:$0xff]
  %s850 = scalar_lea.vmem %s1, 376
  %851 = vst [vmem:[%s850] sm:$0xff] %v849
  %s852 = scalar_lea.vmem %s0, 952
  %v853 = vld [vmem:[%s852] sm:$0xff]
  %s854 = scalar_lea.vmem %s1, 904
  %855 = vst [vmem:[%s854] sm:$0xff] %v853
  %s856 = scalar_lea.vmem %s0, 1480
  %v857 = vld [vmem:[%s856] sm:$0xff]
  %s858 = scalar_lea.vmem %s1, 1432
  %859 = vst [vmem:[%s858] sm:$0xff] %v857
  %s860 = scalar_lea.vmem %s0, 2008
  %v861 = vld [vmem:[%s860] sm:$0xff]
  %s862 = scalar_lea.vmem %s1, 1960
  %863 = vst [vmem:[%s862] sm:$0xff] %v861
  %s864 = scalar_lea.vmem %s0, 136
  %v865 = vld [vmem:[%s864] sm:$0xff]
  %s866 = scalar_lea.vmem %s1, 136
  %867 = vst [vmem:[%s866] sm:$0xff] %v865
  %s868 = scalar_lea.vmem %s0, 664
  %v869 = vld [vmem:[%s868] sm:$0xff]
  %s870 = scalar_lea.vmem %s1, 664
  %871 = vst [vmem:[%s870] sm:$0xff] %v869
  %s872 = scalar_lea.vmem %s0, 1192
  %v873 = vld [vmem:[%s872] sm:$0xff]
  %s874 = scalar_lea.vmem %s1, 1192
  %875 = vst [vmem:[%s874] sm:$0xff] %v873
  %s876 = scalar_lea.vmem %s0, 1720
  %v877 = vld [vmem:[%s876] sm:$0xff]
  %s878 = scalar_lea.vmem %s1, 1720
  %879 = vst [vmem:[%s878] sm:$0xff] %v877
  %s880 = scalar_lea.vmem %s0, 400
  %v881 = vld [vmem:[%s880] sm:$0xff]
  %s882 = scalar_lea.vmem %s1, 400
  %883 = vst [vmem:[%s882] sm:$0xff] %v881
  %s884 = scalar_lea.vmem %s0, 928
  %v885 = vld [vmem:[%s884] sm:$0xff]
  %s886 = scalar_lea.vmem %s1, 928
  %887 = vst [vmem:[%s886] sm:$0xff] %v885
  %s888 = scalar_lea.vmem %s0, 1456
  %v889 = vld [vmem:[%s888] sm:$0xff]
  %s890 = scalar_lea.vmem %s1, 1456
  %891 = vst [vmem:[%s890] sm:$0xff] %v889
  %s892 = scalar_lea.vmem %s0, 1984
  %v893 = vld [vmem:[%s892] sm:$0xff]
  %s894 = scalar_lea.vmem %s1, 1984
  %895 = vst [vmem:[%s894] sm:$0xff] %v893
  %s896 = scalar_lea.vmem %s0, 112
  %v897 = vld [vmem:[%s896] sm:$0xff]
  %s898 = scalar_lea.vmem %s1, 160
  %899 = vst [vmem:[%s898] sm:$0xff] %v897
  %s900 = scalar_lea.vmem %s0, 640
  %v901 = vld [vmem:[%s900] sm:$0xff]
  %s902 = scalar_lea.vmem %s1, 688
  %903 = vst [vmem:[%s902] sm:$0xff] %v901
  %s904 = scalar_lea.vmem %s0, 1168
  %v905 = vld [vmem:[%s904] sm:$0xff]
  %s906 = scalar_lea.vmem %s1, 1216
  %907 = vst [vmem:[%s906] sm:$0xff] %v905
  %s908 = scalar_lea.vmem %s0, 1696
  %v909 = vld [vmem:[%s908] sm:$0xff]
  %s910 = scalar_lea.vmem %s1, 1744
  %911 = vst [vmem:[%s910] sm:$0xff] %v909
  %s912 = scalar_lea.vmem %s0, 376
  %v913 = vld [vmem:[%s912] sm:$0xff]
  %s914 = scalar_lea.vmem %s1, 424
  %915 = vst [vmem:[%s914] sm:$0xff] %v913
  %s916 = scalar_lea.vmem %s0, 904
  %v917 = vld [vmem:[%s916] sm:$0xff]
  %s918 = scalar_lea.vmem %s1, 952
  %919 = vst [vmem:[%s918] sm:$0xff] %v917
  %s920 = scalar_lea.vmem %s0, 1432
  %v921 = vld [vmem:[%s920] sm:$0xff]
  %s922 = scalar_lea.vmem %s1, 1480
  %923 = vst [vmem:[%s922] sm:$0xff] %v921
  %s924 = scalar_lea.vmem %s0, 1960
  %v925 = vld [vmem:[%s924] sm:$0xff]
  %s926 = scalar_lea.vmem %s1, 2008
  %927 = vst [vmem:[%s926] sm:$0xff] %v925
  %s928 = scalar_lea.vmem %s0, 88
  %v929 = vld [vmem:[%s928] sm:$0xff]
  %s930 = scalar_lea.vmem %s1, 184
  %931 = vst [vmem:[%s930] sm:$0xff] %v929
  %s932 = scalar_lea.vmem %s0, 616
  %v933 = vld [vmem:[%s932] sm:$0xff]
  %s934 = scalar_lea.vmem %s1, 712
  %935 = vst [vmem:[%s934] sm:$0xff] %v933
  %s936 = scalar_lea.vmem %s0, 1144
  %v937 = vld [vmem:[%s936] sm:$0xff]
  %s938 = scalar_lea.vmem %s1, 1240
  %939 = vst [vmem:[%s938] sm:$0xff] %v937
  %s940 = scalar_lea.vmem %s0, 1672
  %v941 = vld [vmem:[%s940] sm:$0xff]
  %s942 = scalar_lea.vmem %s1, 1768
  %943 = vst [vmem:[%s942] sm:$0xff] %v941
  %s944 = scalar_lea.vmem %s0, 352
  %v945 = vld [vmem:[%s944] sm:$0xff]
  %s946 = scalar_lea.vmem %s1, 448
  %947 = vst [vmem:[%s946] sm:$0xff] %v945
  %s948 = scalar_lea.vmem %s0, 880
  %v949 = vld [vmem:[%s948] sm:$0xff]
  %s950 = scalar_lea.vmem %s1, 976
  %951 = vst [vmem:[%s950] sm:$0xff] %v949
  %s952 = scalar_lea.vmem %s0, 1408
  %v953 = vld [vmem:[%s952] sm:$0xff]
  %s954 = scalar_lea.vmem %s1, 1504
  %955 = vst [vmem:[%s954] sm:$0xff] %v953
  %s956 = scalar_lea.vmem %s0, 1936
  %v957 = vld [vmem:[%s956] sm:$0xff]
  %s958 = scalar_lea.vmem %s1, 2032
  %959 = vst [vmem:[%s958] sm:$0xff] %v957
  %s960 = scalar_lea.vmem %s0, 64
  %v961 = vld [vmem:[%s960] sm:$0xff]
  %s962 = scalar_lea.vmem %s1, 208
  %963 = vst [vmem:[%s962] sm:$0xff] %v961
  %s964 = scalar_lea.vmem %s0, 592
  %v965 = vld [vmem:[%s964] sm:$0xff]
  %s966 = scalar_lea.vmem %s1, 736
  %967 = vst [vmem:[%s966] sm:$0xff] %v965
  %s968 = scalar_lea.vmem %s0, 1120
  %v969 = vld [vmem:[%s968] sm:$0xff]
  %s970 = scalar_lea.vmem %s1, 1264
  %971 = vst [vmem:[%s970] sm:$0xff] %v969
  %s972 = scalar_lea.vmem %s0, 1648
  %v973 = vld [vmem:[%s972] sm:$0xff]
  %s974 = scalar_lea.vmem %s1, 1792
  %975 = vst [vmem:[%s974] sm:$0xff] %v973
  %s976 = scalar_lea.vmem %s0, 328
  %v977 = vld [vmem:[%s976] sm:$0xff]
  %s978 = scalar_lea.vmem %s1, 472
  %979 = vst [vmem:[%s978] sm:$0xff] %v977
  %s980 = scalar_lea.vmem %s0, 856
  %v981 = vld [vmem:[%s980] sm:$0xff]
  %s982 = scalar_lea.vmem %s1, 1000
  %983 = vst [vmem:[%s982] sm:$0xff] %v981
  %s984 = scalar_lea.vmem %s0, 1384
  %v985 = vld [vmem:[%s984] sm:$0xff]
  %s986 = scalar_lea.vmem %s1, 1528
  %987 = vst [vmem:[%s986] sm:$0xff] %v985
  %s988 = scalar_lea.vmem %s0, 1912
  %v989 = vld [vmem:[%s988] sm:$0xff]
  %s990 = scalar_lea.vmem %s1, 2056
  %991 = vst [vmem:[%s990] sm:$0xff] %v989
  %s992 = scalar_lea.vmem %s0, 40
  %v993 = vld [vmem:[%s992] sm:$0xff]
  %s994 = scalar_lea.vmem %s1, 232
  %995 = vst [vmem:[%s994] sm:$0xff] %v993
  %s996 = scalar_lea.vmem %s0, 568
  %v997 = vld [vmem:[%s996] sm:$0xff]
  %s998 = scalar_lea.vmem %s1, 760
  %999 = vst [vmem:[%s998] sm:$0xff] %v997
  %s1000 = scalar_lea.vmem %s0, 1096
  %v1001 = vld [vmem:[%s1000] sm:$0xff]
  %s1002 = scalar_lea.vmem %s1, 1288
  %1003 = vst [vmem:[%s1002] sm:$0xff] %v1001
  %s1004 = scalar_lea.vmem %s0, 1624
  %v1005 = vld [vmem:[%s1004] sm:$0xff]
  %s1006 = scalar_lea.vmem %s1, 1816
  %1007 = vst [vmem:[%s1006] sm:$0xff] %v1005
  %s1008 = scalar_lea.vmem %s0, 304
  %v1009 = vld [vmem:[%s1008] sm:$0xff]
  %s1010 = scalar_lea.vmem %s1, 496
  %1011 = vst [vmem:[%s1010] sm:$0xff] %v1009
  %s1012 = scalar_lea.vmem %s0, 832
  %v1013 = vld [vmem:[%s1012] sm:$0xff]
  %s1014 = scalar_lea.vmem %s1, 1024
  %1015 = vst [vmem:[%s1014] sm:$0xff] %v1013
  %s1016 = scalar_lea.vmem %s0, 1360
  %v1017 = vld [vmem:[%s1016] sm:$0xff]
  %s1018 = scalar_lea.vmem %s1, 1552
  %1019 = vst [vmem:[%s1018] sm:$0xff] %v1017
  %s1020 = scalar_lea.vmem %s0, 1888
  %v1021 = vld [vmem:[%s1020] sm:$0xff]
  %s1022 = scalar_lea.vmem %s1, 2080
  %1023 = vst [vmem:[%s1022] sm:$0xff] %v1021
  %s1024 = scalar_lea.vmem %s0, 16
  %v1025 = vld [vmem:[%s1024] sm:$0xff]
  %s1026 = scalar_lea.vmem %s1, 256
  %1027 = vst [vmem:[%s1026] sm:$0xff] %v1025
  %s1028 = scalar_lea.vmem %s0, 544
  %v1029 = vld [vmem:[%s1028] sm:$0xff]
  %s1030 = scalar_lea.vmem %s1, 784
  %1031 = vst [vmem:[%s1030] sm:$0xff] %v1029
  %s1032 = scalar_lea.vmem %s0, 1072
  %v1033 = vld [vmem:[%s1032] sm:$0xff]
  %s1034 = scalar_lea.vmem %s1, 1312
  %1035 = vst [vmem:[%s1034] sm:$0xff] %v1033
  %s1036 = scalar_lea.vmem %s0, 1600
  %v1037 = vld [vmem:[%s1036] sm:$0xff]
  %s1038 = scalar_lea.vmem %s1, 1840
  %1039 = vst [vmem:[%s1038] sm:$0xff] %v1037
  %s1040 = scalar_lea.vmem %s0, 280
  %v1041 = vld [vmem:[%s1040] sm:$0xff]
  %s1042 = scalar_lea.vmem %s1, 520
  %1043 = vst [vmem:[%s1042] sm:$0xff] %v1041
  %s1044 = scalar_lea.vmem %s0, 808
  %v1045 = vld [vmem:[%s1044] sm:$0xff]
  %s1046 = scalar_lea.vmem %s1, 1048
  %1047 = vst [vmem:[%s1046] sm:$0xff] %v1045
  %s1048 = scalar_lea.vmem %s0, 1336
  %v1049 = vld [vmem:[%s1048] sm:$0xff]
  %s1050 = scalar_lea.vmem %s1, 1576
  %1051 = vst [vmem:[%s1050] sm:$0xff] %v1049
  %s1052 = scalar_lea.vmem %s0, 1864
  %v1053 = vld [vmem:[%s1052] sm:$0xff]
  %s1054 = scalar_lea.vmem %s1, 2104
  %1055 = vst [vmem:[%s1054] sm:$0xff] %v1053

// kernel: dafno2d_forward.7
$region0: #{dafno2d_forward.7}
  #allocation0 [shape = 'u32[]', space=smem, size = 0x4, offset = 0x4, fixed_abs, tag = 'smem constant byte address 0x4 - core index']
  #allocation1 [shape = 'u32[72,128]{1,0:T(1,128)}', space=vmem, size = 0x9000, scoped, tag = 'internal scratch']
  #allocation2 [shape = 's32[1]{0}', space=sflag, size = 0x4, scoped, tag = 'scoped memory for dafno2d_forward.7']
  #allocation3 [shape = 's32[1]{0:T(128)S(6)}', space=smem, size = 0x200, scoped, tag = 'prefetched SMEM operand 0']
  %s0 = inlined_call_operand.<no memory space> [shape: s32[1], index: 0, kind: input, shape index: {}]
  %s1 = inlined_call_operand.vmem [shape: bf16[1152,32], index: 1, kind: input, shape index: {}]
  %s2 = inlined_call_operand.vmem [shape: f32[1152,32], index: 2, kind: input, shape index: {}]
  %s3 = inlined_call_operand.vmem [shape: f32[4,1152,32], index: 3, kind: input, shape index: {}]
  %s4 = inlined_call_operand.vmem [shape: f32[1152,1], index: 4, kind: input, shape index: {}]
  %s5 = inlined_call_operand.vmem [shape: f32[32,32], index: 5, kind: input, shape index: {}]
  %s6 = inlined_call_operand.vmem [shape: f32[1,32], index: 6, kind: input, shape index: {}]
  %s7 = inlined_call_operand.vmem [shape: bf16[1152,32], index: 7, kind: output, shape index: {}]
  %s8 = sld [smem:[#allocation0]]
  $region57: #{dafno2d_forward.7} parent=0
    _
  %s10 = ssub.s32 1, %s8
  %s11 = scalar_select 0, %s10, %s8
  %12 = sst [smem:[#allocation3]] %s0
  loop: start=0, step=1, limit=10
  $region2: #{dafno2d_forward.7} parent=0 // loop_pre_header
    _
  $region3: #{dafno2d_forward.7} parent=0 // loop_header
    %s14 = sphi 0, %s18
    %p15 = scmp.ge.s32.totalorder %s14, 10
    %s24 = sphi 0, %s26
    %s27 = sphi 0, %s24
    %s28 = sphi 0, %s27
    %s44 = sphi 0, %s28
    %s50 = sphi 0, %s52
    %s53 = sphi 0, %s50
    %s54 = sphi 0, %s53
    %s70 = sphi 0, %s54
    %s80 = sphi 0, %s82
    %s83 = sphi 0, %s80
    %s84 = sphi 0, %s83
    %s100 = sphi 0, %s84
    %s106 = sphi 0, %s108
    %s109 = sphi 0, %s106
    %s110 = sphi 0, %s109
    %s126 = sphi 0, %s110
    %s130 = sphi 0, %s130
    %s132 = sphi 0, %s130
    %s133 = sphi 0, %s132
    %s147 = sphi 0, %s133
    %s151 = sphi 0, %s151
    %s153 = sphi 0, %s151
    %s154 = sphi 0, %s153
    %s168 = sphi 0, %s154
    %s174 = sphi 0, %s176
    %s177 = sphi 0, %s174
    %s178 = sphi 0, %s177
    %s194 = sphi 0, %s178
  $region4: #{dafno2d_forward.7} parent=0 // loop_header_branch
    %17 = sbr.rel (%p15) target = $region8
  $region5: #{dafno2d_forward.7} parent=0 // loop_body
    %s19 = ssub.s32 %s14, 1
    %s20 = ssub.s32 %s14, 2
    %s21 = sadd.s32 %s14, 1
    %s22 = ssub.s32 %s14, %s21
    %p23 = scmp.eq.s32.totalorder %s22, 0
    %s25 = sadd.s32 %s24, 1
    %s26 = scalar_select %p23, %s24, %s25
    %p29 = pneg %p23
    %p30 = scmp.eq.s32.totalorder %s14, 7
    %p31 = por %p29, %p30
    %p32 = scmp.ne.s32.totalorder %s24, %s27
    %p33 = scmp.eq.s32.totalorder %s14, 0
    %p34 = por %p32, %p33
    %p35 = scmp.ne.s32.totalorder %s24, %s27
    %p36 = scmp.eq.s32.totalorder %s19, 7
    %p37 = por %p35, %p36
    %p38 = scmp.ne.s32.totalorder %s27, %s28
    %p39 = scmp.eq.s32.totalorder %s19, 0
    %p40 = por %p38, %p39
    %p41 = scmp.ne.s32.totalorder %s27, %s28
    %p42 = scmp.eq.s32.totalorder %s20, 7
    %p43 = por %p41, %p42
    %p45 = scmp.ne.s32.totalorder %s28, %s44
    %p46 = scmp.eq.s32.totalorder %s20, 0
    %p47 = por %p45, %p46
    %s48 = ssub.s32 %s14, %s21
    %p49 = scmp.eq.s32.totalorder %s48, 0
    %s51 = sadd.s32 %s50, 1
    %s52 = scalar_select %p49, %s50, %s51
    %p55 = pneg %p49
    %p56 = scmp.eq.s32.totalorder %s14, 7
    %p57 = por %p55, %p56
    %p58 = scmp.ne.s32.totalorder %s50, %s53
    %p59 = scmp.eq.s32.totalorder %s14, 0
    %p60 = por %p58, %p59
    %p61 = scmp.ne.s32.totalorder %s50, %s53
    %p62 = scmp.eq.s32.totalorder %s19, 7
    %p63 = por %p61, %p62
    %p64 = scmp.ne.s32.totalorder %s53, %s54
    %p65 = scmp.eq.s32.totalorder %s19, 0
    %p66 = por %p64, %p65
    %p67 = scmp.ne.s32.totalorder %s53, %s54
    %p68 = scmp.eq.s32.totalorder %s20, 7
    %p69 = por %p67, %p68
    %p71 = scmp.ne.s32.totalorder %s54, %s70
    %p72 = scmp.eq.s32.totalorder %s20, 0
    %p73 = por %p71, %p72
    %s74 = sld [smem:[#allocation3]]
    %s75 = sld [smem:[#allocation3]]
    %s76 = ssub.s32 %s74, %s75
    %s77 = ssub.s32 %s14, %s21
    %s78 = sor.u32 %s76, %s77
    %p79 = scmp.eq.s32.totalorder %s78, 0
    %s81 = sadd.s32 %s80, 1
    %s82 = scalar_select %p79, %s80, %s81
    %p85 = pneg %p79
    %p86 = scmp.eq.s32.totalorder %s14, 7
    %p87 = por %p85, %p86
    %p88 = scmp.ne.s32.totalorder %s80, %s83
    %p89 = scmp.eq.s32.totalorder %s14, 0
    %p90 = por %p88, %p89
    %p91 = scmp.ne.s32.totalorder %s80, %s83
    %p92 = scmp.eq.s32.totalorder %s19, 7
    %p93 = por %p91, %p92
    %p94 = scmp.ne.s32.totalorder %s83, %s84
    %p95 = scmp.eq.s32.totalorder %s19, 0
    %p96 = por %p94, %p95
    %p97 = scmp.ne.s32.totalorder %s83, %s84
    %p98 = scmp.eq.s32.totalorder %s20, 7
    %p99 = por %p97, %p98
    %p101 = scmp.ne.s32.totalorder %s84, %s100
    %p102 = scmp.eq.s32.totalorder %s20, 0
    %p103 = por %p101, %p102
    %s104 = ssub.s32 %s14, %s21
    %p105 = scmp.eq.s32.totalorder %s104, 0
    %s107 = sadd.s32 %s106, 1
    %s108 = scalar_select %p105, %s106, %s107
    %p111 = pneg %p105
    %p112 = scmp.eq.s32.totalorder %s14, 7
    %p113 = por %p111, %p112
    %p114 = scmp.ne.s32.totalorder %s106, %s109
    %p115 = scmp.eq.s32.totalorder %s14, 0
    %p116 = por %p114, %p115
    %p117 = scmp.ne.s32.totalorder %s106, %s109
    %p118 = scmp.eq.s32.totalorder %s19, 7
    %p119 = por %p117, %p118
    %p120 = scmp.ne.s32.totalorder %s109, %s110
    %p121 = scmp.eq.s32.totalorder %s19, 0
    %p122 = por %p120, %p121
    %p123 = scmp.ne.s32.totalorder %s109, %s110
    %p124 = scmp.eq.s32.totalorder %s20, 7
    %p125 = por %p123, %p124
    %p127 = scmp.ne.s32.totalorder %s110, %s126
    %p128 = scmp.eq.s32.totalorder %s20, 0
    %p129 = por %p127, %p128
    %s131 = sadd.s32 %s130, 1
    %p134 = scmp.eq.s32.totalorder %s14, 7
    %p135 = scmp.ne.s32.totalorder %s130, %s132
    %p136 = scmp.eq.s32.totalorder %s14, 0
    %p137 = por %p135, %p136
    %p138 = scmp.ne.s32.totalorder %s130, %s132
    %p139 = scmp.eq.s32.totalorder %s19, 7
    %p140 = por %p138, %p139
    %p141 = scmp.ne.s32.totalorder %s132, %s133
    %p142 = scmp.eq.s32.totalorder %s19, 0
    %p143 = por %p141, %p142
    %p144 = scmp.ne.s32.totalorder %s132, %s133
    %p145 = scmp.eq.s32.totalorder %s20, 7
    %p146 = por %p144, %p145
    %p148 = scmp.ne.s32.totalorder %s133, %s147
    %p149 = scmp.eq.s32.totalorder %s20, 0
    %p150 = por %p148, %p149
    %s152 = sadd.s32 %s151, 1
    %p155 = scmp.eq.s32.totalorder %s14, 7
    %p156 = scmp.ne.s32.totalorder %s151, %s153
    %p157 = scmp.eq.s32.totalorder %s14, 0
    %p158 = por %p156, %p157
    %p159 = scmp.ne.s32.totalorder %s151, %s153
    %p160 = scmp.eq.s32.totalorder %s19, 7
    %p161 = por %p159, %p160
    %p162 = scmp.ne.s32.totalorder %s153, %s154
    %p163 = scmp.eq.s32.totalorder %s19, 0
    %p164 = por %p162, %p163
    %p165 = scmp.ne.s32.totalorder %s153, %s154
    %p166 = scmp.eq.s32.totalorder %s20, 7
    %p167 = por %p165, %p166
    %p169 = scmp.ne.s32.totalorder %s154, %s168
    %p170 = scmp.eq.s32.totalorder %s20, 0
    %p171 = por %p169, %p170
    %s172 = ssub.s32 %s14, %s21
    %p173 = scmp.eq.s32.totalorder %s172, 0
    %s175 = sadd.s32 %s174, 1
    %s176 = scalar_select %p173, %s174, %s175
    %p179 = pneg %p173
    %p180 = scmp.eq.s32.totalorder %s14, 7
    %p181 = por %p179, %p180
    %p182 = scmp.ne.s32.totalorder %s174, %s177
    %p183 = scmp.eq.s32.totalorder %s14, 0
    %p184 = por %p182, %p183
    %p185 = scmp.ne.s32.totalorder %s174, %s177
    %p186 = scmp.eq.s32.totalorder %s19, 7
    %p187 = por %p185, %p186
    %p188 = scmp.ne.s32.totalorder %s177, %s178
    %p189 = scmp.eq.s32.totalorder %s19, 0
    %p190 = por %p188, %p189
    %p191 = scmp.ne.s32.totalorder %s177, %s178
    %p192 = scmp.eq.s32.totalorder %s20, 7
    %p193 = por %p191, %p192
    %p195 = scmp.ne.s32.totalorder %s178, %s194
    %p196 = scmp.eq.s32.totalorder %s20, 0
    %p197 = por %p195, %p196
    %p198 = scmp.le.s32.totalorder 1, %s14
    %p199 = scmp.lt.s32.totalorder %s14, 9
    %p200 = pnand %p198, %p199
    %p201 = pneg %p200
    // Predicated region
    $region9: #{dafno2d_forward.7} parent=5 // pred_check
      _
    $region10: #{dafno2d_forward.7} parent=5 // pred_check_branch
      %203 = sbr.rel (%p200) target = $region12
    $region11: #{dafno2d_forward.7} parent=5 // pred_region
      %s204 = ssub.s32 %s14, 1
      // Predicated region
      $region13: #{dafno2d_forward.7} parent=11 // pred_check
        %p205 = pneg %p143
      $region14: #{dafno2d_forward.7} parent=11 // pred_check_branch
        %207 = sbr.rel (%p205) target = $region16
      $region15: #{dafno2d_forward.7} parent=11 // pred_region
        _
      $region16: #{dafno2d_forward.7} parent=11 // pred_fallthru
        _
      // Predicated region
      $region17: #{dafno2d_forward.7} parent=11 // pred_check
        %p208 = pneg %p164
      $region18: #{dafno2d_forward.7} parent=11 // pred_check_branch
        %210 = sbr.rel (%p208) target = $region20
      $region19: #{dafno2d_forward.7} parent=11 // pred_region
        _
      $region20: #{dafno2d_forward.7} parent=11 // pred_fallthru
        _
    $region12: #{dafno2d_forward.7} parent=5 // pred_fallthru
      _
    %p211 = scmp.lt.s32.totalorder %s14, 8
    // Predicated region
    $region21: #{dafno2d_forward.7} parent=5 // pred_check
      %p212 = pneg %p211
    $region22: #{dafno2d_forward.7} parent=5 // pred_check_branch
      %214 = sbr.rel (%p212) target = $region24
    $region23: #{dafno2d_forward.7} parent=5 // pred_region
      // Predicated region
      $region25: #{dafno2d_forward.7} parent=23 // pred_check
        %p215 = pneg %p34
      $region26: #{dafno2d_forward.7} parent=23 // pred_check_branch
        %217 = sbr.rel (%p215) target = $region28
      $region27: #{dafno2d_forward.7} parent=23 // pred_region
        %s218 = smul.u32 18, %s14
        %p219 = scmp.lt.s32.totalorder %s218, 143
        %s220 = scalar_select %p219, %s218, 143
        %s221 = smul.addr %s220, 4
        %s222 = scalar_lea.vmem %s1, %s221
        %s223 = smul.u32 18, %s14
      $region28: #{dafno2d_forward.7} parent=23 // pred_fallthru
        _
      // Predicated region
      $region29: #{dafno2d_forward.7} parent=23 // pred_check
        %p224 = pneg %p60
      $region30: #{dafno2d_forward.7} parent=23 // pred_check_branch
        %226 = sbr.rel (%p224) target = $region32
      $region31: #{dafno2d_forward.7} parent=23 // pred_region
        %s227 = smul.u32 18, %s14
        %p228 = scmp.lt.s32.totalorder %s227, 143
        %s229 = scalar_select %p228, %s227, 143
        %s230 = smul.addr %s229, 8
        %s231 = scalar_lea.vmem %s2, %s230
        %s232 = smul.u32 18, %s14
      $region32: #{dafno2d_forward.7} parent=23 // pred_fallthru
        _
      // Predicated region
      $region33: #{dafno2d_forward.7} parent=23 // pred_check
        %p233 = pneg %p90
      $region34: #{dafno2d_forward.7} parent=23 // pred_check_branch
        %235 = sbr.rel (%p233) target = $region36
      $region35: #{dafno2d_forward.7} parent=23 // pred_region
        %s236 = sld [smem:[#allocation3]]
        %s237 = smul.u32 18, %s14
        %p238 = scmp.lt.s32.totalorder %s236, 3
        %s239 = scalar_select %p238, %s236, 3
        %p240 = scmp.lt.s32.totalorder %s237, 143
        %s241 = scalar_select %p240, %s237, 143
        %s242 = smul.addr %s239, 144
        %s243 = sadd.s32 %s241, %s242
        %s244 = smul.addr %s243, 8
        %s245 = scalar_lea.vmem %s3, %s244
        %s246 = sld [smem:[#allocation3]]
        %s247 = smul.u32 18, %s14
      $region36: #{dafno2d_forward.7} parent=23 // pred_fallthru
        _
      // Predicated region
      $region37: #{dafno2d_forward.7} parent=23 // pred_check
        %p248 = pneg %p116
      $region38: #{dafno2d_forward.7} parent=23 // pred_check_branch
        %250 = sbr.rel (%p248) target = $region40
      $region39: #{dafno2d_forward.7} parent=23 // pred_region
        %s251 = smul.u32 18, %s14
        %p252 = scmp.lt.s32.totalorder %s251, 143
        %s253 = scalar_select %p252, %s251, 143
        %s254 = smul.addr %s253, 8
        %s255 = scalar_lea.vmem %s4, %s254
        %s256 = smul.u32 18, %s14
      $region40: #{dafno2d_forward.7} parent=23 // pred_fallthru
        _
    $region24: #{dafno2d_forward.7} parent=5 // pred_fallthru
      _
    %p257 = scmp.le.s32.totalorder 1, %s14
    %p258 = scmp.lt.s32.totalorder %s14, 9
    %p259 = pnand %p257, %p258
    %p260 = pneg %p259
    // Predicated region
    $region41: #{dafno2d_forward.7} parent=5 // pred_check
      _
    $region42: #{dafno2d_forward.7} parent=5 // pred_check_branch
      %262 = sbr.rel (%p259) target = $region44
    $region43: #{dafno2d_forward.7} parent=5 // pred_region
      %s263 = ssub.s32 %s14, 1
      %s264 = smul.u32 18, %s19
      %p265 = scmp.lt.s32.totalorder %s264, 143
      %s266 = scalar_select %p265, %s264, 143
      %s267 = smul.addr %s266, 4
      %s268 = scalar_lea.vmem %s1, %s267
      %p269 = pneg %p40
      %p270 = pneg %p37
      %s271 = smul.u32 18, %s19
      %p272 = scmp.lt.s32.totalorder %s271, 143
      %s273 = scalar_select %p272, %s271, 143
      %s274 = smul.addr %s273, 8
      %s275 = scalar_lea.vmem %s2, %s274
      %p276 = pneg %p66
      %p277 = pneg %p63
      %s278 = sld [smem:[#allocation3]]
      %s279 = smul.u32 18, %s19
      %p280 = scmp.lt.s32.totalorder %s278, 3
      %s281 = scalar_select %p280, %s278, 3
      %p282 = scmp.lt.s32.totalorder %s279, 143
      %s283 = scalar_select %p282, %s279, 143
      %s284 = smul.addr %s281, 144
      %s285 = sadd.s32 %s283, %s284
      %s286 = smul.addr %s285, 8
      %s287 = scalar_lea.vmem %s3, %s286
      %p288 = pneg %p96
      %p289 = pneg %p93
      %s290 = smul.u32 18, %s19
      %p291 = scmp.lt.s32.totalorder %s290, 143
      %s292 = scalar_select %p291, %s290, 143
      %s293 = smul.addr %s292, 8
      %s294 = scalar_lea.vmem %s4, %s293
      %p295 = pneg %p122
      %p296 = pneg %p119
      %p297 = pneg %p143
      %p298 = pneg %p140
      %p299 = pneg %p164
      %p300 = pneg %p161
      %p301 = pneg %p190
      %p302 = pneg %p187
      %s303 = smul.u32 18, %s19
      %p304 = scmp.lt.s32.totalorder %s303, 143
      %s305 = scalar_select %p304, %s303, 143
      %s306 = smul.addr %s305, 4
      %s307 = scalar_lea.vmem %s7, %s306
      %s308 = smul.u32 18, %s19
      %p309 = scmp.lt.s32.totalorder %s308, 143
      %s310 = scalar_select %p309, %s308, 143
      %s311 = smul.addr %s310, 4
      %s312 = scalar_lea.vmem %s1, %s311
      %s313 = smul.u32 18, %s19
      %s314 = smul.u32 18, %s19
      %p315 = scmp.lt.s32.totalorder %s314, 143
      %s316 = scalar_select %p315, %s314, 143
      %s317 = smul.addr %s316, 8
      %s318 = scalar_lea.vmem %s2, %s317
      %s319 = smul.u32 18, %s19
      %s320 = sld [smem:[#allocation3]]
      %s321 = smul.u32 18, %s19
      %p322 = scmp.lt.s32.totalorder %s320, 3
      %s323 = scalar_select %p322, %s320, 3
      %p324 = scmp.lt.s32.totalorder %s321, 143
      %s325 = scalar_select %p324, %s321, 143
      %s326 = smul.addr %s323, 144
      %s327 = sadd.s32 %s325, %s326
      %s328 = smul.addr %s327, 8
      %s329 = scalar_lea.vmem %s3, %s328
      %s330 = sld [smem:[#allocation3]]
      %s331 = smul.u32 18, %s19
      %s332 = smul.u32 18, %s19
      %p333 = scmp.lt.s32.totalorder %s332, 143
      %s334 = scalar_select %p333, %s332, 143
      %s335 = smul.addr %s334, 8
      %s336 = scalar_lea.vmem %s4, %s335
      %s337 = smul.u32 18, %s19
      %s338 = smul.u32 18, %s19
      %p339 = scmp.lt.s32.totalorder %s338, 143
      %s340 = scalar_select %p339, %s338, 143
      %s341 = smul.addr %s340, 4
      %s342 = scalar_lea.vmem %s7, %s341
      %s343 = smul.u32 18, %s19
      %v344 = vld [vmem:[%s312] sm:$0xf]
      %v345 = vld [vmem:[%s312 + $0x4] sm:$0xf]
      %v346 = vld [vmem:[%s312 + $0x8] sm:$0xf]
      %v347 = vld [vmem:[%s312 + $0xc] sm:$0xf]
      %v348 = vld [vmem:[%s312 + $0x10] sm:$0xf]
      %v349 = vld [vmem:[%s312 + $0x14] sm:$0xf]
      %v350 = vld [vmem:[%s312 + $0x18] sm:$0xf]
      %v351 = vld [vmem:[%s312 + $0x1c] sm:$0xf]
      %v352 = vld [vmem:[%s312 + $0x20] sm:$0xf]
      %v353 = vld [vmem:[%s312 + $0x24] sm:$0xf]
      %v354 = vld [vmem:[%s312 + $0x28] sm:$0xf]
      %v355 = vld [vmem:[%s312 + $0x2c] sm:$0xf]
      %v356 = vld [vmem:[%s312 + $0x30] sm:$0xf]
      %v357 = vld [vmem:[%s312 + $0x34] sm:$0xf]
      %v358 = vld [vmem:[%s312 + $0x38] sm:$0xf]
      %v359 = vld [vmem:[%s312 + $0x3c] sm:$0xf]
      %v360 = vld [vmem:[%s312 + $0x40] sm:$0xf]
      %v361 = vld [vmem:[%s312 + $0x44] sm:$0xf]
      %v362 = vunpack.c.l.bf16 %v344
      %v363 = vunpack.c.l.bf16 %v345
      %v364 = vunpack.c.l.bf16 %v346
      %v365 = vunpack.c.l.bf16 %v347
      %v366 = vunpack.c.l.bf16 %v348
      %v367 = vunpack.c.l.bf16 %v349
      %v368 = vunpack.c.l.bf16 %v350
      %v369 = vunpack.c.l.bf16 %v351
      %v370 = vunpack.c.l.bf16 %v352
      %v371 = vunpack.c.l.bf16 %v353
      %v372 = vunpack.c.l.bf16 %v354
      %v373 = vunpack.c.l.bf16 %v355
      %v374 = vunpack.c.l.bf16 %v356
      %v375 = vunpack.c.l.bf16 %v357
      %v376 = vunpack.c.l.bf16 %v358
      %v377 = vunpack.c.l.bf16 %v359
      %v378 = vunpack.c.l.bf16 %v360
      %v379 = vunpack.c.l.bf16 %v361
      %v380 = vld [vmem:[%s336] sm:$0xff]
      %v381 = vld [vmem:[%s336 + $0x8] sm:$0xff]
      %v382 = vld [vmem:[%s336 + $0x10] sm:$0xff]
      %v383 = vld [vmem:[%s336 + $0x18] sm:$0xff]
      %v384 = vld [vmem:[%s336 + $0x20] sm:$0xff]
      %v385 = vld [vmem:[%s336 + $0x28] sm:$0xff]
      %v386 = vld [vmem:[%s336 + $0x30] sm:$0xff]
      %v387 = vld [vmem:[%s336 + $0x38] sm:$0xff]
      %v388 = vld [vmem:[%s336 + $0x40] sm:$0xff]
      %v389 = vld [vmem:[%s336 + $0x48] sm:$0xff]
      %v390 = vld [vmem:[%s336 + $0x50] sm:$0xff]
      %v391 = vld [vmem:[%s336 + $0x58] sm:$0xff]
      %v392 = vld [vmem:[%s336 + $0x60] sm:$0xff]
      %v393 = vld [vmem:[%s336 + $0x68] sm:$0xff]
      %v394 = vld [vmem:[%s336 + $0x70] sm:$0xff]
      %v395 = vld [vmem:[%s336 + $0x78] sm:$0xff]
      %v396 = vld [vmem:[%s336 + $0x80] sm:$0xff]
      %v397 = vld [vmem:[%s336 + $0x88] sm:$0xff]
      %v398 = vld [vmem:[%s329] sm:$0xff]
      %v399 = vld [vmem:[%s329 + $0x8] sm:$0xff]
      %v400 = vld [vmem:[%s329 + $0x10] sm:$0xff]
      %v401 = vld [vmem:[%s329 + $0x18] sm:$0xff]
      %v402 = vld [vmem:[%s329 + $0x20] sm:$0xff]
      %v403 = vld [vmem:[%s329 + $0x28] sm:$0xff]
      %v404 = vld [vmem:[%s329 + $0x30] sm:$0xff]
      %v405 = vld [vmem:[%s329 + $0x38] sm:$0xff]
      %v406 = vld [vmem:[%s329 + $0x40] sm:$0xff]
      %v407 = vld [vmem:[%s329 + $0x48] sm:$0xff]
      %v408 = vld [vmem:[%s329 + $0x50] sm:$0xff]
      %v409 = vld [vmem:[%s329 + $0x58] sm:$0xff]
      %v410 = vld [vmem:[%s329 + $0x60] sm:$0xff]
      %v411 = vld [vmem:[%s329 + $0x68] sm:$0xff]
      %v412 = vld [vmem:[%s329 + $0x70] sm:$0xff]
      %v413 = vld [vmem:[%s329 + $0x78] sm:$0xff]
      %v414 = vld [vmem:[%s329 + $0x80] sm:$0xff]
      %v415 = vld [vmem:[%s329 + $0x88] sm:$0xff]
      %v416 = vld [vmem:[%s5] sm:$0xff]
      %v417 = vld [vmem:[%s5 + $0x8] sm:$0xff]
      %v418 = vld [vmem:[%s5 + $0x10] sm:$0xff]
      %v419 = vld [vmem:[%s5 + $0x18] sm:$0xff]
      %v420 = vld [vmem:[%s6] sm:$0x1]
      %v422 = vperm.slane %v420, 0
      %vm424 = vcmask 261120
      %v426 = vsel %vm424, %v362, 0
      %v429 = vsel %vm424, %v363, 0
      %v432 = vsel %vm424, %v364, 0
      %v435 = vsel %vm424, %v365, 0
      %v438 = vsel %vm424, %v366, 0
      %v441 = vsel %vm424, %v367, 0
      %v444 = vsel %vm424, %v368, 0
      %v447 = vsel %vm424, %v369, 0
      %v450 = vsel %vm424, %v370, 0
      %v453 = vsel %vm424, %v371, 0
      %v456 = vsel %vm424, %v372, 0
      %v459 = vsel %vm424, %v373, 0
      %v462 = vsel %vm424, %v374, 0
      %v465 = vsel %vm424, %v375, 0
      %v468 = vsel %vm424, %v376, 0
      %v471 = vsel %vm424, %v377, 0
      %v474 = vsel %vm424, %v378, 0
      %v477 = vsel %vm424, %v379, 0
      %479 = vmatpush.msra.mxu0 0.0
      %480 = vmatpush.msra.mxu0 0.0
      %481 = vmatpush.msra.mxu0 0.0
      %482 = vmatpush.msra.mxu0 0.0
      %483 = vmatpush.msra.mxu0 0.0
      %484 = vmatpush.msra.mxu0 0.0
      %485 = vmatpush.msra.mxu0 0.0
      %486 = vmatpush.msra.mxu0 0.0
      %487 = vmatpush.msra.mxu0 0.0
      %488 = vmatpush.msra.mxu0 0.0
      %489 = vmatpush.msra.mxu0 0.0
      %490 = vmatpush.msra.mxu0 0.0
      %491 = vmatpush.msra.mxu0 %v419
      %492 = vmatpush.msra.mxu0 %v418
      %493 = vmatpush.msra.mxu0 %v417
      %494 = vmatpush.msra.mxu0 %v416
      %495 = vmatmul.f32.gmra.mxu0 %v426
      %v496 = vpop.f32.mrf.mxu0
      %v497 = vadd.f32 %v422, %v496
      %498 = vmatmul.f32.gmra.mxu0 %v429
      %v499 = vpop.f32.mrf.mxu0
      %v500 = vadd.f32 %v422, %v499
      %501 = vmatmul.f32.gmra.mxu0 %v432
      %v502 = vpop.f32.mrf.mxu0
      %v503 = vadd.f32 %v422, %v502
      %504 = vmatmul.f32.gmra.mxu0 %v435
      %v505 = vpop.f32.mrf.mxu0
      %v506 = vadd.f32 %v422, %v505
      %507 = vmatmul.f32.gmra.mxu0 %v438
      %v508 = vpop.f32.mrf.mxu0
      %v509 = vadd.f32 %v422, %v508
      %510 = vmatmul.f32.gmra.mxu0 %v441
      %v511 = vpop.f32.mrf.mxu0
      %v512 = vadd.f32 %v422, %v511
      %513 = vmatmul.f32.gmra.mxu0 %v444
      %v514 = vpop.f32.mrf.mxu0
      %v515 = vadd.f32 %v422, %v514
      %516 = vmatmul.f32.gmra.mxu0 %v447
      %v517 = vpop.f32.mrf.mxu0
      %v518 = vadd.f32 %v422, %v517
      %519 = vmatmul.f32.gmra.mxu0 %v450
      %v520 = vpop.f32.mrf.mxu0
      %v521 = vadd.f32 %v422, %v520
      %522 = vmatmul.f32.gmra.mxu0 %v453
      %v523 = vpop.f32.mrf.mxu0
      %v524 = vadd.f32 %v422, %v523
      %525 = vmatmul.f32.gmra.mxu0 %v456
      %v526 = vpop.f32.mrf.mxu0
      %v527 = vadd.f32 %v422, %v526
      %528 = vmatmul.f32.gmra.mxu0 %v459
      %v529 = vpop.f32.mrf.mxu0
      %v530 = vadd.f32 %v422, %v529
      %531 = vmatmul.f32.gmra.mxu0 %v462
      %v532 = vpop.f32.mrf.mxu0
      %v533 = vadd.f32 %v422, %v532
      %534 = vmatmul.f32.gmra.mxu0 %v465
      %v535 = vpop.f32.mrf.mxu0
      %v536 = vadd.f32 %v422, %v535
      %537 = vmatmul.f32.gmra.mxu0 %v468
      %v538 = vpop.f32.mrf.mxu0
      %v539 = vadd.f32 %v422, %v538
      %540 = vmatmul.f32.gmra.mxu0 %v471
      %v541 = vpop.f32.mrf.mxu0
      %v542 = vadd.f32 %v422, %v541
      %543 = vmatmul.f32.gmra.mxu0 %v474
      %v544 = vpop.f32.mrf.mxu0
      %v545 = vadd.f32 %v422, %v544
      %546 = vmatmul.f32.gmra.mxu0 %v477
      %v547 = vpop.f32.mrf.mxu0
      %v548 = vadd.f32 %v422, %v547
      %549 = vdwg.mxu0
      %v550 = vld [vmem:[%s318] sm:$0xff]
      %v551 = vld [vmem:[%s318 + $0x8] sm:$0xff]
      %v552 = vld [vmem:[%s318 + $0x10] sm:$0xff]
      %v553 = vld [vmem:[%s318 + $0x18] sm:$0xff]
      %v554 = vld [vmem:[%s318 + $0x20] sm:$0xff]
      %v555 = vld [vmem:[%s318 + $0x28] sm:$0xff]
      %v556 = vld [vmem:[%s318 + $0x30] sm:$0xff]
      %v557 = vld [vmem:[%s318 + $0x38] sm:$0xff]
      %v558 = vld [vmem:[%s318 + $0x40] sm:$0xff]
      %v559 = vld [vmem:[%s318 + $0x48] sm:$0xff]
      %v560 = vld [vmem:[%s318 + $0x50] sm:$0xff]
      %v561 = vld [vmem:[%s318 + $0x58] sm:$0xff]
      %v562 = vld [vmem:[%s318 + $0x60] sm:$0xff]
      %v563 = vld [vmem:[%s318 + $0x68] sm:$0xff]
      %v564 = vld [vmem:[%s318 + $0x70] sm:$0xff]
      %v565 = vld [vmem:[%s318 + $0x78] sm:$0xff]
      %v566 = vld [vmem:[%s318 + $0x80] sm:$0xff]
      %v567 = vld [vmem:[%s318 + $0x88] sm:$0xff]
      %v568 = vmul.f32 %v362, %v398
      %v569 = vmul.f32 %v363, %v399
      %v570 = vmul.f32 %v364, %v400
      %v571 = vmul.f32 %v365, %v401
      %v572 = vmul.f32 %v366, %v402
      %v573 = vmul.f32 %v367, %v403
      %v574 = vmul.f32 %v368, %v404
      %v575 = vmul.f32 %v369, %v405
      %v576 = vmul.f32 %v370, %v406
      %v577 = vmul.f32 %v371, %v407
      %v578 = vmul.f32 %v372, %v408
      %v579 = vmul.f32 %v373, %v409
      %v580 = vmul.f32 %v374, %v410
      %v581 = vmul.f32 %v375, %v411
      %v582 = vmul.f32 %v376, %v412
      %v583 = vmul.f32 %v377, %v413
      %v584 = vmul.f32 %v378, %v414
      %v585 = vmul.f32 %v379, %v415
      %v586 = vsub.f32 %v550, %v568
      %v587 = vsub.f32 %v551, %v569
      %v588 = vsub.f32 %v552, %v570
      %v589 = vsub.f32 %v553, %v571
      %v590 = vsub.f32 %v554, %v572
      %v591 = vsub.f32 %v555, %v573
      %v592 = vsub.f32 %v556, %v574
      %v593 = vsub.f32 %v557, %v575
      %v594 = vsub.f32 %v558, %v576
      %v595 = vsub.f32 %v559, %v577
      %v596 = vsub.f32 %v560, %v578
      %v597 = vsub.f32 %v561, %v579
      %v598 = vsub.f32 %v562, %v580
      %v599 = vsub.f32 %v563, %v581
      %v600 = vsub.f32 %v564, %v582
      %v601 = vsub.f32 %v565, %v583
      %v602 = vsub.f32 %v566, %v584
      %v603 = vsub.f32 %v567, %v585
      %v604 = vadd.f32 %v586, %v497
      %v605 = vadd.f32 %v587, %v500
      %v606 = vadd.f32 %v588, %v503
      %v607 = vadd.f32 %v589, %v506
      %v608 = vadd.f32 %v590, %v509
      %v609 = vadd.f32 %v591, %v512
      %v610 = vadd.f32 %v592, %v515
      %v611 = vadd.f32 %v593, %v518
      %v612 = vadd.f32 %v594, %v521
      %v613 = vadd.f32 %v595, %v524
      %v614 = vadd.f32 %v596, %v527
      %v615 = vadd.f32 %v597, %v530
      %v616 = vadd.f32 %v598, %v533
      %v617 = vadd.f32 %v599, %v536
      %v618 = vadd.f32 %v600, %v539
      %v619 = vadd.f32 %v601, %v542
      %v620 = vadd.f32 %v602, %v545
      %v621 = vadd.f32 %v603, %v548
      %623 = vset.pattern.permute.xlu0 0
      %624 = vperm.xlu0 %623, %v380
      %v625 = vpop.permute.xlu0 %624
      %628 = vset.pattern.permute.xlu0 0
      %629 = vperm.xlu0 %628, %v381
      %v630 = vpop.permute.xlu0 %629
      %633 = vset.pattern.permute.xlu0 0
      %634 = vperm.xlu0 %633, %v382
      %v635 = vpop.permute.xlu0 %634
      %638 = vset.pattern.permute.xlu0 0
      %639 = vperm.xlu0 %638, %v383
      %v640 = vpop.permute.xlu0 %639
      %643 = vset.pattern.permute.xlu0 0
      %644 = vperm.xlu0 %643, %v384
      %v645 = vpop.permute.xlu0 %644
      %648 = vset.pattern.permute.xlu0 0
      %649 = vperm.xlu0 %648, %v385
      %v650 = vpop.permute.xlu0 %649
      %653 = vset.pattern.permute.xlu0 0
      %654 = vperm.xlu0 %653, %v386
      %v655 = vpop.permute.xlu0 %654
      %658 = vset.pattern.permute.xlu0 0
      %659 = vperm.xlu0 %658, %v387
      %v660 = vpop.permute.xlu0 %659
      %663 = vset.pattern.permute.xlu0 0
      %664 = vperm.xlu0 %663, %v388
      %v665 = vpop.permute.xlu0 %664
      %668 = vset.pattern.permute.xlu0 0
      %669 = vperm.xlu0 %668, %v389
      %v670 = vpop.permute.xlu0 %669
      %673 = vset.pattern.permute.xlu0 0
      %674 = vperm.xlu0 %673, %v390
      %v675 = vpop.permute.xlu0 %674
      %678 = vset.pattern.permute.xlu0 0
      %679 = vperm.xlu0 %678, %v391
      %v680 = vpop.permute.xlu0 %679
      %683 = vset.pattern.permute.xlu0 0
      %684 = vperm.xlu0 %683, %v392
      %v685 = vpop.permute.xlu0 %684
      %688 = vset.pattern.permute.xlu0 0
      %689 = vperm.xlu0 %688, %v393
      %v690 = vpop.permute.xlu0 %689
      %693 = vset.pattern.permute.xlu0 0
      %694 = vperm.xlu0 %693, %v394
      %v695 = vpop.permute.xlu0 %694
      %698 = vset.pattern.permute.xlu0 0
      %699 = vperm.xlu0 %698, %v395
      %v700 = vpop.permute.xlu0 %699
      %703 = vset.pattern.permute.xlu0 0
      %704 = vperm.xlu0 %703, %v396
      %v705 = vpop.permute.xlu0 %704
      %708 = vset.pattern.permute.xlu0 0
      %709 = vperm.xlu0 %708, %v397
      %v710 = vpop.permute.xlu0 %709
      %v712 = vmul.f32 %v625, %v604
      %v713 = vmul.f32 %v630, %v605
      %v714 = vmul.f32 %v635, %v606
      %v715 = vmul.f32 %v640, %v607
      %v716 = vmul.f32 %v645, %v608
      %v717 = vmul.f32 %v650, %v609
      %v718 = vmul.f32 %v655, %v610
      %v719 = vmul.f32 %v660, %v611
      %v720 = vmul.f32 %v665, %v612
      %v721 = vmul.f32 %v670, %v613
      %v722 = vmul.f32 %v675, %v614
      %v723 = vmul.f32 %v680, %v615
      %v724 = vmul.f32 %v685, %v616
      %v725 = vmul.f32 %v690, %v617
      %v726 = vmul.f32 %v695, %v618
      %v727 = vmul.f32 %v700, %v619
      %v728 = vmul.f32 %v705, %v620
      %v729 = vmul.f32 %v710, %v621
      %v730 = vmul.f32 %v712, 0.5
      %v731 = vmul.f32 %v713, 0.5
      %v732 = vmul.f32 %v714, 0.5
      %v733 = vmul.f32 %v715, 0.5
      %v734 = vmul.f32 %v716, 0.5
      %v735 = vmul.f32 %v717, 0.5
      %v736 = vmul.f32 %v718, 0.5
      %v737 = vmul.f32 %v719, 0.5
      %v738 = vmul.f32 %v720, 0.5
      %v739 = vmul.f32 %v721, 0.5
      %v740 = vmul.f32 %v722, 0.5
      %v741 = vmul.f32 %v723, 0.5
      %v742 = vmul.f32 %v724, 0.5
      %v743 = vmul.f32 %v725, 0.5
      %v744 = vmul.f32 %v726, 0.5
      %v745 = vmul.f32 %v727, 0.5
      %v746 = vmul.f32 %v728, 0.5
      %v747 = vmul.f32 %v729, 0.5
      %v748 = vmul.f32 %v712, 0.70710677
      %v749 = vmul.f32 %v713, 0.70710677
      %v750 = vmul.f32 %v714, 0.70710677
      %v751 = vmul.f32 %v715, 0.70710677
      %v752 = vmul.f32 %v716, 0.70710677
      %v753 = vmul.f32 %v717, 0.70710677
      %v754 = vmul.f32 %v718, 0.70710677
      %v755 = vmul.f32 %v719, 0.70710677
      %v756 = vmul.f32 %v720, 0.70710677
      %v757 = vmul.f32 %v721, 0.70710677
      %v758 = vmul.f32 %v722, 0.70710677
      %v759 = vmul.f32 %v723, 0.70710677
      %v760 = vmul.f32 %v724, 0.70710677
      %v761 = vmul.f32 %v725, 0.70710677
      %v762 = vmul.f32 %v726, 0.70710677
      %v763 = vmul.f32 %v727, 0.70710677
      %v764 = vmul.f32 %v728, 0.70710677
      %v765 = vmul.f32 %v729, 0.70710677
      %v766 = vmul.f32 %v748, %v748
      %v767 = vmin.f32 16.0, %v766
      %v768 = vmul.f32 %v767, 2.1237322e-06
      %v769 = vadd.f32 %v768, 0.00028619796
      %v770 = vmul.f32 %v767, %v769
      %v771 = vadd.f32 %v770, 0.0036580483
      %v772 = vmul.f32 %v767, %v771
      %v773 = vadd.f32 %v772, 0.05243302
      %v774 = vmul.f32 %v767, %v773
      %v775 = vadd.f32 %v774, 0.18741608
      %v776 = vmul.f32 %v767, %v775
      %v777 = vadd.f32 %v776, 1.1283791
      %v778 = vmul.f32 %v748, %v777
      %v779 = vmul.f32 %v767, 3.8918573e-05
      %v780 = vadd.f32 %v779, 0.001143296
      %v781 = vmul.f32 %v767, %v780
      %v782 = vadd.f32 %v781, 0.014752088
      %v783 = vmul.f32 %v767, %v782
      %v784 = vadd.f32 %v783, 0.112945676
      %v785 = vmul.f32 %v767, %v784
      %v786 = vadd.f32 %v785, 0.4994258
      %v787 = vmul.f32 %v767, %v786
      %v788 = vadd.f32 %v787, 1.0
      %v789 = vrcp.pop %v788
      %v790 = vmul.f32 %v788, %v789
      %v791 = vsub.f32 1.0, %v790
      %v792 = vmul.f32 %v789, %v791
      %v793 = vadd.f32 %v789, %v792
      %vm794 = vweird.f32 %v788
      %vm795 = vweird.f32 %v789
      %vm796 = vmor %vm794, %vm795
      %v797 = vsel %vm796, %v789, %v793
      %v798 = vand.u32 2147483647, %v788
      %vm799 = vcmp.eq.f32.partialorder %v798, 8.507059e+37
      %v800 = vand.u32 %v788, 2147483648
      %v801 = vor.u32 1.1754944e-38, %v800
      %v802 = vsel %vm799, %v801, %v797
      %v803 = vmul.f32 %v778, %v802
      %v804 = vmin.f32 %v803, 1.0
      %v805 = vmax.f32 %v804, -1.0
      %v806 = vmul.f32 %v749, %v749
      %v807 = vmin.f32 16.0, %v806
      %v808 = vmul.f32 %v807, 2.1237322e-06
      %v809 = vadd.f32 %v808, 0.00028619796
      %v810 = vmul.f32 %v807, %v809
      %v811 = vadd.f32 %v810, 0.0036580483
      %v812 = vmul.f32 %v807, %v811
      %v813 = vadd.f32 %v812, 0.05243302
      %v814 = vmul.f32 %v807, %v813
      %v815 = vadd.f32 %v814, 0.18741608
      %v816 = vmul.f32 %v807, %v815
      %v817 = vadd.f32 %v816, 1.1283791
      %v818 = vmul.f32 %v749, %v817
      %v819 = vmul.f32 %v807, 3.8918573e-05
      %v820 = vadd.f32 %v819, 0.001143296
      %v821 = vmul.f32 %v807, %v820
      %v822 = vadd.f32 %v821, 0.014752088
      %v823 = vmul.f32 %v807, %v822
      %v824 = vadd.f32 %v823, 0.112945676
      %v825 = vmul.f32 %v807, %v824
      %v826 = vadd.f32 %v825, 0.4994258
      %v827 = vmul.f32 %v807, %v826
      %v828 = vadd.f32 %v827, 1.0
      %v829 = vrcp.pop %v828
      %v830 = vmul.f32 %v828, %v829
      %v831 = vsub.f32 1.0, %v830
      %v832 = vmul.f32 %v829, %v831
      %v833 = vadd.f32 %v829, %v832
      %vm834 = vweird.f32 %v828
      %vm835 = vweird.f32 %v829
      %vm836 = vmor %vm834, %vm835
      %v837 = vsel %vm836, %v829, %v833
      %v838 = vand.u32 2147483647, %v828
      %vm839 = vcmp.eq.f32.partialorder %v838, 8.507059e+37
      %v840 = vand.u32 %v828, 2147483648
      %v841 = vor.u32 1.1754944e-38, %v840
      %v842 = vsel %vm839, %v841, %v837
      %v843 = vmul.f32 %v818, %v842
      %v844 = vmin.f32 %v843, 1.0
      %v845 = vmax.f32 %v844, -1.0
      %v846 = vmul.f32 %v750, %v750
      %v847 = vmin.f32 16.0, %v846
      %v848 = vmul.f32 %v847, 2.1237322e-06
      %v849 = vadd.f32 %v848, 0.00028619796
      %v850 = vmul.f32 %v847, %v849
      %v851 = vadd.f32 %v850, 0.0036580483
      %v852 = vmul.f32 %v847, %v851
      %v853 = vadd.f32 %v852, 0.05243302
      %v854 = vmul.f32 %v847, %v853
      %v855 = vadd.f32 %v854, 0.18741608
      %v856 = vmul.f32 %v847, %v855
      %v857 = vadd.f32 %v856, 1.1283791
      %v858 = vmul.f32 %v750, %v857
      %v859 = vmul.f32 %v847, 3.8918573e-05
      %v860 = vadd.f32 %v859, 0.001143296
      %v861 = vmul.f32 %v847, %v860
      %v862 = vadd.f32 %v861, 0.014752088
      %v863 = vmul.f32 %v847, %v862
      %v864 = vadd.f32 %v863, 0.112945676
      %v865 = vmul.f32 %v847, %v864
      %v866 = vadd.f32 %v865, 0.4994258
      %v867 = vmul.f32 %v847, %v866
      %v868 = vadd.f32 %v867, 1.0
      %v869 = vrcp.pop %v868
      %v870 = vmul.f32 %v868, %v869
      %v871 = vsub.f32 1.0, %v870
      %v872 = vmul.f32 %v869, %v871
      %v873 = vadd.f32 %v869, %v872
      %vm874 = vweird.f32 %v868
      %vm875 = vweird.f32 %v869
      %vm876 = vmor %vm874, %vm875
      %v877 = vsel %vm876, %v869, %v873
      %v878 = vand.u32 2147483647, %v868
      %vm879 = vcmp.eq.f32.partialorder %v878, 8.507059e+37
      %v880 = vand.u32 %v868, 2147483648
      %v881 = vor.u32 1.1754944e-38, %v880
      %v882 = vsel %vm879, %v881, %v877
      %v883 = vmul.f32 %v858, %v882
      %v884 = vmin.f32 %v883, 1.0
      %v885 = vmax.f32 %v884, -1.0
      %v886 = vmul.f32 %v751, %v751
      %v887 = vmin.f32 16.0, %v886
      %v888 = vmul.f32 %v887, 2.1237322e-06
      %v889 = vadd.f32 %v888, 0.00028619796
      %v890 = vmul.f32 %v887, %v889
      %v891 = vadd.f32 %v890, 0.0036580483
      %v892 = vmul.f32 %v887, %v891
      %v893 = vadd.f32 %v892, 0.05243302
      %v894 = vmul.f32 %v887, %v893
      %v895 = vadd.f32 %v894, 0.18741608
      %v896 = vmul.f32 %v887, %v895
      %v897 = vadd.f32 %v896, 1.1283791
      %v898 = vmul.f32 %v751, %v897
      %v899 = vmul.f32 %v887, 3.8918573e-05
      %v900 = vadd.f32 %v899, 0.001143296
      %v901 = vmul.f32 %v887, %v900
      %v902 = vadd.f32 %v901, 0.014752088
      %v903 = vmul.f32 %v887, %v902
      %v904 = vadd.f32 %v903, 0.112945676
      %v905 = vmul.f32 %v887, %v904
      %v906 = vadd.f32 %v905, 0.4994258
      %v907 = vmul.f32 %v887, %v906
      %v908 = vadd.f32 %v907, 1.0
      %v909 = vrcp.pop %v908
      %v910 = vmul.f32 %v908, %v909
      %v911 = vsub.f32 1.0, %v910
      %v912 = vmul.f32 %v909, %v911
      %v913 = vadd.f32 %v909, %v912
      %vm914 = vweird.f32 %v908
      %vm915 = vweird.f32 %v909
      %vm916 = vmor %vm914, %vm915
      %v917 = vsel %vm916, %v909, %v913
      %v918 = vand.u32 2147483647, %v908
      %vm919 = vcmp.eq.f32.partialorder %v918, 8.507059e+37
      %v920 = vand.u32 %v908, 2147483648
      %v921 = vor.u32 1.1754944e-38, %v920
      %v922 = vsel %vm919, %v921, %v917
      %v923 = vmul.f32 %v898, %v922
      %v924 = vmin.f32 %v923, 1.0
      %v925 = vmax.f32 %v924, -1.0
      %v926 = vmul.f32 %v752, %v752
      %v927 = vmin.f32 16.0, %v926
      %v928 = vmul.f32 %v927, 2.1237322e-06
      %v929 = vadd.f32 %v928, 0.00028619796
      %v930 = vmul.f32 %v927, %v929
      %v931 = vadd.f32 %v930, 0.0036580483
      %v932 = vmul.f32 %v927, %v931
      %v933 = vadd.f32 %v932, 0.05243302
      %v934 = vmul.f32 %v927, %v933
      %v935 = vadd.f32 %v934, 0.18741608
      %v936 = vmul.f32 %v927, %v935
      %v937 = vadd.f32 %v936, 1.1283791
      %v938 = vmul.f32 %v752, %v937
      %v939 = vmul.f32 %v927, 3.8918573e-05
      %v940 = vadd.f32 %v939, 0.001143296
      %v941 = vmul.f32 %v927, %v940
      %v942 = vadd.f32 %v941, 0.014752088
      %v943 = vmul.f32 %v927, %v942
      %v944 = vadd.f32 %v943, 0.112945676
      %v945 = vmul.f32 %v927, %v944
      %v946 = vadd.f32 %v945, 0.4994258
      %v947 = vmul.f32 %v927, %v946
      %v948 = vadd.f32 %v947, 1.0
      %v949 = vrcp.pop %v948
      %v950 = vmul.f32 %v948, %v949
      %v951 = vsub.f32 1.0, %v950
      %v952 = vmul.f32 %v949, %v951
      %v953 = vadd.f32 %v949, %v952
      %vm954 = vweird.f32 %v948
      %vm955 = vweird.f32 %v949
      %vm956 = vmor %vm954, %vm955
      %v957 = vsel %vm956, %v949, %v953
      %v958 = vand.u32 2147483647, %v948
      %vm959 = vcmp.eq.f32.partialorder %v958, 8.507059e+37
      %v960 = vand.u32 %v948, 2147483648
      %v961 = vor.u32 1.1754944e-38, %v960
      %v962 = vsel %vm959, %v961, %v957
      %v963 = vmul.f32 %v938, %v962
      %v964 = vmin.f32 %v963, 1.0
      %v965 = vmax.f32 %v964, -1.0
      %v966 = vmul.f32 %v753, %v753
      %v967 = vmin.f32 16.0, %v966
      %v968 = vmul.f32 %v967, 2.1237322e-06
      %v969 = vadd.f32 %v968, 0.00028619796
      %v970 = vmul.f32 %v967, %v969
      %v971 = vadd.f32 %v970, 0.0036580483
      %v972 = vmul.f32 %v967, %v971
      %v973 = vadd.f32 %v972, 0.05243302
      %v974 = vmul.f32 %v967, %v973
      %v975 = vadd.f32 %v974, 0.18741608
      %v976 = vmul.f32 %v967, %v975
      %v977 = vadd.f32 %v976, 1.1283791
      %v978 = vmul.f32 %v753, %v977
      %v979 = vmul.f32 %v967, 3.8918573e-05
      %v980 = vadd.f32 %v979, 0.001143296
      %v981 = vmul.f32 %v967, %v980
      %v982 = vadd.f32 %v981, 0.014752088
      %v983 = vmul.f32 %v967, %v982
      %v984 = vadd.f32 %v983, 0.112945676
      %v985 = vmul.f32 %v967, %v984
      %v986 = vadd.f32 %v985, 0.4994258
      %v987 = vmul.f32 %v967, %v986
      %v988 = vadd.f32 %v987, 1.0
      %v989 = vrcp.pop %v988
      %v990 = vmul.f32 %v988, %v989
      %v991 = vsub.f32 1.0, %v990
      %v992 = vmul.f32 %v989, %v991
      %v993 = vadd.f32 %v989, %v992
      %vm994 = vweird.f32 %v988
      %vm995 = vweird.f32 %v989
      %vm996 = vmor %vm994, %vm995
      %v997 = vsel %vm996, %v989, %v993
      %v998 = vand.u32 2147483647, %v988
      %vm999 = vcmp.eq.f32.partialorder %v998, 8.507059e+37
      %v1000 = vand.u32 %v988, 2147483648
      %v1001 = vor.u32 1.1754944e-38, %v1000
      %v1002 = vsel %vm999, %v1001, %v997
      %v1003 = vmul.f32 %v978, %v1002
      %v1004 = vmin.f32 %v1003, 1.0
      %v1005 = vmax.f32 %v1004, -1.0
      %v1006 = vmul.f32 %v754, %v754
      %v1007 = vmin.f32 16.0, %v1006
      %v1008 = vmul.f32 %v1007, 2.1237322e-06
      %v1009 = vadd.f32 %v1008, 0.00028619796
      %v1010 = vmul.f32 %v1007, %v1009
      %v1011 = vadd.f32 %v1010, 0.0036580483
      %v1012 = vmul.f32 %v1007, %v1011
      %v1013 = vadd.f32 %v1012, 0.05243302
      %v1014 = vmul.f32 %v1007, %v1013
      %v1015 = vadd.f32 %v1014, 0.18741608
      %v1016 = vmul.f32 %v1007, %v1015
      %v1017 = vadd.f32 %v1016, 1.1283791
      %v1018 = vmul.f32 %v754, %v1017
      %v1019 = vmul.f32 %v1007, 3.8918573e-05
      %v1020 = vadd.f32 %v1019, 0.001143296
      %v1021 = vmul.f32 %v1007, %v1020
      %v1022 = vadd.f32 %v1021, 0.014752088
      %v1023 = vmul.f32 %v1007, %v1022
      %v1024 = vadd.f32 %v1023, 0.112945676
      %v1025 = vmul.f32 %v1007, %v1024
      %v1026 = vadd.f32 %v1025, 0.4994258
      %v1027 = vmul.f32 %v1007, %v1026
      %v1028 = vadd.f32 %v1027, 1.0
      %v1029 = vrcp.pop %v1028
      %v1030 = vmul.f32 %v1028, %v1029
      %v1031 = vsub.f32 1.0, %v1030
      %v1032 = vmul.f32 %v1029, %v1031
      %v1033 = vadd.f32 %v1029, %v1032
      %vm1034 = vweird.f32 %v1028
      %vm1035 = vweird.f32 %v1029
      %vm1036 = vmor %vm1034, %vm1035
      %v1037 = vsel %vm1036, %v1029, %v1033
      %v1038 = vand.u32 2147483647, %v1028
      %vm1039 = vcmp.eq.f32.partialorder %v1038, 8.507059e+37
      %v1040 = vand.u32 %v1028, 2147483648
      %v1041 = vor.u32 1.1754944e-38, %v1040
      %v1042 = vsel %vm1039, %v1041, %v1037
      %v1043 = vmul.f32 %v1018, %v1042
      %v1044 = vmin.f32 %v1043, 1.0
      %v1045 = vmax.f32 %v1044, -1.0
      %v1046 = vmul.f32 %v755, %v755
      %v1047 = vmin.f32 16.0, %v1046
      %v1048 = vmul.f32 %v1047, 2.1237322e-06
      %v1049 = vadd.f32 %v1048, 0.00028619796
      %v1050 = vmul.f32 %v1047, %v1049
      %v1051 = vadd.f32 %v1050, 0.0036580483
      %v1052 = vmul.f32 %v1047, %v1051
      %v1053 = vadd.f32 %v1052, 0.05243302
      %v1054 = vmul.f32 %v1047, %v1053
      %v1055 = vadd.f32 %v1054, 0.18741608
      %v1056 = vmul.f32 %v1047, %v1055
      %v1057 = vadd.f32 %v1056, 1.1283791
      %v1058 = vmul.f32 %v755, %v1057
      %v1059 = vmul.f32 %v1047, 3.8918573e-05
      %v1060 = vadd.f32 %v1059, 0.001143296
      %v1061 = vmul.f32 %v1047, %v1060
      %v1062 = vadd.f32 %v1061, 0.014752088
      %v1063 = vmul.f32 %v1047, %v1062
      %v1064 = vadd.f32 %v1063, 0.112945676
      %v1065 = vmul.f32 %v1047, %v1064
      %v1066 = vadd.f32 %v1065, 0.4994258
      %v1067 = vmul.f32 %v1047, %v1066
      %v1068 = vadd.f32 %v1067, 1.0
      %v1069 = vrcp.pop %v1068
      %v1070 = vmul.f32 %v1068, %v1069
      %v1071 = vsub.f32 1.0, %v1070
      %v1072 = vmul.f32 %v1069, %v1071
      %v1073 = vadd.f32 %v1069, %v1072
      %vm1074 = vweird.f32 %v1068
      %vm1075 = vweird.f32 %v1069
      %vm1076 = vmor %vm1074, %vm1075
      %v1077 = vsel %vm1076, %v1069, %v1073
      %v1078 = vand.u32 2147483647, %v1068
      %vm1079 = vcmp.eq.f32.partialorder %v1078, 8.507059e+37
      %v1080 = vand.u32 %v1068, 2147483648
      %v1081 = vor.u32 1.1754944e-38, %v1080
      %v1082 = vsel %vm1079, %v1081, %v1077
      %v1083 = vmul.f32 %v1058, %v1082
      %v1084 = vmin.f32 %v1083, 1.0
      %v1085 = vmax.f32 %v1084, -1.0
      %v1086 = vmul.f32 %v756, %v756
      %v1087 = vmin.f32 16.0, %v1086
      %v1088 = vmul.f32 %v1087, 2.1237322e-06
      %v1089 = vadd.f32 %v1088, 0.00028619796
      %v1090 = vmul.f32 %v1087, %v1089
      %v1091 = vadd.f32 %v1090, 0.0036580483
      %v1092 = vmul.f32 %v1087, %v1091
      %v1093 = vadd.f32 %v1092, 0.05243302
      %v1094 = vmul.f32 %v1087, %v1093
      %v1095 = vadd.f32 %v1094, 0.18741608
      %v1096 = vmul.f32 %v1087, %v1095
      %v1097 = vadd.f32 %v1096, 1.1283791
      %v1098 = vmul.f32 %v756, %v1097
      %v1099 = vmul.f32 %v1087, 3.8918573e-05
      %v1100 = vadd.f32 %v1099, 0.001143296
      %v1101 = vmul.f32 %v1087, %v1100
      %v1102 = vadd.f32 %v1101, 0.014752088
      %v1103 = vmul.f32 %v1087, %v1102
      %v1104 = vadd.f32 %v1103, 0.112945676
      %v1105 = vmul.f32 %v1087, %v1104
      %v1106 = vadd.f32 %v1105, 0.4994258
      %v1107 = vmul.f32 %v1087, %v1106
      %v1108 = vadd.f32 %v1107, 1.0
      %v1109 = vrcp.pop %v1108
      %v1110 = vmul.f32 %v1108, %v1109
      %v1111 = vsub.f32 1.0, %v1110
      %v1112 = vmul.f32 %v1109, %v1111
      %v1113 = vadd.f32 %v1109, %v1112
      %vm1114 = vweird.f32 %v1108
      %vm1115 = vweird.f32 %v1109
      %vm1116 = vmor %vm1114, %vm1115
      %v1117 = vsel %vm1116, %v1109, %v1113
      %v1118 = vand.u32 2147483647, %v1108
      %vm1119 = vcmp.eq.f32.partialorder %v1118, 8.507059e+37
      %v1120 = vand.u32 %v1108, 2147483648
      %v1121 = vor.u32 1.1754944e-38, %v1120
      %v1122 = vsel %vm1119, %v1121, %v1117
      %v1123 = vmul.f32 %v1098, %v1122
      %v1124 = vmin.f32 %v1123, 1.0
      %v1125 = vmax.f32 %v1124, -1.0
      %v1126 = vmul.f32 %v757, %v757
      %v1127 = vmin.f32 16.0, %v1126
      %v1128 = vmul.f32 %v1127, 2.1237322e-06
      %v1129 = vadd.f32 %v1128, 0.00028619796
      %v1130 = vmul.f32 %v1127, %v1129
      %v1131 = vadd.f32 %v1130, 0.0036580483
      %v1132 = vmul.f32 %v1127, %v1131
      %v1133 = vadd.f32 %v1132, 0.05243302
      %v1134 = vmul.f32 %v1127, %v1133
      %v1135 = vadd.f32 %v1134, 0.18741608
      %v1136 = vmul.f32 %v1127, %v1135
      %v1137 = vadd.f32 %v1136, 1.1283791
      %v1138 = vmul.f32 %v757, %v1137
      %v1139 = vmul.f32 %v1127, 3.8918573e-05
      %v1140 = vadd.f32 %v1139, 0.001143296
      %v1141 = vmul.f32 %v1127, %v1140
      %v1142 = vadd.f32 %v1141, 0.014752088
      %v1143 = vmul.f32 %v1127, %v1142
      %v1144 = vadd.f32 %v1143, 0.112945676
      %v1145 = vmul.f32 %v1127, %v1144
      %v1146 = vadd.f32 %v1145, 0.4994258
      %v1147 = vmul.f32 %v1127, %v1146
      %v1148 = vadd.f32 %v1147, 1.0
      %v1149 = vrcp.pop %v1148
      %v1150 = vmul.f32 %v1148, %v1149
      %v1151 = vsub.f32 1.0, %v1150
      %v1152 = vmul.f32 %v1149, %v1151
      %v1153 = vadd.f32 %v1149, %v1152
      %vm1154 = vweird.f32 %v1148
      %vm1155 = vweird.f32 %v1149
      %vm1156 = vmor %vm1154, %vm1155
      %v1157 = vsel %vm1156, %v1149, %v1153
      %v1158 = vand.u32 2147483647, %v1148
      %vm1159 = vcmp.eq.f32.partialorder %v1158, 8.507059e+37
      %v1160 = vand.u32 %v1148, 2147483648
      %v1161 = vor.u32 1.1754944e-38, %v1160
      %v1162 = vsel %vm1159, %v1161, %v1157
      %v1163 = vmul.f32 %v1138, %v1162
      %v1164 = vmin.f32 %v1163, 1.0
      %v1165 = vmax.f32 %v1164, -1.0
      %v1166 = vmul.f32 %v758, %v758
      %v1167 = vmin.f32 16.0, %v1166
      %v1168 = vmul.f32 %v1167, 2.1237322e-06
      %v1169 = vadd.f32 %v1168, 0.00028619796
      %v1170 = vmul.f32 %v1167, %v1169
      %v1171 = vadd.f32 %v1170, 0.0036580483
      %v1172 = vmul.f32 %v1167, %v1171
      %v1173 = vadd.f32 %v1172, 0.05243302
      %v1174 = vmul.f32 %v1167, %v1173
      %v1175 = vadd.f32 %v1174, 0.18741608
      %v1176 = vmul.f32 %v1167, %v1175
      %v1177 = vadd.f32 %v1176, 1.1283791
      %v1178 = vmul.f32 %v758, %v1177
      %v1179 = vmul.f32 %v1167, 3.8918573e-05
      %v1180 = vadd.f32 %v1179, 0.001143296
      %v1181 = vmul.f32 %v1167, %v1180
      %v1182 = vadd.f32 %v1181, 0.014752088
      %v1183 = vmul.f32 %v1167, %v1182
      %v1184 = vadd.f32 %v1183, 0.112945676
      %v1185 = vmul.f32 %v1167, %v1184
      %v1186 = vadd.f32 %v1185, 0.4994258
      %v1187 = vmul.f32 %v1167, %v1186
      %v1188 = vadd.f32 %v1187, 1.0
      %v1189 = vrcp.pop %v1188
      %v1190 = vmul.f32 %v1188, %v1189
      %v1191 = vsub.f32 1.0, %v1190
      %v1192 = vmul.f32 %v1189, %v1191
      %v1193 = vadd.f32 %v1189, %v1192
      %vm1194 = vweird.f32 %v1188
      %vm1195 = vweird.f32 %v1189
      %vm1196 = vmor %vm1194, %vm1195
      %v1197 = vsel %vm1196, %v1189, %v1193
      %v1198 = vand.u32 2147483647, %v1188
      %vm1199 = vcmp.eq.f32.partialorder %v1198, 8.507059e+37
      %v1200 = vand.u32 %v1188, 2147483648
      %v1201 = vor.u32 1.1754944e-38, %v1200
      %v1202 = vsel %vm1199, %v1201, %v1197
      %v1203 = vmul.f32 %v1178, %v1202
      %v1204 = vmin.f32 %v1203, 1.0
      %v1205 = vmax.f32 %v1204, -1.0
      %v1206 = vmul.f32 %v759, %v759
      %v1207 = vmin.f32 16.0, %v1206
      %v1208 = vmul.f32 %v1207, 2.1237322e-06
      %v1209 = vadd.f32 %v1208, 0.00028619796
      %v1210 = vmul.f32 %v1207, %v1209
      %v1211 = vadd.f32 %v1210, 0.0036580483
      %v1212 = vmul.f32 %v1207, %v1211
      %v1213 = vadd.f32 %v1212, 0.05243302
      %v1214 = vmul.f32 %v1207, %v1213
      %v1215 = vadd.f32 %v1214, 0.18741608
      %v1216 = vmul.f32 %v1207, %v1215
      %v1217 = vadd.f32 %v1216, 1.1283791
      %v1218 = vmul.f32 %v759, %v1217
      %v1219 = vmul.f32 %v1207, 3.8918573e-05
      %v1220 = vadd.f32 %v1219, 0.001143296
      %v1221 = vmul.f32 %v1207, %v1220
      %v1222 = vadd.f32 %v1221, 0.014752088
      %v1223 = vmul.f32 %v1207, %v1222
      %v1224 = vadd.f32 %v1223, 0.112945676
      %v1225 = vmul.f32 %v1207, %v1224
      %v1226 = vadd.f32 %v1225, 0.4994258
      %v1227 = vmul.f32 %v1207, %v1226
      %v1228 = vadd.f32 %v1227, 1.0
      %v1229 = vrcp.pop %v1228
      %v1230 = vmul.f32 %v1228, %v1229
      %v1231 = vsub.f32 1.0, %v1230
      %v1232 = vmul.f32 %v1229, %v1231
      %v1233 = vadd.f32 %v1229, %v1232
      %vm1234 = vweird.f32 %v1228
      %vm1235 = vweird.f32 %v1229
      %vm1236 = vmor %vm1234, %vm1235
      %v1237 = vsel %vm1236, %v1229, %v1233
      %v1238 = vand.u32 2147483647, %v1228
      %vm1239 = vcmp.eq.f32.partialorder %v1238, 8.507059e+37
      %v1240 = vand.u32 %v1228, 2147483648
      %v1241 = vor.u32 1.1754944e-38, %v1240
      %v1242 = vsel %vm1239, %v1241, %v1237
      %v1243 = vmul.f32 %v1218, %v1242
      %v1244 = vmin.f32 %v1243, 1.0
      %v1245 = vmax.f32 %v1244, -1.0
      %v1246 = vmul.f32 %v760, %v760
      %v1247 = vmin.f32 16.0, %v1246
      %v1248 = vmul.f32 %v1247, 2.1237322e-06
      %v1249 = vadd.f32 %v1248, 0.00028619796
      %v1250 = vmul.f32 %v1247, %v1249
      %v1251 = vadd.f32 %v1250, 0.0036580483
      %v1252 = vmul.f32 %v1247, %v1251
      %v1253 = vadd.f32 %v1252, 0.05243302
      %v1254 = vmul.f32 %v1247, %v1253
      %v1255 = vadd.f32 %v1254, 0.18741608
      %v1256 = vmul.f32 %v1247, %v1255
      %v1257 = vadd.f32 %v1256, 1.1283791
      %v1258 = vmul.f32 %v760, %v1257
      %v1259 = vmul.f32 %v1247, 3.8918573e-05
      %v1260 = vadd.f32 %v1259, 0.001143296
      %v1261 = vmul.f32 %v1247, %v1260
      %v1262 = vadd.f32 %v1261, 0.014752088
      %v1263 = vmul.f32 %v1247, %v1262
      %v1264 = vadd.f32 %v1263, 0.112945676
      %v1265 = vmul.f32 %v1247, %v1264
      %v1266 = vadd.f32 %v1265, 0.4994258
      %v1267 = vmul.f32 %v1247, %v1266
      %v1268 = vadd.f32 %v1267, 1.0
      %v1269 = vrcp.pop %v1268
      %v1270 = vmul.f32 %v1268, %v1269
      %v1271 = vsub.f32 1.0, %v1270
      %v1272 = vmul.f32 %v1269, %v1271
      %v1273 = vadd.f32 %v1269, %v1272
      %vm1274 = vweird.f32 %v1268
      %vm1275 = vweird.f32 %v1269
      %vm1276 = vmor %vm1274, %vm1275
      %v1277 = vsel %vm1276, %v1269, %v1273
      %v1278 = vand.u32 2147483647, %v1268
      %vm1279 = vcmp.eq.f32.partialorder %v1278, 8.507059e+37
      %v1280 = vand.u32 %v1268, 2147483648
      %v1281 = vor.u32 1.1754944e-38, %v1280
      %v1282 = vsel %vm1279, %v1281, %v1277
      %v1283 = vmul.f32 %v1258, %v1282
      %v1284 = vmin.f32 %v1283, 1.0
      %v1285 = vmax.f32 %v1284, -1.0
      %v1286 = vmul.f32 %v761, %v761
      %v1287 = vmin.f32 16.0, %v1286
      %v1288 = vmul.f32 %v1287, 2.1237322e-06
      %v1289 = vadd.f32 %v1288, 0.00028619796
      %v1290 = vmul.f32 %v1287, %v1289
      %v1291 = vadd.f32 %v1290, 0.0036580483
      %v1292 = vmul.f32 %v1287, %v1291
      %v1293 = vadd.f32 %v1292, 0.05243302
      %v1294 = vmul.f32 %v1287, %v1293
      %v1295 = vadd.f32 %v1294, 0.18741608
      %v1296 = vmul.f32 %v1287, %v1295
      %v1297 = vadd.f32 %v1296, 1.1283791
      %v1298 = vmul.f32 %v761, %v1297
      %v1299 = vmul.f32 %v1287, 3.8918573e-05
      %v1300 = vadd.f32 %v1299, 0.001143296
      %v1301 = vmul.f32 %v1287, %v1300
      %v1302 = vadd.f32 %v1301, 0.014752088
      %v1303 = vmul.f32 %v1287, %v1302
      %v1304 = vadd.f32 %v1303, 0.112945676
      %v1305 = vmul.f32 %v1287, %v1304
      %v1306 = vadd.f32 %v1305, 0.4994258
      %v1307 = vmul.f32 %v1287, %v1306
      %v1308 = vadd.f32 %v1307, 1.0
      %v1309 = vrcp.pop %v1308
      %v1310 = vmul.f32 %v1308, %v1309
      %v1311 = vsub.f32 1.0, %v1310
      %v1312 = vmul.f32 %v1309, %v1311
      %v1313 = vadd.f32 %v1309, %v1312
      %vm1314 = vweird.f32 %v1308
      %vm1315 = vweird.f32 %v1309
      %vm1316 = vmor %vm1314, %vm1315
      %v1317 = vsel %vm1316, %v1309, %v1313
      %v1318 = vand.u32 2147483647, %v1308
      %vm1319 = vcmp.eq.f32.partialorder %v1318, 8.507059e+37
      %v1320 = vand.u32 %v1308, 2147483648
      %v1321 = vor.u32 1.1754944e-38, %v1320
      %v1322 = vsel %vm1319, %v1321, %v1317
      %v1323 = vmul.f32 %v1298, %v1322
      %v1324 = vmin.f32 %v1323, 1.0
      %v1325 = vmax.f32 %v1324, -1.0
      %v1326 = vmul.f32 %v762, %v762
      %v1327 = vmin.f32 16.0, %v1326
      %v1328 = vmul.f32 %v1327, 2.1237322e-06
      %v1329 = vadd.f32 %v1328, 0.00028619796
      %v1330 = vmul.f32 %v1327, %v1329
      %v1331 = vadd.f32 %v1330, 0.0036580483
      %v1332 = vmul.f32 %v1327, %v1331
      %v1333 = vadd.f32 %v1332, 0.05243302
      %v1334 = vmul.f32 %v1327, %v1333
      %v1335 = vadd.f32 %v1334, 0.18741608
      %v1336 = vmul.f32 %v1327, %v1335
      %v1337 = vadd.f32 %v1336, 1.1283791
      %v1338 = vmul.f32 %v762, %v1337
      %v1339 = vmul.f32 %v1327, 3.8918573e-05
      %v1340 = vadd.f32 %v1339, 0.001143296
      %v1341 = vmul.f32 %v1327, %v1340
      %v1342 = vadd.f32 %v1341, 0.014752088
      %v1343 = vmul.f32 %v1327, %v1342
      %v1344 = vadd.f32 %v1343, 0.112945676
      %v1345 = vmul.f32 %v1327, %v1344
      %v1346 = vadd.f32 %v1345, 0.4994258
      %v1347 = vmul.f32 %v1327, %v1346
      %v1348 = vadd.f32 %v1347, 1.0
      %v1349 = vrcp.pop %v1348
      %v1350 = vmul.f32 %v1348, %v1349
      %v1351 = vsub.f32 1.0, %v1350
      %v1352 = vmul.f32 %v1349, %v1351
      %v1353 = vadd.f32 %v1349, %v1352
      %vm1354 = vweird.f32 %v1348
      %vm1355 = vweird.f32 %v1349
      %vm1356 = vmor %vm1354, %vm1355
      %v1357 = vsel %vm1356, %v1349, %v1353
      %v1358 = vand.u32 2147483647, %v1348
      %vm1359 = vcmp.eq.f32.partialorder %v1358, 8.507059e+37
      %v1360 = vand.u32 %v1348, 2147483648
      %v1361 = vor.u32 1.1754944e-38, %v1360
      %v1362 = vsel %vm1359, %v1361, %v1357
      %v1363 = vmul.f32 %v1338, %v1362
      %v1364 = vmin.f32 %v1363, 1.0
      %v1365 = vmax.f32 %v1364, -1.0
      %v1366 = vmul.f32 %v763, %v763
      %v1367 = vmin.f32 16.0, %v1366
      %v1368 = vmul.f32 %v1367, 2.1237322e-06
      %v1369 = vadd.f32 %v1368, 0.00028619796
      %v1370 = vmul.f32 %v1367, %v1369
      %v1371 = vadd.f32 %v1370, 0.0036580483
      %v1372 = vmul.f32 %v1367, %v1371
      %v1373 = vadd.f32 %v1372, 0.05243302
      %v1374 = vmul.f32 %v1367, %v1373
      %v1375 = vadd.f32 %v1374, 0.18741608
      %v1376 = vmul.f32 %v1367, %v1375
      %v1377 = vadd.f32 %v1376, 1.1283791
      %v1378 = vmul.f32 %v763, %v1377
      %v1379 = vmul.f32 %v1367, 3.8918573e-05
      %v1380 = vadd.f32 %v1379, 0.001143296
      %v1381 = vmul.f32 %v1367, %v1380
      %v1382 = vadd.f32 %v1381, 0.014752088
      %v1383 = vmul.f32 %v1367, %v1382
      %v1384 = vadd.f32 %v1383, 0.112945676
      %v1385 = vmul.f32 %v1367, %v1384
      %v1386 = vadd.f32 %v1385, 0.4994258
      %v1387 = vmul.f32 %v1367, %v1386
      %v1388 = vadd.f32 %v1387, 1.0
      %v1389 = vrcp.pop %v1388
      %v1390 = vmul.f32 %v1388, %v1389
      %v1391 = vsub.f32 1.0, %v1390
      %v1392 = vmul.f32 %v1389, %v1391
      %v1393 = vadd.f32 %v1389, %v1392
      %vm1394 = vweird.f32 %v1388
      %vm1395 = vweird.f32 %v1389
      %vm1396 = vmor %vm1394, %vm1395
      %v1397 = vsel %vm1396, %v1389, %v1393
      %v1398 = vand.u32 2147483647, %v1388
      %vm1399 = vcmp.eq.f32.partialorder %v1398, 8.507059e+37
      %v1400 = vand.u32 %v1388, 2147483648
      %v1401 = vor.u32 1.1754944e-38, %v1400
      %v1402 = vsel %vm1399, %v1401, %v1397
      %v1403 = vmul.f32 %v1378, %v1402
      %v1404 = vmin.f32 %v1403, 1.0
      %v1405 = vmax.f32 %v1404, -1.0
      %v1406 = vmul.f32 %v764, %v764
      %v1407 = vmin.f32 16.0, %v1406
      %v1408 = vmul.f32 %v1407, 2.1237322e-06
      %v1409 = vadd.f32 %v1408, 0.00028619796
      %v1410 = vmul.f32 %v1407, %v1409
      %v1411 = vadd.f32 %v1410, 0.0036580483
      %v1412 = vmul.f32 %v1407, %v1411
      %v1413 = vadd.f32 %v1412, 0.05243302
      %v1414 = vmul.f32 %v1407, %v1413
      %v1415 = vadd.f32 %v1414, 0.18741608
      %v1416 = vmul.f32 %v1407, %v1415
      %v1417 = vadd.f32 %v1416, 1.1283791
      %v1418 = vmul.f32 %v764, %v1417
      %v1419 = vmul.f32 %v1407, 3.8918573e-05
      %v1420 = vadd.f32 %v1419, 0.001143296
      %v1421 = vmul.f32 %v1407, %v1420
      %v1422 = vadd.f32 %v1421, 0.014752088
      %v1423 = vmul.f32 %v1407, %v1422
      %v1424 = vadd.f32 %v1423, 0.112945676
      %v1425 = vmul.f32 %v1407, %v1424
      %v1426 = vadd.f32 %v1425, 0.4994258
      %v1427 = vmul.f32 %v1407, %v1426
      %v1428 = vadd.f32 %v1427, 1.0
      %v1429 = vrcp.pop %v1428
      %v1430 = vmul.f32 %v1428, %v1429
      %v1431 = vsub.f32 1.0, %v1430
      %v1432 = vmul.f32 %v1429, %v1431
      %v1433 = vadd.f32 %v1429, %v1432
      %vm1434 = vweird.f32 %v1428
      %vm1435 = vweird.f32 %v1429
      %vm1436 = vmor %vm1434, %vm1435
      %v1437 = vsel %vm1436, %v1429, %v1433
      %v1438 = vand.u32 2147483647, %v1428
      %vm1439 = vcmp.eq.f32.partialorder %v1438, 8.507059e+37
      %v1440 = vand.u32 %v1428, 2147483648
      %v1441 = vor.u32 1.1754944e-38, %v1440
      %v1442 = vsel %vm1439, %v1441, %v1437
      %v1443 = vmul.f32 %v1418, %v1442
      %v1444 = vmin.f32 %v1443, 1.0
      %v1445 = vmax.f32 %v1444, -1.0
      %v1446 = vmul.f32 %v765, %v765
      %v1447 = vmin.f32 16.0, %v1446
      %v1448 = vmul.f32 %v1447, 2.1237322e-06
      %v1449 = vadd.f32 %v1448, 0.00028619796
      %v1450 = vmul.f32 %v1447, %v1449
      %v1451 = vadd.f32 %v1450, 0.0036580483
      %v1452 = vmul.f32 %v1447, %v1451
      %v1453 = vadd.f32 %v1452, 0.05243302
      %v1454 = vmul.f32 %v1447, %v1453
      %v1455 = vadd.f32 %v1454, 0.18741608
      %v1456 = vmul.f32 %v1447, %v1455
      %v1457 = vadd.f32 %v1456, 1.1283791
      %v1458 = vmul.f32 %v765, %v1457
      %v1459 = vmul.f32 %v1447, 3.8918573e-05
      %v1460 = vadd.f32 %v1459, 0.001143296
      %v1461 = vmul.f32 %v1447, %v1460
      %v1462 = vadd.f32 %v1461, 0.014752088
      %v1463 = vmul.f32 %v1447, %v1462
      %v1464 = vadd.f32 %v1463, 0.112945676
      %v1465 = vmul.f32 %v1447, %v1464
      %v1466 = vadd.f32 %v1465, 0.4994258
      %v1467 = vmul.f32 %v1447, %v1466
      %v1468 = vadd.f32 %v1467, 1.0
      %v1469 = vrcp.pop %v1468
      %v1470 = vmul.f32 %v1468, %v1469
      %v1471 = vsub.f32 1.0, %v1470
      %v1472 = vmul.f32 %v1469, %v1471
      %v1473 = vadd.f32 %v1469, %v1472
      %vm1474 = vweird.f32 %v1468
      %vm1475 = vweird.f32 %v1469
      %vm1476 = vmor %vm1474, %vm1475
      %v1477 = vsel %vm1476, %v1469, %v1473
      %v1478 = vand.u32 2147483647, %v1468
      %vm1479 = vcmp.eq.f32.partialorder %v1478, 8.507059e+37
      %v1480 = vand.u32 %v1468, 2147483648
      %v1481 = vor.u32 1.1754944e-38, %v1480
      %v1482 = vsel %vm1479, %v1481, %v1477
      %v1483 = vmul.f32 %v1458, %v1482
      %v1484 = vmin.f32 %v1483, 1.0
      %v1485 = vmax.f32 %v1484, -1.0
      %v1486 = vadd.f32 %v805, 1.0
      %v1487 = vadd.f32 %v845, 1.0
      %v1488 = vadd.f32 %v885, 1.0
      %v1489 = vadd.f32 %v925, 1.0
      %v1490 = vadd.f32 %v965, 1.0
      %v1491 = vadd.f32 %v1005, 1.0
      %v1492 = vadd.f32 %v1045, 1.0
      %v1493 = vadd.f32 %v1085, 1.0
      %v1494 = vadd.f32 %v1125, 1.0
      %v1495 = vadd.f32 %v1165, 1.0
      %v1496 = vadd.f32 %v1205, 1.0
      %v1497 = vadd.f32 %v1245, 1.0
      %v1498 = vadd.f32 %v1285, 1.0
      %v1499 = vadd.f32 %v1325, 1.0
      %v1500 = vadd.f32 %v1365, 1.0
      %v1501 = vadd.f32 %v1405, 1.0
      %v1502 = vadd.f32 %v1445, 1.0
      %v1503 = vadd.f32 %v1485, 1.0
      %v1504 = vmul.f32 %v730, %v1486
      %v1505 = vmul.f32 %v731, %v1487
      %v1506 = vmul.f32 %v732, %v1488
      %v1507 = vmul.f32 %v733, %v1489
      %v1508 = vmul.f32 %v734, %v1490
      %v1509 = vmul.f32 %v735, %v1491
      %v1510 = vmul.f32 %v736, %v1492
      %v1511 = vmul.f32 %v737, %v1493
      %v1512 = vmul.f32 %v738, %v1494
      %v1513 = vmul.f32 %v739, %v1495
      %v1514 = vmul.f32 %v740, %v1496
      %v1515 = vmul.f32 %v741, %v1497
      %v1516 = vmul.f32 %v742, %v1498
      %v1517 = vmul.f32 %v743, %v1499
      %v1518 = vmul.f32 %v744, %v1500
      %v1519 = vmul.f32 %v745, %v1501
      %v1520 = vmul.f32 %v746, %v1502
      %v1521 = vmul.f32 %v747, %v1503
      %v1522 = vpack.c.bf16 %v1504, %v1504
      %v1523 = vpack.c.bf16 %v1505, %v1505
      %v1524 = vpack.c.bf16 %v1506, %v1506
      %v1525 = vpack.c.bf16 %v1507, %v1507
      %v1526 = vpack.c.bf16 %v1508, %v1508
      %v1527 = vpack.c.bf16 %v1509, %v1509
      %v1528 = vpack.c.bf16 %v1510, %v1510
      %v1529 = vpack.c.bf16 %v1511, %v1511
      %v1530 = vpack.c.bf16 %v1512, %v1512
      %v1531 = vpack.c.bf16 %v1513, %v1513
      %v1532 = vpack.c.bf16 %v1514, %v1514
      %v1533 = vpack.c.bf16 %v1515, %v1515
      %v1534 = vpack.c.bf16 %v1516, %v1516
      %v1535 = vpack.c.bf16 %v1517, %v1517
      %v1536 = vpack.c.bf16 %v1518, %v1518
      %v1537 = vpack.c.bf16 %v1519, %v1519
      %v1538 = vpack.c.bf16 %v1520, %v1520
      %v1539 = vpack.c.bf16 %v1521, %v1521
      %vm1540 = vcmask 257024
      %1541 = vst.msk [vmem:[%s342] sm:$0xf] %vm1540, %v1522
      %1542 = vst.msk [vmem:[%s342 + $0x4] sm:$0xf] %vm1540, %v1523
      %1543 = vst.msk [vmem:[%s342 + $0x8] sm:$0xf] %vm1540, %v1524
      %1544 = vst.msk [vmem:[%s342 + $0xc] sm:$0xf] %vm1540, %v1525
      %1545 = vst.msk [vmem:[%s342 + $0x10] sm:$0xf] %vm1540, %v1526
      %1546 = vst.msk [vmem:[%s342 + $0x14] sm:$0xf] %vm1540, %v1527
      %1547 = vst.msk [vmem:[%s342 + $0x18] sm:$0xf] %vm1540, %v1528
      %1548 = vst.msk [vmem:[%s342 + $0x1c] sm:$0xf] %vm1540, %v1529
      %1549 = vst.msk [vmem:[%s342 + $0x20] sm:$0xf] %vm1540, %v1530
      %1550 = vst.msk [vmem:[%s342 + $0x24] sm:$0xf] %vm1540, %v1531
      %1551 = vst.msk [vmem:[%s342 + $0x28] sm:$0xf] %vm1540, %v1532
      %1552 = vst.msk [vmem:[%s342 + $0x2c] sm:$0xf] %vm1540, %v1533
      %1553 = vst.msk [vmem:[%s342 + $0x30] sm:$0xf] %vm1540, %v1534
      %1554 = vst.msk [vmem:[%s342 + $0x34] sm:$0xf] %vm1540, %v1535
      %1555 = vst.msk [vmem:[%s342 + $0x38] sm:$0xf] %vm1540, %v1536
      %1556 = vst.msk [vmem:[%s342 + $0x3c] sm:$0xf] %vm1540, %v1537
      %1557 = vst.msk [vmem:[%s342 + $0x40] sm:$0xf] %vm1540, %v1538
      %1558 = vst.msk [vmem:[%s342 + $0x44] sm:$0xf] %vm1540, %v1539
      %s1559 = smul.u32 18, %s19
      %p1560 = scmp.lt.s32.totalorder %s1559, 143
      %s1561 = scalar_select %p1560, %s1559, 143
      %s1562 = smul.addr %s1561, 4
      %s1563 = scalar_lea.vmem %s7, %s1562
      // Predicated region
      $region45: #{dafno2d_forward.7} parent=43 // pred_check
        %p1564 = pneg %p187
      $region46: #{dafno2d_forward.7} parent=43 // pred_check_branch
        %1566 = sbr.rel (%p1564) target = $region48
      $region47: #{dafno2d_forward.7} parent=43 // pred_region
        %s1567 = smul.u32 18, %s19
      $region48: #{dafno2d_forward.7} parent=43 // pred_fallthru
        _
    $region44: #{dafno2d_forward.7} parent=5 // pred_fallthru
      _
    %p1568 = scmp.le.s32.totalorder 2, %s14
    // Predicated region
    $region49: #{dafno2d_forward.7} parent=5 // pred_check
      %p1569 = pneg %p1568
    $region50: #{dafno2d_forward.7} parent=5 // pred_check_branch
      %1571 = sbr.rel (%p1569) target = $region52
    $region51: #{dafno2d_forward.7} parent=5 // pred_region
      %s1572 = ssub.s32 %s14, 2
      // Predicated region
      $region53: #{dafno2d_forward.7} parent=51 // pred_check
        %p1573 = pneg %p193
      $region54: #{dafno2d_forward.7} parent=51 // pred_check_branch
        %1575 = sbr.rel (%p1573) target = $region56
      $region55: #{dafno2d_forward.7} parent=51 // pred_region
        %s1576 = smul.u32 18, %s20
        %p1577 = scmp.lt.s32.totalorder %s1576, 143
        %s1578 = scalar_select %p1577, %s1576, 143
        %s1579 = smul.addr %s1578, 4
        %s1580 = scalar_lea.vmem %s7, %s1579
      $region56: #{dafno2d_forward.7} parent=51 // pred_fallthru
        _
    $region52: #{dafno2d_forward.7} parent=5 // pred_fallthru
      _
  $region6: #{dafno2d_forward.7} parent=0 // loop_footer
    %s18 = sadd.s32 1, %s14
  $region7: #{dafno2d_forward.7} parent=0 // loop_footer_branch
    %13 = sbr.rel target = $region3
  $region8: #{dafno2d_forward.7} parent=0 // loop_exit
    _

// kernel: dafno2d_forward.10
$region0: #{dafno2d_forward.10}
  #allocation0 [shape = 'u32[]', space=smem, size = 0x4, offset = 0x4, fixed_abs, tag = 'smem constant byte address 0x4 - core index']
  #allocation1 [shape = 'u32[72,128]{1,0:T(1,128)}', space=vmem, size = 0x9000, scoped, tag = 'internal scratch']
  #allocation2 [shape = 's32[1]{0}', space=sflag, size = 0x4, scoped, tag = 'scoped memory for dafno2d_forward.10']
  #allocation3 [shape = 's32[1]{0:T(128)S(6)}', space=smem, size = 0x200, scoped, tag = 'prefetched SMEM operand 0']
  %s0 = inlined_call_operand.<no memory space> [shape: s32[1], index: 0, kind: input, shape index: {}]
  %s1 = inlined_call_operand.vmem [shape: bf16[1152,32], index: 1, kind: input, shape index: {}]
  %s2 = inlined_call_operand.vmem [shape: f32[1152,32], index: 2, kind: input, shape index: {}]
  %s3 = inlined_call_operand.vmem [shape: f32[4,1152,32], index: 3, kind: input, shape index: {}]
  %s4 = inlined_call_operand.vmem [shape: f32[1152,1], index: 4, kind: input, shape index: {}]
  %s5 = inlined_call_operand.vmem [shape: f32[32,32], index: 5, kind: input, shape index: {}]
  %s6 = inlined_call_operand.vmem [shape: f32[1,32], index: 6, kind: input, shape index: {}]
  %s7 = inlined_call_operand.vmem [shape: bf16[1152,32], index: 7, kind: output, shape index: {}]
  %s8 = sld [smem:[#allocation0]]
  $region57: #{dafno2d_forward.10} parent=0
    _
  %s10 = ssub.s32 1, %s8
  %s11 = scalar_select 0, %s10, %s8
  %12 = sst [smem:[#allocation3]] %s0
  loop: start=0, step=1, limit=10
  $region2: #{dafno2d_forward.10} parent=0 // loop_pre_header
    _
  $region3: #{dafno2d_forward.10} parent=0 // loop_header
    %s14 = sphi 0, %s18
    %p15 = scmp.ge.s32.totalorder %s14, 10
    %s24 = sphi 0, %s26
    %s27 = sphi 0, %s24
    %s28 = sphi 0, %s27
    %s44 = sphi 0, %s28
    %s50 = sphi 0, %s52
    %s53 = sphi 0, %s50
    %s54 = sphi 0, %s53
    %s70 = sphi 0, %s54
    %s80 = sphi 0, %s82
    %s83 = sphi 0, %s80
    %s84 = sphi 0, %s83
    %s100 = sphi 0, %s84
    %s106 = sphi 0, %s108
    %s109 = sphi 0, %s106
    %s110 = sphi 0, %s109
    %s126 = sphi 0, %s110
    %s130 = sphi 0, %s130
    %s132 = sphi 0, %s130
    %s133 = sphi 0, %s132
    %s147 = sphi 0, %s133
    %s151 = sphi 0, %s151
    %s153 = sphi 0, %s151
    %s154 = sphi 0, %s153
    %s168 = sphi 0, %s154
    %s174 = sphi 0, %s176
    %s177 = sphi 0, %s174
    %s178 = sphi 0, %s177
    %s194 = sphi 0, %s178
  $region4: #{dafno2d_forward.10} parent=0 // loop_header_branch
    %17 = sbr.rel (%p15) target = $region8
  $region5: #{dafno2d_forward.10} parent=0 // loop_body
    %s19 = ssub.s32 %s14, 1
    %s20 = ssub.s32 %s14, 2
    %s21 = sadd.s32 %s14, 1
    %s22 = ssub.s32 %s14, %s21
    %p23 = scmp.eq.s32.totalorder %s22, 0
    %s25 = sadd.s32 %s24, 1
    %s26 = scalar_select %p23, %s24, %s25
    %p29 = pneg %p23
    %p30 = scmp.eq.s32.totalorder %s14, 7
    %p31 = por %p29, %p30
    %p32 = scmp.ne.s32.totalorder %s24, %s27
    %p33 = scmp.eq.s32.totalorder %s14, 0
    %p34 = por %p32, %p33
    %p35 = scmp.ne.s32.totalorder %s24, %s27
    %p36 = scmp.eq.s32.totalorder %s19, 7
    %p37 = por %p35, %p36
    %p38 = scmp.ne.s32.totalorder %s27, %s28
    %p39 = scmp.eq.s32.totalorder %s19, 0
    %p40 = por %p38, %p39
    %p41 = scmp.ne.s32.totalorder %s27, %s28
    %p42 = scmp.eq.s32.totalorder %s20, 7
    %p43 = por %p41, %p42
    %p45 = scmp.ne.s32.totalorder %s28, %s44
    %p46 = scmp.eq.s32.totalorder %s20, 0
    %p47 = por %p45, %p46
    %s48 = ssub.s32 %s14, %s21
    %p49 = scmp.eq.s32.totalorder %s48, 0
    %s51 = sadd.s32 %s50, 1
    %s52 = scalar_select %p49, %s50, %s51
    %p55 = pneg %p49
    %p56 = scmp.eq.s32.totalorder %s14, 7
    %p57 = por %p55, %p56
    %p58 = scmp.ne.s32.totalorder %s50, %s53
    %p59 = scmp.eq.s32.totalorder %s14, 0
    %p60 = por %p58, %p59
    %p61 = scmp.ne.s32.totalorder %s50, %s53
    %p62 = scmp.eq.s32.totalorder %s19, 7
    %p63 = por %p61, %p62
    %p64 = scmp.ne.s32.totalorder %s53, %s54
    %p65 = scmp.eq.s32.totalorder %s19, 0
    %p66 = por %p64, %p65
    %p67 = scmp.ne.s32.totalorder %s53, %s54
    %p68 = scmp.eq.s32.totalorder %s20, 7
    %p69 = por %p67, %p68
    %p71 = scmp.ne.s32.totalorder %s54, %s70
    %p72 = scmp.eq.s32.totalorder %s20, 0
    %p73 = por %p71, %p72
    %s74 = sld [smem:[#allocation3]]
    %s75 = sld [smem:[#allocation3]]
    %s76 = ssub.s32 %s74, %s75
    %s77 = ssub.s32 %s14, %s21
    %s78 = sor.u32 %s76, %s77
    %p79 = scmp.eq.s32.totalorder %s78, 0
    %s81 = sadd.s32 %s80, 1
    %s82 = scalar_select %p79, %s80, %s81
    %p85 = pneg %p79
    %p86 = scmp.eq.s32.totalorder %s14, 7
    %p87 = por %p85, %p86
    %p88 = scmp.ne.s32.totalorder %s80, %s83
    %p89 = scmp.eq.s32.totalorder %s14, 0
    %p90 = por %p88, %p89
    %p91 = scmp.ne.s32.totalorder %s80, %s83
    %p92 = scmp.eq.s32.totalorder %s19, 7
    %p93 = por %p91, %p92
    %p94 = scmp.ne.s32.totalorder %s83, %s84
    %p95 = scmp.eq.s32.totalorder %s19, 0
    %p96 = por %p94, %p95
    %p97 = scmp.ne.s32.totalorder %s83, %s84
    %p98 = scmp.eq.s32.totalorder %s20, 7
    %p99 = por %p97, %p98
    %p101 = scmp.ne.s32.totalorder %s84, %s100
    %p102 = scmp.eq.s32.totalorder %s20, 0
    %p103 = por %p101, %p102
    %s104 = ssub.s32 %s14, %s21
    %p105 = scmp.eq.s32.totalorder %s104, 0
    %s107 = sadd.s32 %s106, 1
    %s108 = scalar_select %p105, %s106, %s107
    %p111 = pneg %p105
    %p112 = scmp.eq.s32.totalorder %s14, 7
    %p113 = por %p111, %p112
    %p114 = scmp.ne.s32.totalorder %s106, %s109
    %p115 = scmp.eq.s32.totalorder %s14, 0
    %p116 = por %p114, %p115
    %p117 = scmp.ne.s32.totalorder %s106, %s109
    %p118 = scmp.eq.s32.totalorder %s19, 7
    %p119 = por %p117, %p118
    %p120 = scmp.ne.s32.totalorder %s109, %s110
    %p121 = scmp.eq.s32.totalorder %s19, 0
    %p122 = por %p120, %p121
    %p123 = scmp.ne.s32.totalorder %s109, %s110
    %p124 = scmp.eq.s32.totalorder %s20, 7
    %p125 = por %p123, %p124
    %p127 = scmp.ne.s32.totalorder %s110, %s126
    %p128 = scmp.eq.s32.totalorder %s20, 0
    %p129 = por %p127, %p128
    %s131 = sadd.s32 %s130, 1
    %p134 = scmp.eq.s32.totalorder %s14, 7
    %p135 = scmp.ne.s32.totalorder %s130, %s132
    %p136 = scmp.eq.s32.totalorder %s14, 0
    %p137 = por %p135, %p136
    %p138 = scmp.ne.s32.totalorder %s130, %s132
    %p139 = scmp.eq.s32.totalorder %s19, 7
    %p140 = por %p138, %p139
    %p141 = scmp.ne.s32.totalorder %s132, %s133
    %p142 = scmp.eq.s32.totalorder %s19, 0
    %p143 = por %p141, %p142
    %p144 = scmp.ne.s32.totalorder %s132, %s133
    %p145 = scmp.eq.s32.totalorder %s20, 7
    %p146 = por %p144, %p145
    %p148 = scmp.ne.s32.totalorder %s133, %s147
    %p149 = scmp.eq.s32.totalorder %s20, 0
    %p150 = por %p148, %p149
    %s152 = sadd.s32 %s151, 1
    %p155 = scmp.eq.s32.totalorder %s14, 7
    %p156 = scmp.ne.s32.totalorder %s151, %s153
    %p157 = scmp.eq.s32.totalorder %s14, 0
    %p158 = por %p156, %p157
    %p159 = scmp.ne.s32.totalorder %s151, %s153
    %p160 = scmp.eq.s32.totalorder %s19, 7
    %p161 = por %p159, %p160
    %p162 = scmp.ne.s32.totalorder %s153, %s154
    %p163 = scmp.eq.s32.totalorder %s19, 0
    %p164 = por %p162, %p163
    %p165 = scmp.ne.s32.totalorder %s153, %s154
    %p166 = scmp.eq.s32.totalorder %s20, 7
    %p167 = por %p165, %p166
    %p169 = scmp.ne.s32.totalorder %s154, %s168
    %p170 = scmp.eq.s32.totalorder %s20, 0
    %p171 = por %p169, %p170
    %s172 = ssub.s32 %s14, %s21
    %p173 = scmp.eq.s32.totalorder %s172, 0
    %s175 = sadd.s32 %s174, 1
    %s176 = scalar_select %p173, %s174, %s175
    %p179 = pneg %p173
    %p180 = scmp.eq.s32.totalorder %s14, 7
    %p181 = por %p179, %p180
    %p182 = scmp.ne.s32.totalorder %s174, %s177
    %p183 = scmp.eq.s32.totalorder %s14, 0
    %p184 = por %p182, %p183
    %p185 = scmp.ne.s32.totalorder %s174, %s177
    %p186 = scmp.eq.s32.totalorder %s19, 7
    %p187 = por %p185, %p186
    %p188 = scmp.ne.s32.totalorder %s177, %s178
    %p189 = scmp.eq.s32.totalorder %s19, 0
    %p190 = por %p188, %p189
    %p191 = scmp.ne.s32.totalorder %s177, %s178
    %p192 = scmp.eq.s32.totalorder %s20, 7
    %p193 = por %p191, %p192
    %p195 = scmp.ne.s32.totalorder %s178, %s194
    %p196 = scmp.eq.s32.totalorder %s20, 0
    %p197 = por %p195, %p196
    %p198 = scmp.le.s32.totalorder 1, %s14
    %p199 = scmp.lt.s32.totalorder %s14, 9
    %p200 = pnand %p198, %p199
    %p201 = pneg %p200
    // Predicated region
    $region9: #{dafno2d_forward.10} parent=5 // pred_check
      _
    $region10: #{dafno2d_forward.10} parent=5 // pred_check_branch
      %203 = sbr.rel (%p200) target = $region12
    $region11: #{dafno2d_forward.10} parent=5 // pred_region
      %s204 = ssub.s32 %s14, 1
      // Predicated region
      $region13: #{dafno2d_forward.10} parent=11 // pred_check
        %p205 = pneg %p143
      $region14: #{dafno2d_forward.10} parent=11 // pred_check_branch
        %207 = sbr.rel (%p205) target = $region16
      $region15: #{dafno2d_forward.10} parent=11 // pred_region
        _
      $region16: #{dafno2d_forward.10} parent=11 // pred_fallthru
        _
      // Predicated region
      $region17: #{dafno2d_forward.10} parent=11 // pred_check
        %p208 = pneg %p164
      $region18: #{dafno2d_forward.10} parent=11 // pred_check_branch
        %210 = sbr.rel (%p208) target = $region20
      $region19: #{dafno2d_forward.10} parent=11 // pred_region
        _
      $region20: #{dafno2d_forward.10} parent=11 // pred_fallthru
        _
    $region12: #{dafno2d_forward.10} parent=5 // pred_fallthru
      _
    %p211 = scmp.lt.s32.totalorder %s14, 8
    // Predicated region
    $region21: #{dafno2d_forward.10} parent=5 // pred_check
      %p212 = pneg %p211
    $region22: #{dafno2d_forward.10} parent=5 // pred_check_branch
      %214 = sbr.rel (%p212) target = $region24
    $region23: #{dafno2d_forward.10} parent=5 // pred_region
      // Predicated region
      $region25: #{dafno2d_forward.10} parent=23 // pred_check
        %p215 = pneg %p34
      $region26: #{dafno2d_forward.10} parent=23 // pred_check_branch
        %217 = sbr.rel (%p215) target = $region28
      $region27: #{dafno2d_forward.10} parent=23 // pred_region
        %s218 = smul.u32 18, %s14
        %p219 = scmp.lt.s32.totalorder %s218, 143
        %s220 = scalar_select %p219, %s218, 143
        %s221 = smul.addr %s220, 4
        %s222 = scalar_lea.vmem %s1, %s221
        %s223 = smul.u32 18, %s14
      $region28: #{dafno2d_forward.10} parent=23 // pred_fallthru
        _
      // Predicated region
      $region29: #{dafno2d_forward.10} parent=23 // pred_check
        %p224 = pneg %p60
      $region30: #{dafno2d_forward.10} parent=23 // pred_check_branch
        %226 = sbr.rel (%p224) target = $region32
      $region31: #{dafno2d_forward.10} parent=23 // pred_region
        %s227 = smul.u32 18, %s14
        %p228 = scmp.lt.s32.totalorder %s227, 143
        %s229 = scalar_select %p228, %s227, 143
        %s230 = smul.addr %s229, 8
        %s231 = scalar_lea.vmem %s2, %s230
        %s232 = smul.u32 18, %s14
      $region32: #{dafno2d_forward.10} parent=23 // pred_fallthru
        _
      // Predicated region
      $region33: #{dafno2d_forward.10} parent=23 // pred_check
        %p233 = pneg %p90
      $region34: #{dafno2d_forward.10} parent=23 // pred_check_branch
        %235 = sbr.rel (%p233) target = $region36
      $region35: #{dafno2d_forward.10} parent=23 // pred_region
        %s236 = sld [smem:[#allocation3]]
        %s237 = smul.u32 18, %s14
        %p238 = scmp.lt.s32.totalorder %s236, 3
        %s239 = scalar_select %p238, %s236, 3
        %p240 = scmp.lt.s32.totalorder %s237, 143
        %s241 = scalar_select %p240, %s237, 143
        %s242 = smul.addr %s239, 144
        %s243 = sadd.s32 %s241, %s242
        %s244 = smul.addr %s243, 8
        %s245 = scalar_lea.vmem %s3, %s244
        %s246 = sld [smem:[#allocation3]]
        %s247 = smul.u32 18, %s14
      $region36: #{dafno2d_forward.10} parent=23 // pred_fallthru
        _
      // Predicated region
      $region37: #{dafno2d_forward.10} parent=23 // pred_check
        %p248 = pneg %p116
      $region38: #{dafno2d_forward.10} parent=23 // pred_check_branch
        %250 = sbr.rel (%p248) target = $region40
      $region39: #{dafno2d_forward.10} parent=23 // pred_region
        %s251 = smul.u32 18, %s14
        %p252 = scmp.lt.s32.totalorder %s251, 143
        %s253 = scalar_select %p252, %s251, 143
        %s254 = smul.addr %s253, 8
        %s255 = scalar_lea.vmem %s4, %s254
        %s256 = smul.u32 18, %s14
      $region40: #{dafno2d_forward.10} parent=23 // pred_fallthru
        _
    $region24: #{dafno2d_forward.10} parent=5 // pred_fallthru
      _
    %p257 = scmp.le.s32.totalorder 1, %s14
    %p258 = scmp.lt.s32.totalorder %s14, 9
    %p259 = pnand %p257, %p258
    %p260 = pneg %p259
    // Predicated region
    $region41: #{dafno2d_forward.10} parent=5 // pred_check
      _
    $region42: #{dafno2d_forward.10} parent=5 // pred_check_branch
      %262 = sbr.rel (%p259) target = $region44
    $region43: #{dafno2d_forward.10} parent=5 // pred_region
      %s263 = ssub.s32 %s14, 1
      %s264 = smul.u32 18, %s19
      %p265 = scmp.lt.s32.totalorder %s264, 143
      %s266 = scalar_select %p265, %s264, 143
      %s267 = smul.addr %s266, 4
      %s268 = scalar_lea.vmem %s1, %s267
      %p269 = pneg %p40
      %p270 = pneg %p37
      %s271 = smul.u32 18, %s19
      %p272 = scmp.lt.s32.totalorder %s271, 143
      %s273 = scalar_select %p272, %s271, 143
      %s274 = smul.addr %s273, 8
      %s275 = scalar_lea.vmem %s2, %s274
      %p276 = pneg %p66
      %p277 = pneg %p63
      %s278 = sld [smem:[#allocation3]]
      %s279 = smul.u32 18, %s19
      %p280 = scmp.lt.s32.totalorder %s278, 3
      %s281 = scalar_select %p280, %s278, 3
      %p282 = scmp.lt.s32.totalorder %s279, 143
      %s283 = scalar_select %p282, %s279, 143
      %s284 = smul.addr %s281, 144
      %s285 = sadd.s32 %s283, %s284
      %s286 = smul.addr %s285, 8
      %s287 = scalar_lea.vmem %s3, %s286
      %p288 = pneg %p96
      %p289 = pneg %p93
      %s290 = smul.u32 18, %s19
      %p291 = scmp.lt.s32.totalorder %s290, 143
      %s292 = scalar_select %p291, %s290, 143
      %s293 = smul.addr %s292, 8
      %s294 = scalar_lea.vmem %s4, %s293
      %p295 = pneg %p122
      %p296 = pneg %p119
      %p297 = pneg %p143
      %p298 = pneg %p140
      %p299 = pneg %p164
      %p300 = pneg %p161
      %p301 = pneg %p190
      %p302 = pneg %p187
      %s303 = smul.u32 18, %s19
      %p304 = scmp.lt.s32.totalorder %s303, 143
      %s305 = scalar_select %p304, %s303, 143
      %s306 = smul.addr %s305, 4
      %s307 = scalar_lea.vmem %s7, %s306
      %s308 = smul.u32 18, %s19
      %p309 = scmp.lt.s32.totalorder %s308, 143
      %s310 = scalar_select %p309, %s308, 143
      %s311 = smul.addr %s310, 4
      %s312 = scalar_lea.vmem %s1, %s311
      %s313 = smul.u32 18, %s19
      %s314 = smul.u32 18, %s19
      %p315 = scmp.lt.s32.totalorder %s314, 143
      %s316 = scalar_select %p315, %s314, 143
      %s317 = smul.addr %s316, 8
      %s318 = scalar_lea.vmem %s2, %s317
      %s319 = smul.u32 18, %s19
      %s320 = sld [smem:[#allocation3]]
      %s321 = smul.u32 18, %s19
      %p322 = scmp.lt.s32.totalorder %s320, 3
      %s323 = scalar_select %p322, %s320, 3
      %p324 = scmp.lt.s32.totalorder %s321, 143
      %s325 = scalar_select %p324, %s321, 143
      %s326 = smul.addr %s323, 144
      %s327 = sadd.s32 %s325, %s326
      %s328 = smul.addr %s327, 8
      %s329 = scalar_lea.vmem %s3, %s328
      %s330 = sld [smem:[#allocation3]]
      %s331 = smul.u32 18, %s19
      %s332 = smul.u32 18, %s19
      %p333 = scmp.lt.s32.totalorder %s332, 143
      %s334 = scalar_select %p333, %s332, 143
      %s335 = smul.addr %s334, 8
      %s336 = scalar_lea.vmem %s4, %s335
      %s337 = smul.u32 18, %s19
      %s338 = smul.u32 18, %s19
      %p339 = scmp.lt.s32.totalorder %s338, 143
      %s340 = scalar_select %p339, %s338, 143
      %s341 = smul.addr %s340, 4
      %s342 = scalar_lea.vmem %s7, %s341
      %s343 = smul.u32 18, %s19
      %v344 = vld [vmem:[%s312] sm:$0xf]
      %v345 = vld [vmem:[%s312 + $0x4] sm:$0xf]
      %v346 = vld [vmem:[%s312 + $0x8] sm:$0xf]
      %v347 = vld [vmem:[%s312 + $0xc] sm:$0xf]
      %v348 = vld [vmem:[%s312 + $0x10] sm:$0xf]
      %v349 = vld [vmem:[%s312 + $0x14] sm:$0xf]
      %v350 = vld [vmem:[%s312 + $0x18] sm:$0xf]
      %v351 = vld [vmem:[%s312 + $0x1c] sm:$0xf]
      %v352 = vld [vmem:[%s312 + $0x20] sm:$0xf]
      %v353 = vld [vmem:[%s312 + $0x24] sm:$0xf]
      %v354 = vld [vmem:[%s312 + $0x28] sm:$0xf]
      %v355 = vld [vmem:[%s312 + $0x2c] sm:$0xf]
      %v356 = vld [vmem:[%s312 + $0x30] sm:$0xf]
      %v357 = vld [vmem:[%s312 + $0x34] sm:$0xf]
      %v358 = vld [vmem:[%s312 + $0x38] sm:$0xf]
      %v359 = vld [vmem:[%s312 + $0x3c] sm:$0xf]
      %v360 = vld [vmem:[%s312 + $0x40] sm:$0xf]
      %v361 = vld [vmem:[%s312 + $0x44] sm:$0xf]
      %v362 = vunpack.c.l.bf16 %v344
      %v363 = vunpack.c.l.bf16 %v345
      %v364 = vunpack.c.l.bf16 %v346
      %v365 = vunpack.c.l.bf16 %v347
      %v366 = vunpack.c.l.bf16 %v348
      %v367 = vunpack.c.l.bf16 %v349
      %v368 = vunpack.c.l.bf16 %v350
      %v369 = vunpack.c.l.bf16 %v351
      %v370 = vunpack.c.l.bf16 %v352
      %v371 = vunpack.c.l.bf16 %v353
      %v372 = vunpack.c.l.bf16 %v354
      %v373 = vunpack.c.l.bf16 %v355
      %v374 = vunpack.c.l.bf16 %v356
      %v375 = vunpack.c.l.bf16 %v357
      %v376 = vunpack.c.l.bf16 %v358
      %v377 = vunpack.c.l.bf16 %v359
      %v378 = vunpack.c.l.bf16 %v360
      %v379 = vunpack.c.l.bf16 %v361
      %v380 = vld [vmem:[%s336] sm:$0xff]
      %v381 = vld [vmem:[%s336 + $0x8] sm:$0xff]
      %v382 = vld [vmem:[%s336 + $0x10] sm:$0xff]
      %v383 = vld [vmem:[%s336 + $0x18] sm:$0xff]
      %v384 = vld [vmem:[%s336 + $0x20] sm:$0xff]
      %v385 = vld [vmem:[%s336 + $0x28] sm:$0xff]
      %v386 = vld [vmem:[%s336 + $0x30] sm:$0xff]
      %v387 = vld [vmem:[%s336 + $0x38] sm:$0xff]
      %v388 = vld [vmem:[%s336 + $0x40] sm:$0xff]
      %v389 = vld [vmem:[%s336 + $0x48] sm:$0xff]
      %v390 = vld [vmem:[%s336 + $0x50] sm:$0xff]
      %v391 = vld [vmem:[%s336 + $0x58] sm:$0xff]
      %v392 = vld [vmem:[%s336 + $0x60] sm:$0xff]
      %v393 = vld [vmem:[%s336 + $0x68] sm:$0xff]
      %v394 = vld [vmem:[%s336 + $0x70] sm:$0xff]
      %v395 = vld [vmem:[%s336 + $0x78] sm:$0xff]
      %v396 = vld [vmem:[%s336 + $0x80] sm:$0xff]
      %v397 = vld [vmem:[%s336 + $0x88] sm:$0xff]
      %v398 = vld [vmem:[%s329] sm:$0xff]
      %v399 = vld [vmem:[%s329 + $0x8] sm:$0xff]
      %v400 = vld [vmem:[%s329 + $0x10] sm:$0xff]
      %v401 = vld [vmem:[%s329 + $0x18] sm:$0xff]
      %v402 = vld [vmem:[%s329 + $0x20] sm:$0xff]
      %v403 = vld [vmem:[%s329 + $0x28] sm:$0xff]
      %v404 = vld [vmem:[%s329 + $0x30] sm:$0xff]
      %v405 = vld [vmem:[%s329 + $0x38] sm:$0xff]
      %v406 = vld [vmem:[%s329 + $0x40] sm:$0xff]
      %v407 = vld [vmem:[%s329 + $0x48] sm:$0xff]
      %v408 = vld [vmem:[%s329 + $0x50] sm:$0xff]
      %v409 = vld [vmem:[%s329 + $0x58] sm:$0xff]
      %v410 = vld [vmem:[%s329 + $0x60] sm:$0xff]
      %v411 = vld [vmem:[%s329 + $0x68] sm:$0xff]
      %v412 = vld [vmem:[%s329 + $0x70] sm:$0xff]
      %v413 = vld [vmem:[%s329 + $0x78] sm:$0xff]
      %v414 = vld [vmem:[%s329 + $0x80] sm:$0xff]
      %v415 = vld [vmem:[%s329 + $0x88] sm:$0xff]
      %v416 = vld [vmem:[%s5] sm:$0xff]
      %v417 = vld [vmem:[%s5 + $0x8] sm:$0xff]
      %v418 = vld [vmem:[%s5 + $0x10] sm:$0xff]
      %v419 = vld [vmem:[%s5 + $0x18] sm:$0xff]
      %v420 = vld [vmem:[%s6] sm:$0x1]
      %v422 = vperm.slane %v420, 0
      %vm424 = vcmask 261120
      %v426 = vsel %vm424, %v362, 0
      %v429 = vsel %vm424, %v363, 0
      %v432 = vsel %vm424, %v364, 0
      %v435 = vsel %vm424, %v365, 0
      %v438 = vsel %vm424, %v366, 0
      %v441 = vsel %vm424, %v367, 0
      %v444 = vsel %vm424, %v368, 0
      %v447 = vsel %vm424, %v369, 0
      %v450 = vsel %vm424, %v370, 0
      %v453 = vsel %vm424, %v371, 0
      %v456 = vsel %vm424, %v372, 0
      %v459 = vsel %vm424, %v373, 0
      %v462 = vsel %vm424, %v374, 0
      %v465 = vsel %vm424, %v375, 0
      %v468 = vsel %vm424, %v376, 0
      %v471 = vsel %vm424, %v377, 0
      %v474 = vsel %vm424, %v378, 0
      %v477 = vsel %vm424, %v379, 0
      %479 = vmatpush.msra.mxu0 0.0
      %480 = vmatpush.msra.mxu0 0.0
      %481 = vmatpush.msra.mxu0 0.0
      %482 = vmatpush.msra.mxu0 0.0
      %483 = vmatpush.msra.mxu0 0.0
      %484 = vmatpush.msra.mxu0 0.0
      %485 = vmatpush.msra.mxu0 0.0
      %486 = vmatpush.msra.mxu0 0.0
      %487 = vmatpush.msra.mxu0 0.0
      %488 = vmatpush.msra.mxu0 0.0
      %489 = vmatpush.msra.mxu0 0.0
      %490 = vmatpush.msra.mxu0 0.0
      %491 = vmatpush.msra.mxu0 %v419
      %492 = vmatpush.msra.mxu0 %v418
      %493 = vmatpush.msra.mxu0 %v417
      %494 = vmatpush.msra.mxu0 %v416
      %495 = vmatmul.f32.gmra.mxu0 %v426
      %v496 = vpop.f32.mrf.mxu0
      %v497 = vadd.f32 %v422, %v496
      %498 = vmatmul.f32.gmra.mxu0 %v429
      %v499 = vpop.f32.mrf.mxu0
      %v500 = vadd.f32 %v422, %v499
      %501 = vmatmul.f32.gmra.mxu0 %v432
      %v502 = vpop.f32.mrf.mxu0
      %v503 = vadd.f32 %v422, %v502
      %504 = vmatmul.f32.gmra.mxu0 %v435
      %v505 = vpop.f32.mrf.mxu0
      %v506 = vadd.f32 %v422, %v505
      %507 = vmatmul.f32.gmra.mxu0 %v438
      %v508 = vpop.f32.mrf.mxu0
      %v509 = vadd.f32 %v422, %v508
      %510 = vmatmul.f32.gmra.mxu0 %v441
      %v511 = vpop.f32.mrf.mxu0
      %v512 = vadd.f32 %v422, %v511
      %513 = vmatmul.f32.gmra.mxu0 %v444
      %v514 = vpop.f32.mrf.mxu0
      %v515 = vadd.f32 %v422, %v514
      %516 = vmatmul.f32.gmra.mxu0 %v447
      %v517 = vpop.f32.mrf.mxu0
      %v518 = vadd.f32 %v422, %v517
      %519 = vmatmul.f32.gmra.mxu0 %v450
      %v520 = vpop.f32.mrf.mxu0
      %v521 = vadd.f32 %v422, %v520
      %522 = vmatmul.f32.gmra.mxu0 %v453
      %v523 = vpop.f32.mrf.mxu0
      %v524 = vadd.f32 %v422, %v523
      %525 = vmatmul.f32.gmra.mxu0 %v456
      %v526 = vpop.f32.mrf.mxu0
      %v527 = vadd.f32 %v422, %v526
      %528 = vmatmul.f32.gmra.mxu0 %v459
      %v529 = vpop.f32.mrf.mxu0
      %v530 = vadd.f32 %v422, %v529
      %531 = vmatmul.f32.gmra.mxu0 %v462
      %v532 = vpop.f32.mrf.mxu0
      %v533 = vadd.f32 %v422, %v532
      %534 = vmatmul.f32.gmra.mxu0 %v465
      %v535 = vpop.f32.mrf.mxu0
      %v536 = vadd.f32 %v422, %v535
      %537 = vmatmul.f32.gmra.mxu0 %v468
      %v538 = vpop.f32.mrf.mxu0
      %v539 = vadd.f32 %v422, %v538
      %540 = vmatmul.f32.gmra.mxu0 %v471
      %v541 = vpop.f32.mrf.mxu0
      %v542 = vadd.f32 %v422, %v541
      %543 = vmatmul.f32.gmra.mxu0 %v474
      %v544 = vpop.f32.mrf.mxu0
      %v545 = vadd.f32 %v422, %v544
      %546 = vmatmul.f32.gmra.mxu0 %v477
      %v547 = vpop.f32.mrf.mxu0
      %v548 = vadd.f32 %v422, %v547
      %549 = vdwg.mxu0
      %v550 = vld [vmem:[%s318] sm:$0xff]
      %v551 = vld [vmem:[%s318 + $0x8] sm:$0xff]
      %v552 = vld [vmem:[%s318 + $0x10] sm:$0xff]
      %v553 = vld [vmem:[%s318 + $0x18] sm:$0xff]
      %v554 = vld [vmem:[%s318 + $0x20] sm:$0xff]
      %v555 = vld [vmem:[%s318 + $0x28] sm:$0xff]
      %v556 = vld [vmem:[%s318 + $0x30] sm:$0xff]
      %v557 = vld [vmem:[%s318 + $0x38] sm:$0xff]
      %v558 = vld [vmem:[%s318 + $0x40] sm:$0xff]
      %v559 = vld [vmem:[%s318 + $0x48] sm:$0xff]
      %v560 = vld [vmem:[%s318 + $0x50] sm:$0xff]
      %v561 = vld [vmem:[%s318 + $0x58] sm:$0xff]
      %v562 = vld [vmem:[%s318 + $0x60] sm:$0xff]
      %v563 = vld [vmem:[%s318 + $0x68] sm:$0xff]
      %v564 = vld [vmem:[%s318 + $0x70] sm:$0xff]
      %v565 = vld [vmem:[%s318 + $0x78] sm:$0xff]
      %v566 = vld [vmem:[%s318 + $0x80] sm:$0xff]
      %v567 = vld [vmem:[%s318 + $0x88] sm:$0xff]
      %v568 = vmul.f32 %v362, %v398
      %v569 = vmul.f32 %v363, %v399
      %v570 = vmul.f32 %v364, %v400
      %v571 = vmul.f32 %v365, %v401
      %v572 = vmul.f32 %v366, %v402
      %v573 = vmul.f32 %v367, %v403
      %v574 = vmul.f32 %v368, %v404
      %v575 = vmul.f32 %v369, %v405
      %v576 = vmul.f32 %v370, %v406
      %v577 = vmul.f32 %v371, %v407
      %v578 = vmul.f32 %v372, %v408
      %v579 = vmul.f32 %v373, %v409
      %v580 = vmul.f32 %v374, %v410
      %v581 = vmul.f32 %v375, %v411
      %v582 = vmul.f32 %v376, %v412
      %v583 = vmul.f32 %v377, %v413
      %v584 = vmul.f32 %v378, %v414
      %v585 = vmul.f32 %v379, %v415
      %v586 = vsub.f32 %v550, %v568
      %v587 = vsub.f32 %v551, %v569
      %v588 = vsub.f32 %v552, %v570
      %v589 = vsub.f32 %v553, %v571
      %v590 = vsub.f32 %v554, %v572
      %v591 = vsub.f32 %v555, %v573
      %v592 = vsub.f32 %v556, %v574
      %v593 = vsub.f32 %v557, %v575
      %v594 = vsub.f32 %v558, %v576
      %v595 = vsub.f32 %v559, %v577
      %v596 = vsub.f32 %v560, %v578
      %v597 = vsub.f32 %v561, %v579
      %v598 = vsub.f32 %v562, %v580
      %v599 = vsub.f32 %v563, %v581
      %v600 = vsub.f32 %v564, %v582
      %v601 = vsub.f32 %v565, %v583
      %v602 = vsub.f32 %v566, %v584
      %v603 = vsub.f32 %v567, %v585
      %v604 = vadd.f32 %v586, %v497
      %v605 = vadd.f32 %v587, %v500
      %v606 = vadd.f32 %v588, %v503
      %v607 = vadd.f32 %v589, %v506
      %v608 = vadd.f32 %v590, %v509
      %v609 = vadd.f32 %v591, %v512
      %v610 = vadd.f32 %v592, %v515
      %v611 = vadd.f32 %v593, %v518
      %v612 = vadd.f32 %v594, %v521
      %v613 = vadd.f32 %v595, %v524
      %v614 = vadd.f32 %v596, %v527
      %v615 = vadd.f32 %v597, %v530
      %v616 = vadd.f32 %v598, %v533
      %v617 = vadd.f32 %v599, %v536
      %v618 = vadd.f32 %v600, %v539
      %v619 = vadd.f32 %v601, %v542
      %v620 = vadd.f32 %v602, %v545
      %v621 = vadd.f32 %v603, %v548
      %623 = vset.pattern.permute.xlu0 0
      %624 = vperm.xlu0 %623, %v380
      %v625 = vpop.permute.xlu0 %624
      %628 = vset.pattern.permute.xlu0 0
      %629 = vperm.xlu0 %628, %v381
      %v630 = vpop.permute.xlu0 %629
      %633 = vset.pattern.permute.xlu0 0
      %634 = vperm.xlu0 %633, %v382
      %v635 = vpop.permute.xlu0 %634
      %638 = vset.pattern.permute.xlu0 0
      %639 = vperm.xlu0 %638, %v383
      %v640 = vpop.permute.xlu0 %639
      %643 = vset.pattern.permute.xlu0 0
      %644 = vperm.xlu0 %643, %v384
      %v645 = vpop.permute.xlu0 %644
      %648 = vset.pattern.permute.xlu0 0
      %649 = vperm.xlu0 %648, %v385
      %v650 = vpop.permute.xlu0 %649
      %653 = vset.pattern.permute.xlu0 0
      %654 = vperm.xlu0 %653, %v386
      %v655 = vpop.permute.xlu0 %654
      %658 = vset.pattern.permute.xlu0 0
      %659 = vperm.xlu0 %658, %v387
      %v660 = vpop.permute.xlu0 %659
      %663 = vset.pattern.permute.xlu0 0
      %664 = vperm.xlu0 %663, %v388
      %v665 = vpop.permute.xlu0 %664
      %668 = vset.pattern.permute.xlu0 0
      %669 = vperm.xlu0 %668, %v389
      %v670 = vpop.permute.xlu0 %669
      %673 = vset.pattern.permute.xlu0 0
      %674 = vperm.xlu0 %673, %v390
      %v675 = vpop.permute.xlu0 %674
      %678 = vset.pattern.permute.xlu0 0
      %679 = vperm.xlu0 %678, %v391
      %v680 = vpop.permute.xlu0 %679
      %683 = vset.pattern.permute.xlu0 0
      %684 = vperm.xlu0 %683, %v392
      %v685 = vpop.permute.xlu0 %684
      %688 = vset.pattern.permute.xlu0 0
      %689 = vperm.xlu0 %688, %v393
      %v690 = vpop.permute.xlu0 %689
      %693 = vset.pattern.permute.xlu0 0
      %694 = vperm.xlu0 %693, %v394
      %v695 = vpop.permute.xlu0 %694
      %698 = vset.pattern.permute.xlu0 0
      %699 = vperm.xlu0 %698, %v395
      %v700 = vpop.permute.xlu0 %699
      %703 = vset.pattern.permute.xlu0 0
      %704 = vperm.xlu0 %703, %v396
      %v705 = vpop.permute.xlu0 %704
      %708 = vset.pattern.permute.xlu0 0
      %709 = vperm.xlu0 %708, %v397
      %v710 = vpop.permute.xlu0 %709
      %v712 = vmul.f32 %v625, %v604
      %v713 = vmul.f32 %v630, %v605
      %v714 = vmul.f32 %v635, %v606
      %v715 = vmul.f32 %v640, %v607
      %v716 = vmul.f32 %v645, %v608
      %v717 = vmul.f32 %v650, %v609
      %v718 = vmul.f32 %v655, %v610
      %v719 = vmul.f32 %v660, %v611
      %v720 = vmul.f32 %v665, %v612
      %v721 = vmul.f32 %v670, %v613
      %v722 = vmul.f32 %v675, %v614
      %v723 = vmul.f32 %v680, %v615
      %v724 = vmul.f32 %v685, %v616
      %v725 = vmul.f32 %v690, %v617
      %v726 = vmul.f32 %v695, %v618
      %v727 = vmul.f32 %v700, %v619
      %v728 = vmul.f32 %v705, %v620
      %v729 = vmul.f32 %v710, %v621
      %v730 = vpack.c.bf16 %v712, %v712
      %v731 = vpack.c.bf16 %v713, %v713
      %v732 = vpack.c.bf16 %v714, %v714
      %v733 = vpack.c.bf16 %v715, %v715
      %v734 = vpack.c.bf16 %v716, %v716
      %v735 = vpack.c.bf16 %v717, %v717
      %v736 = vpack.c.bf16 %v718, %v718
      %v737 = vpack.c.bf16 %v719, %v719
      %v738 = vpack.c.bf16 %v720, %v720
      %v739 = vpack.c.bf16 %v721, %v721
      %v740 = vpack.c.bf16 %v722, %v722
      %v741 = vpack.c.bf16 %v723, %v723
      %v742 = vpack.c.bf16 %v724, %v724
      %v743 = vpack.c.bf16 %v725, %v725
      %v744 = vpack.c.bf16 %v726, %v726
      %v745 = vpack.c.bf16 %v727, %v727
      %v746 = vpack.c.bf16 %v728, %v728
      %v747 = vpack.c.bf16 %v729, %v729
      %vm748 = vcmask 257024
      %749 = vst.msk [vmem:[%s342] sm:$0xf] %vm748, %v730
      %750 = vst.msk [vmem:[%s342 + $0x4] sm:$0xf] %vm748, %v731
      %751 = vst.msk [vmem:[%s342 + $0x8] sm:$0xf] %vm748, %v732
      %752 = vst.msk [vmem:[%s342 + $0xc] sm:$0xf] %vm748, %v733
      %753 = vst.msk [vmem:[%s342 + $0x10] sm:$0xf] %vm748, %v734
      %754 = vst.msk [vmem:[%s342 + $0x14] sm:$0xf] %vm748, %v735
      %755 = vst.msk [vmem:[%s342 + $0x18] sm:$0xf] %vm748, %v736
      %756 = vst.msk [vmem:[%s342 + $0x1c] sm:$0xf] %vm748, %v737
      %757 = vst.msk [vmem:[%s342 + $0x20] sm:$0xf] %vm748, %v738
      %758 = vst.msk [vmem:[%s342 + $0x24] sm:$0xf] %vm748, %v739
      %759 = vst.msk [vmem:[%s342 + $0x28] sm:$0xf] %vm748, %v740
      %760 = vst.msk [vmem:[%s342 + $0x2c] sm:$0xf] %vm748, %v741
      %761 = vst.msk [vmem:[%s342 + $0x30] sm:$0xf] %vm748, %v742
      %762 = vst.msk [vmem:[%s342 + $0x34] sm:$0xf] %vm748, %v743
      %763 = vst.msk [vmem:[%s342 + $0x38] sm:$0xf] %vm748, %v744
      %764 = vst.msk [vmem:[%s342 + $0x3c] sm:$0xf] %vm748, %v745
      %765 = vst.msk [vmem:[%s342 + $0x40] sm:$0xf] %vm748, %v746
      %766 = vst.msk [vmem:[%s342 + $0x44] sm:$0xf] %vm748, %v747
      %s767 = smul.u32 18, %s19
      %p768 = scmp.lt.s32.totalorder %s767, 143
      %s769 = scalar_select %p768, %s767, 143
      %s770 = smul.addr %s769, 4
      %s771 = scalar_lea.vmem %s7, %s770
      // Predicated region
      $region45: #{dafno2d_forward.10} parent=43 // pred_check
        %p772 = pneg %p187
      $region46: #{dafno2d_forward.10} parent=43 // pred_check_branch
        %774 = sbr.rel (%p772) target = $region48
      $region47: #{dafno2d_forward.10} parent=43 // pred_region
        %s775 = smul.u32 18, %s19
      $region48: #{dafno2d_forward.10} parent=43 // pred_fallthru
        _
    $region44: #{dafno2d_forward.10} parent=5 // pred_fallthru
      _
    %p776 = scmp.le.s32.totalorder 2, %s14
    // Predicated region
    $region49: #{dafno2d_forward.10} parent=5 // pred_check
      %p777 = pneg %p776
    $region50: #{dafno2d_forward.10} parent=5 // pred_check_branch
      %779 = sbr.rel (%p777) target = $region52
    $region51: #{dafno2d_forward.10} parent=5 // pred_region
      %s780 = ssub.s32 %s14, 2
      // Predicated region
      $region53: #{dafno2d_forward.10} parent=51 // pred_check
        %p781 = pneg %p193
      $region54: #{dafno2d_forward.10} parent=51 // pred_check_branch
        %783 = sbr.rel (%p781) target = $region56
      $region55: #{dafno2d_forward.10} parent=51 // pred_region
        %s784 = smul.u32 18, %s20
        %p785 = scmp.lt.s32.totalorder %s784, 143
        %s786 = scalar_select %p785, %s784, 143
        %s787 = smul.addr %s786, 4
        %s788 = scalar_lea.vmem %s7, %s787
      $region56: #{dafno2d_forward.10} parent=51 // pred_fallthru
        _
    $region52: #{dafno2d_forward.10} parent=5 // pred_fallthru
      _
  $region6: #{dafno2d_forward.10} parent=0 // loop_footer
    %s18 = sadd.s32 1, %s14
  $region7: #{dafno2d_forward.10} parent=0 // loop_footer_branch
    %13 = sbr.rel target = $region3
  $region8: #{dafno2d_forward.10} parent=0 // loop_exit
    _

// kernel: dafno2d_forward.11
$region0: #{dafno2d_forward.11}
  #allocation0 [shape = 'u32[]', space=smem, size = 0x4, offset = 0x4, fixed_abs, tag = 'smem constant byte address 0x4 - core index']
  #allocation1 [shape = 'u32[72,128]{1,0:T(1,128)}', space=vmem, size = 0x9000, scoped, tag = 'internal scratch']
  #allocation2 [shape = 'f32[1,1]{1,0:T(1,128)S(1)}', space=vmem, size = 0x200, scoped, tag = 'scoped memory for dafno2d_forward.11']
  %s0 = inlined_call_operand.vmem [shape: bf16[512,32], index: 0, kind: input, shape index: {}]
  %s1 = inlined_call_operand.vmem [shape: f32[32,128], index: 1, kind: input, shape index: {}]
  %s2 = inlined_call_operand.vmem [shape: f32[1,128], index: 2, kind: input, shape index: {}]
  %s3 = inlined_call_operand.vmem [shape: f32[1,128], index: 3, kind: input, shape index: {}]
  %s4 = inlined_call_operand.<no memory space> [shape: f32[1,1], index: 4, kind: input, shape index: {}]
  %s5 = inlined_call_operand.vmem [shape: f32[512,1], index: 5, kind: output, shape index: {}]
  %s6 = sld [smem:[#allocation0]]
  $region53: #{dafno2d_forward.11} parent=0
    _
  %s8 = ssub.s32 1, %s6
  %s9 = scalar_select 0, %s8, %s6
  %v10 = vstv %s4
  %11 = vst [vmem:[#allocation2] sm:$0x1] %v10
  loop: start=0, step=1, limit=10
  $region2: #{dafno2d_forward.11} parent=0 // loop_pre_header
    _
  $region3: #{dafno2d_forward.11} parent=0 // loop_header
    %s13 = sphi 0, %s17
    %p14 = scmp.ge.s32.totalorder %s13, 10
    %s23 = sphi 0, %s25
    %s26 = sphi 0, %s23
    %s27 = sphi 0, %s26
    %s43 = sphi 0, %s27
    %s47 = sphi 0, %s47
    %s49 = sphi 0, %s47
    %s50 = sphi 0, %s49
    %s64 = sphi 0, %s50
    %s68 = sphi 0, %s68
    %s70 = sphi 0, %s68
    %s71 = sphi 0, %s70
    %s85 = sphi 0, %s71
    %s89 = sphi 0, %s89
    %s91 = sphi 0, %s89
    %s92 = sphi 0, %s91
    %s106 = sphi 0, %s92
    %s110 = sphi 0, %s110
    %s112 = sphi 0, %s110
    %s113 = sphi 0, %s112
    %s127 = sphi 0, %s113
    %s133 = sphi 0, %s135
    %s136 = sphi 0, %s133
    %s137 = sphi 0, %s136
    %s153 = sphi 0, %s137
  $region4: #{dafno2d_forward.11} parent=0 // loop_header_branch
    %16 = sbr.rel (%p14) target = $region8
  $region5: #{dafno2d_forward.11} parent=0 // loop_body
    %s18 = ssub.s32 %s13, 1
    %s19 = ssub.s32 %s13, 2
    %s20 = sadd.s32 %s13, 1
    %s21 = ssub.s32 %s13, %s20
    %p22 = scmp.eq.s32.totalorder %s21, 0
    %s24 = sadd.s32 %s23, 1
    %s25 = scalar_select %p22, %s23, %s24
    %p28 = pneg %p22
    %p29 = scmp.eq.s32.totalorder %s13, 7
    %p30 = por %p28, %p29
    %p31 = scmp.ne.s32.totalorder %s23, %s26
    %p32 = scmp.eq.s32.totalorder %s13, 0
    %p33 = por %p31, %p32
    %p34 = scmp.ne.s32.totalorder %s23, %s26
    %p35 = scmp.eq.s32.totalorder %s18, 7
    %p36 = por %p34, %p35
    %p37 = scmp.ne.s32.totalorder %s26, %s27
    %p38 = scmp.eq.s32.totalorder %s18, 0
    %p39 = por %p37, %p38
    %p40 = scmp.ne.s32.totalorder %s26, %s27
    %p41 = scmp.eq.s32.totalorder %s19, 7
    %p42 = por %p40, %p41
    %p44 = scmp.ne.s32.totalorder %s27, %s43
    %p45 = scmp.eq.s32.totalorder %s19, 0
    %p46 = por %p44, %p45
    %s48 = sadd.s32 %s47, 1
    %p51 = scmp.eq.s32.totalorder %s13, 7
    %p52 = scmp.ne.s32.totalorder %s47, %s49
    %p53 = scmp.eq.s32.totalorder %s13, 0
    %p54 = por %p52, %p53
    %p55 = scmp.ne.s32.totalorder %s47, %s49
    %p56 = scmp.eq.s32.totalorder %s18, 7
    %p57 = por %p55, %p56
    %p58 = scmp.ne.s32.totalorder %s49, %s50
    %p59 = scmp.eq.s32.totalorder %s18, 0
    %p60 = por %p58, %p59
    %p61 = scmp.ne.s32.totalorder %s49, %s50
    %p62 = scmp.eq.s32.totalorder %s19, 7
    %p63 = por %p61, %p62
    %p65 = scmp.ne.s32.totalorder %s50, %s64
    %p66 = scmp.eq.s32.totalorder %s19, 0
    %p67 = por %p65, %p66
    %s69 = sadd.s32 %s68, 1
    %p72 = scmp.eq.s32.totalorder %s13, 7
    %p73 = scmp.ne.s32.totalorder %s68, %s70
    %p74 = scmp.eq.s32.totalorder %s13, 0
    %p75 = por %p73, %p74
    %p76 = scmp.ne.s32.totalorder %s68, %s70
    %p77 = scmp.eq.s32.totalorder %s18, 7
    %p78 = por %p76, %p77
    %p79 = scmp.ne.s32.totalorder %s70, %s71
    %p80 = scmp.eq.s32.totalorder %s18, 0
    %p81 = por %p79, %p80
    %p82 = scmp.ne.s32.totalorder %s70, %s71
    %p83 = scmp.eq.s32.totalorder %s19, 7
    %p84 = por %p82, %p83
    %p86 = scmp.ne.s32.totalorder %s71, %s85
    %p87 = scmp.eq.s32.totalorder %s19, 0
    %p88 = por %p86, %p87
    %s90 = sadd.s32 %s89, 1
    %p93 = scmp.eq.s32.totalorder %s13, 7
    %p94 = scmp.ne.s32.totalorder %s89, %s91
    %p95 = scmp.eq.s32.totalorder %s13, 0
    %p96 = por %p94, %p95
    %p97 = scmp.ne.s32.totalorder %s89, %s91
    %p98 = scmp.eq.s32.totalorder %s18, 7
    %p99 = por %p97, %p98
    %p100 = scmp.ne.s32.totalorder %s91, %s92
    %p101 = scmp.eq.s32.totalorder %s18, 0
    %p102 = por %p100, %p101
    %p103 = scmp.ne.s32.totalorder %s91, %s92
    %p104 = scmp.eq.s32.totalorder %s19, 7
    %p105 = por %p103, %p104
    %p107 = scmp.ne.s32.totalorder %s92, %s106
    %p108 = scmp.eq.s32.totalorder %s19, 0
    %p109 = por %p107, %p108
    %s111 = sadd.s32 %s110, 1
    %p114 = scmp.eq.s32.totalorder %s13, 7
    %p115 = scmp.ne.s32.totalorder %s110, %s112
    %p116 = scmp.eq.s32.totalorder %s13, 0
    %p117 = por %p115, %p116
    %p118 = scmp.ne.s32.totalorder %s110, %s112
    %p119 = scmp.eq.s32.totalorder %s18, 7
    %p120 = por %p118, %p119
    %p121 = scmp.ne.s32.totalorder %s112, %s113
    %p122 = scmp.eq.s32.totalorder %s18, 0
    %p123 = por %p121, %p122
    %p124 = scmp.ne.s32.totalorder %s112, %s113
    %p125 = scmp.eq.s32.totalorder %s19, 7
    %p126 = por %p124, %p125
    %p128 = scmp.ne.s32.totalorder %s113, %s127
    %p129 = scmp.eq.s32.totalorder %s19, 0
    %p130 = por %p128, %p129
    %s131 = ssub.s32 %s13, %s20
    %p132 = scmp.eq.s32.totalorder %s131, 0
    %s134 = sadd.s32 %s133, 1
    %s135 = scalar_select %p132, %s133, %s134
    %p138 = pneg %p132
    %p139 = scmp.eq.s32.totalorder %s13, 7
    %p140 = por %p138, %p139
    %p141 = scmp.ne.s32.totalorder %s133, %s136
    %p142 = scmp.eq.s32.totalorder %s13, 0
    %p143 = por %p141, %p142
    %p144 = scmp.ne.s32.totalorder %s133, %s136
    %p145 = scmp.eq.s32.totalorder %s18, 7
    %p146 = por %p144, %p145
    %p147 = scmp.ne.s32.totalorder %s136, %s137
    %p148 = scmp.eq.s32.totalorder %s18, 0
    %p149 = por %p147, %p148
    %p150 = scmp.ne.s32.totalorder %s136, %s137
    %p151 = scmp.eq.s32.totalorder %s19, 7
    %p152 = por %p150, %p151
    %p154 = scmp.ne.s32.totalorder %s137, %s153
    %p155 = scmp.eq.s32.totalorder %s19, 0
    %p156 = por %p154, %p155
    %p157 = scmp.le.s32.totalorder 1, %s13
    %p158 = scmp.lt.s32.totalorder %s13, 9
    %p159 = pnand %p157, %p158
    %p160 = pneg %p159
    // Predicated region
    $region9: #{dafno2d_forward.11} parent=5 // pred_check
      _
    $region10: #{dafno2d_forward.11} parent=5 // pred_check_branch
      %162 = sbr.rel (%p159) target = $region12
    $region11: #{dafno2d_forward.11} parent=5 // pred_region
      %s163 = ssub.s32 %s13, 1
      // Predicated region
      $region13: #{dafno2d_forward.11} parent=11 // pred_check
        %p164 = pneg %p60
      $region14: #{dafno2d_forward.11} parent=11 // pred_check_branch
        %166 = sbr.rel (%p164) target = $region16
      $region15: #{dafno2d_forward.11} parent=11 // pred_region
        _
      $region16: #{dafno2d_forward.11} parent=11 // pred_fallthru
        _
      // Predicated region
      $region17: #{dafno2d_forward.11} parent=11 // pred_check
        %p167 = pneg %p81
      $region18: #{dafno2d_forward.11} parent=11 // pred_check_branch
        %169 = sbr.rel (%p167) target = $region20
      $region19: #{dafno2d_forward.11} parent=11 // pred_region
        _
      $region20: #{dafno2d_forward.11} parent=11 // pred_fallthru
        _
      // Predicated region
      $region21: #{dafno2d_forward.11} parent=11 // pred_check
        %p170 = pneg %p102
      $region22: #{dafno2d_forward.11} parent=11 // pred_check_branch
        %172 = sbr.rel (%p170) target = $region24
      $region23: #{dafno2d_forward.11} parent=11 // pred_region
        _
      $region24: #{dafno2d_forward.11} parent=11 // pred_fallthru
        _
      // Predicated region
      $region25: #{dafno2d_forward.11} parent=11 // pred_check
        %p173 = pneg %p123
      $region26: #{dafno2d_forward.11} parent=11 // pred_check_branch
        %175 = sbr.rel (%p173) target = $region28
      $region27: #{dafno2d_forward.11} parent=11 // pred_region
        _
      $region28: #{dafno2d_forward.11} parent=11 // pred_fallthru
        _
    $region12: #{dafno2d_forward.11} parent=5 // pred_fallthru
      _
    %p176 = scmp.lt.s32.totalorder %s13, 8
    // Predicated region
    $region29: #{dafno2d_forward.11} parent=5 // pred_check
      %p177 = pneg %p176
    $region30: #{dafno2d_forward.11} parent=5 // pred_check_branch
      %179 = sbr.rel (%p177) target = $region32
    $region31: #{dafno2d_forward.11} parent=5 // pred_region
      // Predicated region
      $region33: #{dafno2d_forward.11} parent=31 // pred_check
        %p180 = pneg %p33
      $region34: #{dafno2d_forward.11} parent=31 // pred_check_branch
        %182 = sbr.rel (%p180) target = $region36
      $region35: #{dafno2d_forward.11} parent=31 // pred_region
        %s183 = smul.u32 8, %s13
        %p184 = scmp.lt.s32.totalorder %s183, 63
        %s185 = scalar_select %p184, %s183, 63
        %s186 = smul.addr %s185, 4
        %s187 = scalar_lea.vmem %s0, %s186
        %s188 = smul.u32 8, %s13
      $region36: #{dafno2d_forward.11} parent=31 // pred_fallthru
        _
    $region32: #{dafno2d_forward.11} parent=5 // pred_fallthru
      _
    %p189 = scmp.le.s32.totalorder 1, %s13
    %p190 = scmp.lt.s32.totalorder %s13, 9
    %p191 = pnand %p189, %p190
    %p192 = pneg %p191
    // Predicated region
    $region37: #{dafno2d_forward.11} parent=5 // pred_check
      _
    $region38: #{dafno2d_forward.11} parent=5 // pred_check_branch
      %194 = sbr.rel (%p191) target = $region40
    $region39: #{dafno2d_forward.11} parent=5 // pred_region
      %s195 = ssub.s32 %s13, 1
      %s196 = smul.u32 8, %s18
      %p197 = scmp.lt.s32.totalorder %s196, 63
      %s198 = scalar_select %p197, %s196, 63
      %s199 = smul.addr %s198, 4
      %s200 = scalar_lea.vmem %s0, %s199
      %p201 = pneg %p39
      %p202 = pneg %p36
      %p203 = pneg %p60
      %p204 = pneg %p57
      %p205 = pneg %p81
      %p206 = pneg %p78
      %p207 = pneg %p102
      %p208 = pneg %p99
      %p209 = pneg %p123
      %p210 = pneg %p120
      %p211 = pneg %p149
      %p212 = pneg %p146
      %s213 = smul.u32 8, %s18
      %p214 = scmp.lt.s32.totalorder %s213, 63
      %s215 = scalar_select %p214, %s213, 63
      %s216 = smul.addr %s215, 8
      %s217 = scalar_lea.vmem %s5, %s216
      %s218 = smul.u32 8, %s18
      %p219 = scmp.lt.s32.totalorder %s218, 63
      %s220 = scalar_select %p219, %s218, 63
      %s221 = smul.addr %s220, 4
      %s222 = scalar_lea.vmem %s0, %s221
      %s223 = smul.u32 8, %s18
      %s224 = smul.u32 8, %s18
      %p225 = scmp.lt.s32.totalorder %s224, 63
      %s226 = scalar_select %p225, %s224, 63
      %s227 = smul.addr %s226, 8
      %s228 = scalar_lea.vmem %s5, %s227
      %s229 = smul.u32 8, %s18
      %v230 = vld [vmem:[%s222] sm:$0xf]
      %v231 = vld [vmem:[%s222 + $0x4] sm:$0xf]
      %v232 = vld [vmem:[%s222 + $0x8] sm:$0xf]
      %v233 = vld [vmem:[%s222 + $0xc] sm:$0xf]
      %v234 = vld [vmem:[%s222 + $0x10] sm:$0xf]
      %v235 = vld [vmem:[%s222 + $0x14] sm:$0xf]
      %v236 = vld [vmem:[%s222 + $0x18] sm:$0xf]
      %v237 = vld [vmem:[%s222 + $0x1c] sm:$0xf]
      %v238 = vunpack.c.l.bf16 %v230
      %v239 = vunpack.c.l.bf16 %v231
      %v240 = vunpack.c.l.bf16 %v232
      %v241 = vunpack.c.l.bf16 %v233
      %v242 = vunpack.c.l.bf16 %v234
      %v243 = vunpack.c.l.bf16 %v235
      %v244 = vunpack.c.l.bf16 %v236
      %v245 = vunpack.c.l.bf16 %v237
      %v246 = vld [vmem:[%s1] sm:$0xff]
      %v247 = vld [vmem:[%s1 + $0x8] sm:$0xff]
      %v248 = vld [vmem:[%s1 + $0x10] sm:$0xff]
      %v249 = vld [vmem:[%s1 + $0x18] sm:$0xff]
      %v250 = vld [vmem:[%s2] sm:$0x1]
      %v252 = vperm.slane %v250, 0
      %vm254 = vcmask 261120
      %v256 = vsel %vm254, %v238, 0
      %v259 = vsel %vm254, %v239, 0
      %v262 = vsel %vm254, %v240, 0
      %v265 = vsel %vm254, %v241, 0
      %v268 = vsel %vm254, %v242, 0
      %v271 = vsel %vm254, %v243, 0
      %v274 = vsel %vm254, %v244, 0
      %v277 = vsel %vm254, %v245, 0
      %279 = vmatpush.msra.mxu0 0.0
      %280 = vmatpush.msra.mxu0 0.0
      %281 = vmatpush.msra.mxu0 0.0
      %282 = vmatpush.msra.mxu0 0.0
      %283 = vmatpush.msra.mxu0 0.0
      %284 = vmatpush.msra.mxu0 0.0
      %285 = vmatpush.msra.mxu0 0.0
      %286 = vmatpush.msra.mxu0 0.0
      %287 = vmatpush.msra.mxu0 0.0
      %288 = vmatpush.msra.mxu0 0.0
      %289 = vmatpush.msra.mxu0 0.0
      %290 = vmatpush.msra.mxu0 0.0
      %291 = vmatpush.msra.mxu0 %v249
      %292 = vmatpush.msra.mxu0 %v248
      %293 = vmatpush.msra.mxu0 %v247
      %294 = vmatpush.msra.mxu0 %v246
      %295 = vmatmul.f32.gmra.mxu0 %v256
      %v296 = vpop.f32.mrf.mxu0
      %v297 = vadd.f32 %v252, %v296
      %298 = vmatmul.f32.gmra.mxu0 %v259
      %v299 = vpop.f32.mrf.mxu0
      %v300 = vadd.f32 %v252, %v299
      %301 = vmatmul.f32.gmra.mxu0 %v262
      %v302 = vpop.f32.mrf.mxu0
      %v303 = vadd.f32 %v252, %v302
      %304 = vmatmul.f32.gmra.mxu0 %v265
      %v305 = vpop.f32.mrf.mxu0
      %v306 = vadd.f32 %v252, %v305
      %307 = vmatmul.f32.gmra.mxu0 %v268
      %v308 = vpop.f32.mrf.mxu0
      %v309 = vadd.f32 %v252, %v308
      %310 = vmatmul.f32.gmra.mxu0 %v271
      %v311 = vpop.f32.mrf.mxu0
      %v312 = vadd.f32 %v252, %v311
      %313 = vmatmul.f32.gmra.mxu0 %v274
      %v314 = vpop.f32.mrf.mxu0
      %v315 = vadd.f32 %v252, %v314
      %316 = vmatmul.f32.gmra.mxu0 %v277
      %v317 = vpop.f32.mrf.mxu0
      %v318 = vadd.f32 %v252, %v317
      %319 = vdwg.mxu0
      %v320 = vmul.f32 %v297, 0.5
      %v321 = vmul.f32 %v300, 0.5
      %v322 = vmul.f32 %v303, 0.5
      %v323 = vmul.f32 %v306, 0.5
      %v324 = vmul.f32 %v309, 0.5
      %v325 = vmul.f32 %v312, 0.5
      %v326 = vmul.f32 %v315, 0.5
      %v327 = vmul.f32 %v318, 0.5
      %v328 = vmul.f32 %v297, 0.70710677
      %v329 = vmul.f32 %v300, 0.70710677
      %v330 = vmul.f32 %v303, 0.70710677
      %v331 = vmul.f32 %v306, 0.70710677
      %v332 = vmul.f32 %v309, 0.70710677
      %v333 = vmul.f32 %v312, 0.70710677
      %v334 = vmul.f32 %v315, 0.70710677
      %v335 = vmul.f32 %v318, 0.70710677
      %v336 = vmul.f32 %v328, %v328
      %v337 = vmin.f32 16.0, %v336
      %v338 = vmul.f32 %v337, 2.1237322e-06
      %v339 = vadd.f32 %v338, 0.00028619796
      %v340 = vmul.f32 %v337, %v339
      %v341 = vadd.f32 %v340, 0.0036580483
      %v342 = vmul.f32 %v337, %v341
      %v343 = vadd.f32 %v342, 0.05243302
      %v344 = vmul.f32 %v337, %v343
      %v345 = vadd.f32 %v344, 0.18741608
      %v346 = vmul.f32 %v337, %v345
      %v347 = vadd.f32 %v346, 1.1283791
      %v348 = vmul.f32 %v328, %v347
      %v349 = vmul.f32 %v337, 3.8918573e-05
      %v350 = vadd.f32 %v349, 0.001143296
      %v351 = vmul.f32 %v337, %v350
      %v352 = vadd.f32 %v351, 0.014752088
      %v353 = vmul.f32 %v337, %v352
      %v354 = vadd.f32 %v353, 0.112945676
      %v355 = vmul.f32 %v337, %v354
      %v356 = vadd.f32 %v355, 0.4994258
      %v357 = vmul.f32 %v337, %v356
      %v358 = vadd.f32 %v357, 1.0
      %v359 = vrcp.pop %v358
      %v360 = vmul.f32 %v358, %v359
      %v361 = vsub.f32 1.0, %v360
      %v362 = vmul.f32 %v359, %v361
      %v363 = vadd.f32 %v359, %v362
      %vm364 = vweird.f32 %v358
      %vm365 = vweird.f32 %v359
      %vm366 = vmor %vm364, %vm365
      %v367 = vsel %vm366, %v359, %v363
      %v368 = vand.u32 2147483647, %v358
      %vm369 = vcmp.eq.f32.partialorder %v368, 8.507059e+37
      %v370 = vand.u32 %v358, 2147483648
      %v371 = vor.u32 1.1754944e-38, %v370
      %v372 = vsel %vm369, %v371, %v367
      %v373 = vmul.f32 %v348, %v372
      %v374 = vmin.f32 %v373, 1.0
      %v375 = vmax.f32 %v374, -1.0
      %v376 = vmul.f32 %v329, %v329
      %v377 = vmin.f32 16.0, %v376
      %v378 = vmul.f32 %v377, 2.1237322e-06
      %v379 = vadd.f32 %v378, 0.00028619796
      %v380 = vmul.f32 %v377, %v379
      %v381 = vadd.f32 %v380, 0.0036580483
      %v382 = vmul.f32 %v377, %v381
      %v383 = vadd.f32 %v382, 0.05243302
      %v384 = vmul.f32 %v377, %v383
      %v385 = vadd.f32 %v384, 0.18741608
      %v386 = vmul.f32 %v377, %v385
      %v387 = vadd.f32 %v386, 1.1283791
      %v388 = vmul.f32 %v329, %v387
      %v389 = vmul.f32 %v377, 3.8918573e-05
      %v390 = vadd.f32 %v389, 0.001143296
      %v391 = vmul.f32 %v377, %v390
      %v392 = vadd.f32 %v391, 0.014752088
      %v393 = vmul.f32 %v377, %v392
      %v394 = vadd.f32 %v393, 0.112945676
      %v395 = vmul.f32 %v377, %v394
      %v396 = vadd.f32 %v395, 0.4994258
      %v397 = vmul.f32 %v377, %v396
      %v398 = vadd.f32 %v397, 1.0
      %v399 = vrcp.pop %v398
      %v400 = vmul.f32 %v398, %v399
      %v401 = vsub.f32 1.0, %v400
      %v402 = vmul.f32 %v399, %v401
      %v403 = vadd.f32 %v399, %v402
      %vm404 = vweird.f32 %v398
      %vm405 = vweird.f32 %v399
      %vm406 = vmor %vm404, %vm405
      %v407 = vsel %vm406, %v399, %v403
      %v408 = vand.u32 2147483647, %v398
      %vm409 = vcmp.eq.f32.partialorder %v408, 8.507059e+37
      %v410 = vand.u32 %v398, 2147483648
      %v411 = vor.u32 1.1754944e-38, %v410
      %v412 = vsel %vm409, %v411, %v407
      %v413 = vmul.f32 %v388, %v412
      %v414 = vmin.f32 %v413, 1.0
      %v415 = vmax.f32 %v414, -1.0
      %v416 = vmul.f32 %v330, %v330
      %v417 = vmin.f32 16.0, %v416
      %v418 = vmul.f32 %v417, 2.1237322e-06
      %v419 = vadd.f32 %v418, 0.00028619796
      %v420 = vmul.f32 %v417, %v419
      %v421 = vadd.f32 %v420, 0.0036580483
      %v422 = vmul.f32 %v417, %v421
      %v423 = vadd.f32 %v422, 0.05243302
      %v424 = vmul.f32 %v417, %v423
      %v425 = vadd.f32 %v424, 0.18741608
      %v426 = vmul.f32 %v417, %v425
      %v427 = vadd.f32 %v426, 1.1283791
      %v428 = vmul.f32 %v330, %v427
      %v429 = vmul.f32 %v417, 3.8918573e-05
      %v430 = vadd.f32 %v429, 0.001143296
      %v431 = vmul.f32 %v417, %v430
      %v432 = vadd.f32 %v431, 0.014752088
      %v433 = vmul.f32 %v417, %v432
      %v434 = vadd.f32 %v433, 0.112945676
      %v435 = vmul.f32 %v417, %v434
      %v436 = vadd.f32 %v435, 0.4994258
      %v437 = vmul.f32 %v417, %v436
      %v438 = vadd.f32 %v437, 1.0
      %v439 = vrcp.pop %v438
      %v440 = vmul.f32 %v438, %v439
      %v441 = vsub.f32 1.0, %v440
      %v442 = vmul.f32 %v439, %v441
      %v443 = vadd.f32 %v439, %v442
      %vm444 = vweird.f32 %v438
      %vm445 = vweird.f32 %v439
      %vm446 = vmor %vm444, %vm445
      %v447 = vsel %vm446, %v439, %v443
      %v448 = vand.u32 2147483647, %v438
      %vm449 = vcmp.eq.f32.partialorder %v448, 8.507059e+37
      %v450 = vand.u32 %v438, 2147483648
      %v451 = vor.u32 1.1754944e-38, %v450
      %v452 = vsel %vm449, %v451, %v447
      %v453 = vmul.f32 %v428, %v452
      %v454 = vmin.f32 %v453, 1.0
      %v455 = vmax.f32 %v454, -1.0
      %v456 = vmul.f32 %v331, %v331
      %v457 = vmin.f32 16.0, %v456
      %v458 = vmul.f32 %v457, 2.1237322e-06
      %v459 = vadd.f32 %v458, 0.00028619796
      %v460 = vmul.f32 %v457, %v459
      %v461 = vadd.f32 %v460, 0.0036580483
      %v462 = vmul.f32 %v457, %v461
      %v463 = vadd.f32 %v462, 0.05243302
      %v464 = vmul.f32 %v457, %v463
      %v465 = vadd.f32 %v464, 0.18741608
      %v466 = vmul.f32 %v457, %v465
      %v467 = vadd.f32 %v466, 1.1283791
      %v468 = vmul.f32 %v331, %v467
      %v469 = vmul.f32 %v457, 3.8918573e-05
      %v470 = vadd.f32 %v469, 0.001143296
      %v471 = vmul.f32 %v457, %v470
      %v472 = vadd.f32 %v471, 0.014752088
      %v473 = vmul.f32 %v457, %v472
      %v474 = vadd.f32 %v473, 0.112945676
      %v475 = vmul.f32 %v457, %v474
      %v476 = vadd.f32 %v475, 0.4994258
      %v477 = vmul.f32 %v457, %v476
      %v478 = vadd.f32 %v477, 1.0
      %v479 = vrcp.pop %v478
      %v480 = vmul.f32 %v478, %v479
      %v481 = vsub.f32 1.0, %v480
      %v482 = vmul.f32 %v479, %v481
      %v483 = vadd.f32 %v479, %v482
      %vm484 = vweird.f32 %v478
      %vm485 = vweird.f32 %v479
      %vm486 = vmor %vm484, %vm485
      %v487 = vsel %vm486, %v479, %v483
      %v488 = vand.u32 2147483647, %v478
      %vm489 = vcmp.eq.f32.partialorder %v488, 8.507059e+37
      %v490 = vand.u32 %v478, 2147483648
      %v491 = vor.u32 1.1754944e-38, %v490
      %v492 = vsel %vm489, %v491, %v487
      %v493 = vmul.f32 %v468, %v492
      %v494 = vmin.f32 %v493, 1.0
      %v495 = vmax.f32 %v494, -1.0
      %v496 = vmul.f32 %v332, %v332
      %v497 = vmin.f32 16.0, %v496
      %v498 = vmul.f32 %v497, 2.1237322e-06
      %v499 = vadd.f32 %v498, 0.00028619796
      %v500 = vmul.f32 %v497, %v499
      %v501 = vadd.f32 %v500, 0.0036580483
      %v502 = vmul.f32 %v497, %v501
      %v503 = vadd.f32 %v502, 0.05243302
      %v504 = vmul.f32 %v497, %v503
      %v505 = vadd.f32 %v504, 0.18741608
      %v506 = vmul.f32 %v497, %v505
      %v507 = vadd.f32 %v506, 1.1283791
      %v508 = vmul.f32 %v332, %v507
      %v509 = vmul.f32 %v497, 3.8918573e-05
      %v510 = vadd.f32 %v509, 0.001143296
      %v511 = vmul.f32 %v497, %v510
      %v512 = vadd.f32 %v511, 0.014752088
      %v513 = vmul.f32 %v497, %v512
      %v514 = vadd.f32 %v513, 0.112945676
      %v515 = vmul.f32 %v497, %v514
      %v516 = vadd.f32 %v515, 0.4994258
      %v517 = vmul.f32 %v497, %v516
      %v518 = vadd.f32 %v517, 1.0
      %v519 = vrcp.pop %v518
      %v520 = vmul.f32 %v518, %v519
      %v521 = vsub.f32 1.0, %v520
      %v522 = vmul.f32 %v519, %v521
      %v523 = vadd.f32 %v519, %v522
      %vm524 = vweird.f32 %v518
      %vm525 = vweird.f32 %v519
      %vm526 = vmor %vm524, %vm525
      %v527 = vsel %vm526, %v519, %v523
      %v528 = vand.u32 2147483647, %v518
      %vm529 = vcmp.eq.f32.partialorder %v528, 8.507059e+37
      %v530 = vand.u32 %v518, 2147483648
      %v531 = vor.u32 1.1754944e-38, %v530
      %v532 = vsel %vm529, %v531, %v527
      %v533 = vmul.f32 %v508, %v532
      %v534 = vmin.f32 %v533, 1.0
      %v535 = vmax.f32 %v534, -1.0
      %v536 = vmul.f32 %v333, %v333
      %v537 = vmin.f32 16.0, %v536
      %v538 = vmul.f32 %v537, 2.1237322e-06
      %v539 = vadd.f32 %v538, 0.00028619796
      %v540 = vmul.f32 %v537, %v539
      %v541 = vadd.f32 %v540, 0.0036580483
      %v542 = vmul.f32 %v537, %v541
      %v543 = vadd.f32 %v542, 0.05243302
      %v544 = vmul.f32 %v537, %v543
      %v545 = vadd.f32 %v544, 0.18741608
      %v546 = vmul.f32 %v537, %v545
      %v547 = vadd.f32 %v546, 1.1283791
      %v548 = vmul.f32 %v333, %v547
      %v549 = vmul.f32 %v537, 3.8918573e-05
      %v550 = vadd.f32 %v549, 0.001143296
      %v551 = vmul.f32 %v537, %v550
      %v552 = vadd.f32 %v551, 0.014752088
      %v553 = vmul.f32 %v537, %v552
      %v554 = vadd.f32 %v553, 0.112945676
      %v555 = vmul.f32 %v537, %v554
      %v556 = vadd.f32 %v555, 0.4994258
      %v557 = vmul.f32 %v537, %v556
      %v558 = vadd.f32 %v557, 1.0
      %v559 = vrcp.pop %v558
      %v560 = vmul.f32 %v558, %v559
      %v561 = vsub.f32 1.0, %v560
      %v562 = vmul.f32 %v559, %v561
      %v563 = vadd.f32 %v559, %v562
      %vm564 = vweird.f32 %v558
      %vm565 = vweird.f32 %v559
      %vm566 = vmor %vm564, %vm565
      %v567 = vsel %vm566, %v559, %v563
      %v568 = vand.u32 2147483647, %v558
      %vm569 = vcmp.eq.f32.partialorder %v568, 8.507059e+37
      %v570 = vand.u32 %v558, 2147483648
      %v571 = vor.u32 1.1754944e-38, %v570
      %v572 = vsel %vm569, %v571, %v567
      %v573 = vmul.f32 %v548, %v572
      %v574 = vmin.f32 %v573, 1.0
      %v575 = vmax.f32 %v574, -1.0
      %v576 = vmul.f32 %v334, %v334
      %v577 = vmin.f32 16.0, %v576
      %v578 = vmul.f32 %v577, 2.1237322e-06
      %v579 = vadd.f32 %v578, 0.00028619796
      %v580 = vmul.f32 %v577, %v579
      %v581 = vadd.f32 %v580, 0.0036580483
      %v582 = vmul.f32 %v577, %v581
      %v583 = vadd.f32 %v582, 0.05243302
      %v584 = vmul.f32 %v577, %v583
      %v585 = vadd.f32 %v584, 0.18741608
      %v586 = vmul.f32 %v577, %v585
      %v587 = vadd.f32 %v586, 1.1283791
      %v588 = vmul.f32 %v334, %v587
      %v589 = vmul.f32 %v577, 3.8918573e-05
      %v590 = vadd.f32 %v589, 0.001143296
      %v591 = vmul.f32 %v577, %v590
      %v592 = vadd.f32 %v591, 0.014752088
      %v593 = vmul.f32 %v577, %v592
      %v594 = vadd.f32 %v593, 0.112945676
      %v595 = vmul.f32 %v577, %v594
      %v596 = vadd.f32 %v595, 0.4994258
      %v597 = vmul.f32 %v577, %v596
      %v598 = vadd.f32 %v597, 1.0
      %v599 = vrcp.pop %v598
      %v600 = vmul.f32 %v598, %v599
      %v601 = vsub.f32 1.0, %v600
      %v602 = vmul.f32 %v599, %v601
      %v603 = vadd.f32 %v599, %v602
      %vm604 = vweird.f32 %v598
      %vm605 = vweird.f32 %v599
      %vm606 = vmor %vm604, %vm605
      %v607 = vsel %vm606, %v599, %v603
      %v608 = vand.u32 2147483647, %v598
      %vm609 = vcmp.eq.f32.partialorder %v608, 8.507059e+37
      %v610 = vand.u32 %v598, 2147483648
      %v611 = vor.u32 1.1754944e-38, %v610
      %v612 = vsel %vm609, %v611, %v607
      %v613 = vmul.f32 %v588, %v612
      %v614 = vmin.f32 %v613, 1.0
      %v615 = vmax.f32 %v614, -1.0
      %v616 = vmul.f32 %v335, %v335
      %v617 = vmin.f32 16.0, %v616
      %v618 = vmul.f32 %v617, 2.1237322e-06
      %v619 = vadd.f32 %v618, 0.00028619796
      %v620 = vmul.f32 %v617, %v619
      %v621 = vadd.f32 %v620, 0.0036580483
      %v622 = vmul.f32 %v617, %v621
      %v623 = vadd.f32 %v622, 0.05243302
      %v624 = vmul.f32 %v617, %v623
      %v625 = vadd.f32 %v624, 0.18741608
      %v626 = vmul.f32 %v617, %v625
      %v627 = vadd.f32 %v626, 1.1283791
      %v628 = vmul.f32 %v335, %v627
      %v629 = vmul.f32 %v617, 3.8918573e-05
      %v630 = vadd.f32 %v629, 0.001143296
      %v631 = vmul.f32 %v617, %v630
      %v632 = vadd.f32 %v631, 0.014752088
      %v633 = vmul.f32 %v617, %v632
      %v634 = vadd.f32 %v633, 0.112945676
      %v635 = vmul.f32 %v617, %v634
      %v636 = vadd.f32 %v635, 0.4994258
      %v637 = vmul.f32 %v617, %v636
      %v638 = vadd.f32 %v637, 1.0
      %v639 = vrcp.pop %v638
      %v640 = vmul.f32 %v638, %v639
      %v641 = vsub.f32 1.0, %v640
      %v642 = vmul.f32 %v639, %v641
      %v643 = vadd.f32 %v639, %v642
      %vm644 = vweird.f32 %v638
      %vm645 = vweird.f32 %v639
      %vm646 = vmor %vm644, %vm645
      %v647 = vsel %vm646, %v639, %v643
      %v648 = vand.u32 2147483647, %v638
      %vm649 = vcmp.eq.f32.partialorder %v648, 8.507059e+37
      %v650 = vand.u32 %v638, 2147483648
      %v651 = vor.u32 1.1754944e-38, %v650
      %v652 = vsel %vm649, %v651, %v647
      %v653 = vmul.f32 %v628, %v652
      %v654 = vmin.f32 %v653, 1.0
      %v655 = vmax.f32 %v654, -1.0
      %v656 = vadd.f32 %v375, 1.0
      %v657 = vadd.f32 %v415, 1.0
      %v658 = vadd.f32 %v455, 1.0
      %v659 = vadd.f32 %v495, 1.0
      %v660 = vadd.f32 %v535, 1.0
      %v661 = vadd.f32 %v575, 1.0
      %v662 = vadd.f32 %v615, 1.0
      %v663 = vadd.f32 %v655, 1.0
      %v664 = vmul.f32 %v320, %v656
      %v665 = vmul.f32 %v321, %v657
      %v666 = vmul.f32 %v322, %v658
      %v667 = vmul.f32 %v323, %v659
      %v668 = vmul.f32 %v324, %v660
      %v669 = vmul.f32 %v325, %v661
      %v670 = vmul.f32 %v326, %v662
      %v671 = vmul.f32 %v327, %v663
      %v672 = vld [vmem:[%s3] sm:$0x1]
      %v674 = vperm.slane %v672, 0
      %v676 = vmul.f32 %v664, %v674
      %v677 = vmul.f32 %v665, %v674
      %v678 = vmul.f32 %v666, %v674
      %v679 = vmul.f32 %v667, %v674
      %v680 = vmul.f32 %v668, %v674
      %v681 = vmul.f32 %v669, %v674
      %v682 = vmul.f32 %v670, %v674
      %v683 = vmul.f32 %v671, %v674
      %684 = vadd.xlane.f32.xlu0 %v676
      %v685 = vpop.xlane.xlu0 %684
      %686 = vadd.xlane.f32.xlu0 %v677
      %v687 = vpop.xlane.xlu0 %686
      %688 = vadd.xlane.f32.xlu0 %v678
      %v689 = vpop.xlane.xlu0 %688
      %690 = vadd.xlane.f32.xlu0 %v679
      %v691 = vpop.xlane.xlu0 %690
      %692 = vadd.xlane.f32.xlu0 %v680
      %v693 = vpop.xlane.xlu0 %692
      %694 = vadd.xlane.f32.xlu0 %v681
      %v695 = vpop.xlane.xlu0 %694
      %696 = vadd.xlane.f32.xlu0 %v682
      %v697 = vpop.xlane.xlu0 %696
      %698 = vadd.xlane.f32.xlu0 %v683
      %v699 = vpop.xlane.xlu0 %698
      %v700 = vld [vmem:[#allocation2] sm:$0x1]
      %v702 = vperm.slane %v700, 0
      %v704 = vadd.f32 %v685, %v702
      %v705 = vadd.f32 %v687, %v702
      %v706 = vadd.f32 %v689, %v702
      %v707 = vadd.f32 %v691, %v702
      %v708 = vadd.f32 %v693, %v702
      %v709 = vadd.f32 %v695, %v702
      %v710 = vadd.f32 %v697, %v702
      %v711 = vadd.f32 %v699, %v702
      %vm712 = vcmask 7168
      %713 = vst.msk [vmem:[%s228] sm:$0xff] %vm712, %v704
      %714 = vst.msk [vmem:[%s228 + $0x8] sm:$0xff] %vm712, %v705
      %715 = vst.msk [vmem:[%s228 + $0x10] sm:$0xff] %vm712, %v706
      %716 = vst.msk [vmem:[%s228 + $0x18] sm:$0xff] %vm712, %v707
      %717 = vst.msk [vmem:[%s228 + $0x20] sm:$0xff] %vm712, %v708
      %718 = vst.msk [vmem:[%s228 + $0x28] sm:$0xff] %vm712, %v709
      %719 = vst.msk [vmem:[%s228 + $0x30] sm:$0xff] %vm712, %v710
      %720 = vst.msk [vmem:[%s228 + $0x38] sm:$0xff] %vm712, %v711
      %s721 = smul.u32 8, %s18
      %p722 = scmp.lt.s32.totalorder %s721, 63
      %s723 = scalar_select %p722, %s721, 63
      %s724 = smul.addr %s723, 8
      %s725 = scalar_lea.vmem %s5, %s724
      // Predicated region
      $region41: #{dafno2d_forward.11} parent=39 // pred_check
        %p726 = pneg %p146
      $region42: #{dafno2d_forward.11} parent=39 // pred_check_branch
        %728 = sbr.rel (%p726) target = $region44
      $region43: #{dafno2d_forward.11} parent=39 // pred_region
        %s729 = smul.u32 8, %s18
      $region44: #{dafno2d_forward.11} parent=39 // pred_fallthru
        _
    $region40: #{dafno2d_forward.11} parent=5 // pred_fallthru
      _
    %p730 = scmp.le.s32.totalorder 2, %s13
    // Predicated region
    $region45: #{dafno2d_forward.11} parent=5 // pred_check
      %p731 = pneg %p730
    $region46: #{dafno2d_forward.11} parent=5 // pred_check_branch
      %733 = sbr.rel (%p731) target = $region48
    $region47: #{dafno2d_forward.11} parent=5 // pred_region
      %s734 = ssub.s32 %s13, 2
      // Predicated region
      $region49: #{dafno2d_forward.11} parent=47 // pred_check
        %p735 = pneg %p152
      $region50: #{dafno2d_forward.11} parent=47 // pred_check_branch
        %737 = sbr.rel (%p735) target = $region52
      $region51: #{dafno2d_forward.11} parent=47 // pred_region
        %s738 = smul.u32 8, %s19
        %p739 = scmp.lt.s32.totalorder %s738, 63
        %s740 = scalar_select %p739, %s738, 63
        %s741 = smul.addr %s740, 8
        %s742 = scalar_lea.vmem %s5, %s741
      $region52: #{dafno2d_forward.11} parent=47 // pred_fallthru
        _
    $region48: #{dafno2d_forward.11} parent=5 // pred_fallthru
      _
  $region6: #{dafno2d_forward.11} parent=0 // loop_footer
    %s17 = sadd.s32 1, %s13
  $region7: #{dafno2d_forward.11} parent=0 // loop_footer_branch
    %12 = sbr.rel target = $region3
  $region8: #{dafno2d_forward.11} parent=0 // loop_exit
    _

</llo_original>
